<compile_context>
chip_gen: v6e
topology: v6e:2x2x1
jax: 0.10.0
libtpu: 0.0.40
codegen_flags: <defaults>
</compile_context>

<pallas_src>
import jax
import jax.numpy as jnp
from jax import lax
from jax.experimental import pallas as pl
from jax.experimental.pallas import tpu as pltpu


def recnn_kernel(
    embs_ref,       # (S*BP, E)              batch-padded embeddings, time-major
    w_in_ref,       # (E, 4*HP + LANE)       [LSTM W_ih (gate-padded) || W_line (lane-padded)]
    b_in_ref,       # (1, 4*HP + LANE)       [b_ih_l + b_hh_l || b_line]
    w_hh_l_ref,     # (HP, 4*HP)             LSTM W_hh (row+gate padded)
    w_ih_g_ref,     # (LANE, 3*HP)           GRU W_ih applied to relu(line(embs)) (row+gate padded)
    b_ih_g_ref,     # (1, 3*HP)
    w_hh_g_ref,     # (HP, 3*HP)             GRU W_hh (row+gate padded)
    b_hh_g_ref,     # (1, 3*HP)
    w_out_ref,      # (HP, LANE)             self.out (padded to full vreg)
    b_out_ref,      # (1, LANE)
    w_last_ref,     # (1, LANE)              self.last weight row (lane-padded)
    b_last_ref,     # (1,)                   SMEM scalar
    out_ref,        # (BP, LANE)             lane-dense output (result broadcast over lanes)
    gi_l_s,         # (S*BP, 4*HP)  scratch: precomputed LSTM input gates (+bias)
    gi_g_s,         # (S*BP, 3*HP)  scratch: precomputed GRU  input gates (+bias)
    lstm_out_s,     # (S*BP, HP)    scratch: LSTM hidden per step
):
    SBP = embs_ref.shape[0]
    HP = w_hh_l_ref.shape[0]
    BP = out_ref.shape[0]
    S = SBP // BP

    # ---------------- hoisted input-side projections (batched MXU passes) ---
    embs = embs_ref[...]                                              # (S*BP, E)
    proj = (jnp.dot(embs, w_in_ref[...], preferred_element_type=jnp.float32)
            + b_in_ref[...])                                          # (S*BP, 4HP+LANE)
    gi_l_s[...] = proj[:, : 4 * HP]                                   # LSTM x@W_ih + b
    line = jnp.maximum(proj[:, 4 * HP:], 0.0)                         # relu(line(embs)), lane-padded
    gi_g_s[...] = (jnp.dot(line, w_ih_g_ref[...],
                           preferred_element_type=jnp.float32)
                   + b_ih_g_ref[...])                                 # GRU x@W_ih + b_ih

    w_hh_l = w_hh_l_ref[...]
    w_hh_g = w_hh_g_ref[...]
    b_hh_g = b_hh_g_ref[...]

    # ---------------- LSTM recurrence (fully unrolled) ----------------------
    def lstm_step(t, carry):
        h, c = carry
        row = pl.multiple_of(t * BP, BP)
        gates = (gi_l_s[pl.ds(row, BP), :]
                 + jnp.dot(h, w_hh_l, preferred_element_type=jnp.float32))
        i = jax.nn.sigmoid(gates[:, 0 * HP:1 * HP])
        f = jax.nn.sigmoid(gates[:, 1 * HP:2 * HP])
        g = jnp.tanh(gates[:, 2 * HP:3 * HP])
        o = jax.nn.sigmoid(gates[:, 3 * HP:4 * HP])
        c = f * c + i * g
        h = o * jnp.tanh(c)
        lstm_out_s[pl.ds(row, BP), :] = h
        return h, c

    zeros = jnp.zeros((BP, HP), jnp.float32)
    h, _ = lax.fori_loop(0, S, lstm_step, (zeros, zeros), unroll=True)

    # ------------- GRU recurrence, initial hidden = LSTM final h ------------
    # (matches `self.gru(x, h)`; running max of lstm_out + gru_out fused in)
    def gru_step(t, carry):
        h, m = carry
        row = pl.multiple_of(t * BP, BP)
        gi = gi_g_s[pl.ds(row, BP), :]
        gh = jnp.dot(h, w_hh_g, preferred_element_type=jnp.float32) + b_hh_g
        r = jax.nn.sigmoid(gi[:, 0 * HP:1 * HP] + gh[:, 0 * HP:1 * HP])
        z = jax.nn.sigmoid(gi[:, 1 * HP:2 * HP] + gh[:, 1 * HP:2 * HP])
        n = jnp.tanh(gi[:, 2 * HP:3 * HP] + r * gh[:, 2 * HP:3 * HP])
        h = (1.0 - z) * n + z * h
        m = jnp.maximum(m, lstm_out_s[pl.ds(row, BP), :] + h)
        return h, m

    neg_inf = jnp.full((BP, HP), -jnp.inf, jnp.float32)
    _, m = lax.fori_loop(0, S, gru_step, (h, neg_inf), unroll=True)

    # -------- head: out -> relu -> last (VPU reduction, no 1-lane MXU dot) --
    o1 = jnp.maximum(
        jnp.dot(m, w_out_ref[...], preferred_element_type=jnp.float32)
        + b_out_ref[...], 0.0)                                        # (BP, LANE)
    res = jnp.sum(o1 * w_last_ref[...], axis=-1, keepdims=True) + b_last_ref[0]
    out_ref[...] = jnp.broadcast_to(res, out_ref.shape)               # lane-dense store


def recnn_forward(x_idx, params):
    """x_idx: (S, B) int32 token indices. Returns (B,) float32 logits."""
    emb = params["emb"]
    S, B = x_idx.shape
    E = emb.shape[1]
    H = params["w_hh_l"].shape[0]
    O = params["w_out"].shape[1]          # 32
    LANE = 128
    HP = max(128, ((H + 127) // 128) * 128)
    BP = max(8, ((B + 7) // 8) * 8)

    # Embedding gather in plain JAX (glue), then pad batch to a full sublane tile.
    embs = jnp.take(emb, x_idx, axis=0).astype(jnp.float32)            # (S, B, E)
    embs_p = (jnp.zeros((S, BP, E), jnp.float32).at[:, :B, :].set(embs)
              .reshape(S * BP, E))

    # ---- one-time weight layout plumbing: 128-lane-aligned gate blocks -----
    def pad_gate_cols(w, ngates):
        out = jnp.zeros((w.shape[0], ngates * HP), jnp.float32)
        for k in range(ngates):
            out = out.at[:, k * HP:k * HP + H].set(w[:, k * H:(k + 1) * H])
        return out

    def pad_rows(w, rows):
        return jnp.zeros((rows, w.shape[1]), jnp.float32).at[:w.shape[0]].set(w)

    # LSTM (bias b_ih + b_hh folded into the hoisted projection)
    w_ih_l_p = pad_gate_cols(params["w_ih_l"], 4)                      # (E, 4HP)
    b_l_p = pad_gate_cols(params["b_ih_l"] + params["b_hh_l"], 4)      # (1, 4HP)
    w_hh_l_p = pad_rows(pad_gate_cols(params["w_hh_l"], 4), HP)        # (HP, 4HP)

    # self.line (fused into the same input projection pass)
    w_line_p = jnp.zeros((E, LANE), jnp.float32).at[:, :E].set(params["w_line"])
    b_line_p = jnp.zeros((1, LANE), jnp.float32).at[:, :E].set(params["b_line"])
    w_in = jnp.concatenate([w_ih_l_p, w_line_p], axis=1)               # (E, 4HP+LANE)
    b_in = jnp.concatenate([b_l_p, b_line_p], axis=1)                  # (1, 4HP+LANE)

    # GRU
    w_ih_g_p = pad_rows(pad_gate_cols(params["w_ih_g"], 3), LANE)      # (LANE, 3HP)
    b_ih_g_p = pad_gate_cols(params["b_ih_g"], 3)                      # (1, 3HP)
    w_hh_g_p = pad_rows(pad_gate_cols(params["w_hh_g"], 3), HP)        # (HP, 3HP)
    b_hh_g_p = pad_gate_cols(params["b_hh_g"], 3)                      # (1, 3HP)

    # head
    w_out_p = jnp.zeros((HP, LANE), jnp.float32).at[:H, :O].set(params["w_out"])
    b_out_p = jnp.zeros((1, LANE), jnp.float32).at[:, :O].set(params["b_out"])
    w_last_p = jnp.zeros((1, LANE), jnp.float32).at[0, :O].set(params["w_last"][:, 0])
    b_last = params["b_last"].reshape(1)                               # SMEM scalar

    inputs = (embs_p, w_in, b_in, w_hh_l_p, w_ih_g_p, b_ih_g_p,
              w_hh_g_p, b_hh_g_p, w_out_p, b_out_p, w_last_p, b_last)

    vmem = pl.BlockSpec(memory_space=pltpu.MemorySpace.VMEM)
    smem = pl.BlockSpec(memory_space=pltpu.MemorySpace.SMEM)

    scratch_shapes = [
        pltpu.VMEM((S * BP, 4 * HP), jnp.float32),   # gi_l
        pltpu.VMEM((S * BP, 3 * HP), jnp.float32),   # gi_g
        pltpu.VMEM((S * BP, HP), jnp.float32),       # lstm outputs
    ]

    # Explicit VMEM budget (double-buffered inputs + scratch + output) + cost hint.
    nbytes = lambda a: a.size * a.dtype.itemsize
    scratch_bytes = 4 * S * BP * (4 * HP + 3 * HP + HP)
    vmem_limit = int(2 * sum(nbytes(a) for a in inputs[:-1])
                     + scratch_bytes + 2 * BP * LANE * 4 + (4 << 20))
    flops = (2 * S * BP * E * (4 * HP + LANE)      # fused input projection
             + 2 * S * BP * LANE * 3 * HP          # line -> GRU input gates
             + 2 * S * BP * HP * 4 * HP            # LSTM h @ W_hh
             + 2 * S * BP * HP * 3 * HP            # GRU  h @ W_hh
             + 2 * BP * HP * LANE)                 # head
    transcendentals = S * BP * HP * 9              # sigmoid/tanh per step (both RNNs)
    bytes_accessed = sum(nbytes(a) for a in inputs) + BP * LANE * 4

    out = pl.pallas_call(
        recnn_kernel,
        out_shape=jax.ShapeDtypeStruct((BP, LANE), jnp.float32),
        in_specs=[vmem] * 11 + [smem],
        out_specs=vmem,
        scratch_shapes=scratch_shapes,
        compiler_params=pltpu.CompilerParams(vmem_limit_bytes=vmem_limit),
        cost_estimate=pl.CostEstimate(flops=flops,
                                      transcendentals=transcendentals,
                                      bytes_accessed=bytes_accessed),
    )(*inputs)
    return out[:B, 0]


def recnn_reference(x_idx, params):
    """Pure-JAX reference of the PyTorch forward (for validation)."""
    embs = jnp.take(params["emb"], x_idx, axis=0)
    S, B, E = embs.shape
    H = params["w_hh_l"].shape[0]
    h = jnp.zeros((B, H), jnp.float32)
    c = jnp.zeros((B, H), jnp.float32)
    lstm_outs = []
    for t in range(S):
        gates = (embs[t] @ params["w_ih_l"] + h @ params["w_hh_l"]
                 + params["b_ih_l"] + params["b_hh_l"])
        i = jax.nn.sigmoid(gates[:, :H])
        f = jax.nn.sigmoid(gates[:, H:2 * H])
        g = jnp.tanh(gates[:, 2 * H:3 * H])
        o = jax.nn.sigmoid(gates[:, 3 * H:])
        c = f * c + i * g
        h = o * jnp.tanh(c)
        lstm_outs.append(h)
    lstm_out = jnp.stack(lstm_outs)
    gru_outs = []
    for t in range(S):
        x_t = jnp.maximum(embs[t] @ params["w_line"] + params["b_line"], 0.0)
        gi = x_t @ params["w_ih_g"] + params["b_ih_g"]
        gh = h @ params["w_hh_g"] + params["b_hh_g"]
        r = jax.nn.sigmoid(gi[:, :H] + gh[:, :H])
        z = jax.nn.sigmoid(gi[:, H:2 * H] + gh[:, H:2 * H])
        n = jnp.tanh(gi[:, 2 * H:] + r * gh[:, 2 * H:])
        h = (1.0 - z) * n + z * h
        gru_outs.append(h)
    gru_out = jnp.stack(gru_outs)
    m = jnp.max(lstm_out + gru_out, axis=0)
    o1 = jnp.maximum(m @ params["w_out"] + params["b_out"], 0.0)
    return (o1 @ params["w_last"] + params["b_last"])[:, 0]


def init_params(key, vocab, emb_dim, hidden):
    ks = jax.random.split(key, 16)
    u = lambda k, shape, s=0.1: jax.random.uniform(k, shape, jnp.float32, -s, s)
    H, E = hidden, emb_dim
    return {
        "emb":    u(ks[0], (vocab, E), 1.0),
        # LSTM (PyTorch weight_ih is (4H, E); we store the transpose for x @ W)
        "w_ih_l": u(ks[1], (E, 4 * H)), "w_hh_l": u(ks[2], (H, 4 * H)),
        "b_ih_l": u(ks[3], (1, 4 * H)), "b_hh_l": u(ks[4], (1, 4 * H)),
        # self.line
        "w_line": u(ks[5], (E, E)), "b_line": u(ks[6], (1, E)),
        # GRU
        "w_ih_g": u(ks[7], (E, 3 * H)), "w_hh_g": u(ks[8], (H, 3 * H)),
        "b_ih_g": u(ks[9], (1, 3 * H)), "b_hh_g": u(ks[10], (1, 3 * H)),
        # head
        "w_out": u(ks[11], (H, 32)), "b_out": u(ks[12], (1, 32)),
        "w_last": u(ks[13], (32, 1)), "b_last": u(ks[14], (1, 1)),
    }


if __name__ == "__main__":
    S, B, V, E, H = 8, 2, 50, 32, 32
    key = jax.random.PRNGKey(0)
    k_p, k_x = jax.random.split(key)
    params = init_params(k_p, V, E, H)
    x_idx = jax.random.randint(k_x, (S, B), 0, V, dtype=jnp.int32)

    out = jax.block_until_ready(recnn_forward(x_idx, params))
    ref = jax.block_until_ready(recnn_reference(x_idx, params))

    assert out.shape == (B,), out.shape
    assert jnp.allclose(out, ref, atol=1e-3, rtol=1e-3), (out, ref)
    print("KERNEL_OK")
</pallas_src>

<mosaic_0001>
module attributes {stable_mosaic.version = 11 : i64} {
  func.func @recnn_kernel(%arg0: memref<64x32xf32, #tpu.memory_space<vmem>>, %arg1: memref<32x640xf32, #tpu.memory_space<vmem>>, %arg2: memref<1x640xf32, #tpu.memory_space<vmem>>, %arg3: memref<128x512xf32, #tpu.memory_space<vmem>>, %arg4: memref<128x384xf32, #tpu.memory_space<vmem>>, %arg5: memref<1x384xf32, #tpu.memory_space<vmem>>, %arg6: memref<128x384xf32, #tpu.memory_space<vmem>>, %arg7: memref<1x384xf32, #tpu.memory_space<vmem>>, %arg8: memref<128x128xf32, #tpu.memory_space<vmem>>, %arg9: memref<1x128xf32, #tpu.memory_space<vmem>>, %arg10: memref<1x128xf32, #tpu.memory_space<vmem>>, %arg11: memref<1xf32, #tpu.memory_space<smem>>, %arg12: memref<8x128xf32, #tpu.memory_space<vmem>>, %arg13: memref<64x512xf32, #tpu.memory_space<vmem>>, %arg14: memref<64x384xf32, #tpu.memory_space<vmem>>, %arg15: memref<64x128xf32, #tpu.memory_space<vmem>>) attributes {dimension_semantics = [], scalar_prefetch = 0 : i64, scratch_operands = 3 : i64, tpu.core_type = #tpu.core_type<tc>} {
    %c0 = arith.constant 0 : index
    %c0_0 = arith.constant 0 : index
    %0 = vector.load %arg0[%c0, %c0_0] : memref<64x32xf32, #tpu.memory_space<vmem>>, vector<64x32xf32>
    %c0_1 = arith.constant 0 : index
    %c0_2 = arith.constant 0 : index
    %1 = vector.load %arg1[%c0_1, %c0_2] : memref<32x640xf32, #tpu.memory_space<vmem>>, vector<32x640xf32>
    %cst = arith.constant dense<0.000000e+00> : vector<64x640xf32>
    %2 = tpu.matmul %0, %1, %cst {dimension_numbers = #tpu.dot_dimension_numbers<[1], [0], [0], [1], [0, 0, 1, 1], [], []>} : vector<64x32xf32>, vector<32x640xf32>, vector<64x640xf32> -> vector<64x640xf32>
    %c0_3 = arith.constant 0 : index
    %c0_4 = arith.constant 0 : index
    %3 = vector.load %arg2[%c0_3, %c0_4] : memref<1x640xf32, #tpu.memory_space<vmem>>, vector<1x640xf32>
    %4 = vector.broadcast %3 : vector<1x640xf32> to vector<64x640xf32>
    %5 = arith.addf %2, %4 : vector<64x640xf32>
    %6 = vector.extract_strided_slice %5 {offsets = [0, 0], sizes = [64, 512], strides = [1, 1]} : vector<64x640xf32> to vector<64x512xf32>
    %c0_5 = arith.constant 0 : index
    %c0_6 = arith.constant 0 : index
    %7 = vector.load %arg13[%c0_5, %c0_6] : memref<64x512xf32, #tpu.memory_space<vmem>>, vector<64x512xf32>
    tpu.vector_store %arg13[%c0_5, %c0_6], %6 {strides = array<i32>} : memref<64x512xf32, #tpu.memory_space<vmem>>, vector<64x512xf32>,
    %8 = vector.extract_strided_slice %5 {offsets = [0, 512], sizes = [64, 128], strides = [1, 1]} : vector<64x640xf32> to vector<64x128xf32>
    %cst_7 = arith.constant 0.000000e+00 : f32
    %9 = vector.broadcast %cst_7 : f32 to vector<64x128xf32>
    %10 = arith.maximumf %8, %9 : vector<64x128xf32>
    %c0_8 = arith.constant 0 : index
    %c0_9 = arith.constant 0 : index
    %11 = vector.load %arg4[%c0_8, %c0_9] : memref<128x384xf32, #tpu.memory_space<vmem>>, vector<128x384xf32>
    %cst_10 = arith.constant dense<0.000000e+00> : vector<64x384xf32>
    %12 = tpu.matmul %10, %11, %cst_10 {dimension_numbers = #tpu.dot_dimension_numbers<[1], [0], [0], [1], [0, 0, 1, 1], [], []>} : vector<64x128xf32>, vector<128x384xf32>, vector<64x384xf32> -> vector<64x384xf32>
    %c0_11 = arith.constant 0 : index
    %c0_12 = arith.constant 0 : index
    %13 = vector.load %arg5[%c0_11, %c0_12] : memref<1x384xf32, #tpu.memory_space<vmem>>, vector<1x384xf32>
    %14 = vector.broadcast %13 : vector<1x384xf32> to vector<64x384xf32>
    %15 = arith.addf %12, %14 : vector<64x384xf32>
    %c0_13 = arith.constant 0 : index
    %c0_14 = arith.constant 0 : index
    %16 = vector.load %arg14[%c0_13, %c0_14] : memref<64x384xf32, #tpu.memory_space<vmem>>, vector<64x384xf32>
    tpu.vector_store %arg14[%c0_13, %c0_14], %15 {strides = array<i32>} : memref<64x384xf32, #tpu.memory_space<vmem>>, vector<64x384xf32>,
    %c0_15 = arith.constant 0 : index
    %c0_16 = arith.constant 0 : index
    %17 = vector.load %arg3[%c0_15, %c0_16] : memref<128x512xf32, #tpu.memory_space<vmem>>, vector<128x512xf32>
    %c0_17 = arith.constant 0 : index
    %c0_18 = arith.constant 0 : index
    %18 = vector.load %arg6[%c0_17, %c0_18] : memref<128x384xf32, #tpu.memory_space<vmem>>, vector<128x384xf32>
    %c0_19 = arith.constant 0 : index
    %c0_20 = arith.constant 0 : index
    %19 = vector.load %arg7[%c0_19, %c0_20] : memref<1x384xf32, #tpu.memory_space<vmem>>, vector<1x384xf32>
    %cst_21 = arith.constant 0.000000e+00 : f32
    %20 = vector.broadcast %cst_21 : f32 to vector<8x128xf32>
    %c0_i32 = arith.constant 0 : i32
    %c8_i32 = arith.constant 8 : i32
    %21 = arith.muli %c0_i32, %c8_i32 : i32
    %22 = tpu.assume_multiple %21, 8 : i32
    %23 = arith.index_cast %22 : i32 to index
    %c0_22 = arith.constant 0 : index
    %24 = vector.load %arg13[%23, %c0_22] : memref<64x512xf32, #tpu.memory_space<vmem>>, vector<8x512xf32>
    %cst_23 = arith.constant dense<0.000000e+00> : vector<8x512xf32>
    %25 = tpu.matmul %20, %17, %cst_23 {dimension_numbers = #tpu.dot_dimension_numbers<[1], [0], [0], [1], [0, 0, 1, 1], [], []>} : vector<8x128xf32>, vector<128x512xf32>, vector<8x512xf32> -> vector<8x512xf32>
    %26 = arith.addf %24, %25 : vector<8x512xf32>
    %27 = vector.extract_strided_slice %26 {offsets = [0, 0], sizes = [8, 128], strides = [1, 1]} : vector<8x512xf32> to vector<8x128xf32>
    %28 = arith.negf %27 : vector<8x128xf32>
    %29 = math.exp %28 : vector<8x128xf32>
    %cst_24 = arith.constant 1.000000e+00 : f32
    %30 = vector.broadcast %cst_24 : f32 to vector<8x128xf32>
    %31 = arith.addf %30, %29 : vector<8x128xf32>
    %32 = arith.divf %30, %31 : vector<8x128xf32>
    %33 = vector.extract_strided_slice %26 {offsets = [0, 128], sizes = [8, 128], strides = [1, 1]} : vector<8x512xf32> to vector<8x128xf32>
    %34 = arith.negf %33 : vector<8x128xf32>
    %35 = math.exp %34 : vector<8x128xf32>
    %cst_25 = arith.constant 1.000000e+00 : f32
    %36 = vector.broadcast %cst_25 : f32 to vector<8x128xf32>
    %37 = arith.addf %36, %35 : vector<8x128xf32>
    %38 = arith.divf %36, %37 : vector<8x128xf32>
    %39 = vector.extract_strided_slice %26 {offsets = [0, 256], sizes = [8, 128], strides = [1, 1]} : vector<8x512xf32> to vector<8x128xf32>
    %40 = math.tanh %39 : vector<8x128xf32>
    %41 = vector.extract_strided_slice %26 {offsets = [0, 384], sizes = [8, 128], strides = [1, 1]} : vector<8x512xf32> to vector<8x128xf32>
    %42 = arith.negf %41 : vector<8x128xf32>
    %43 = math.exp %42 : vector<8x128xf32>
    %cst_26 = arith.constant 1.000000e+00 : f32
    %44 = vector.broadcast %cst_26 : f32 to vector<8x128xf32>
    %45 = arith.addf %44, %43 : vector<8x128xf32>
    %46 = arith.divf %44, %45 : vector<8x128xf32>
    %47 = arith.mulf %38, %20 : vector<8x128xf32>
    %48 = arith.mulf %32, %40 : vector<8x128xf32>
    %49 = arith.addf %47, %48 : vector<8x128xf32>
    %50 = math.tanh %49 : vector<8x128xf32>
    %51 = arith.mulf %46, %50 : vector<8x128xf32>
    %52 = arith.index_cast %22 : i32 to index
    %c0_27 = arith.constant 0 : index
    %53 = vector.load %arg15[%52, %c0_27] : memref<64x128xf32, #tpu.memory_space<vmem>>, vector<8x128xf32>
    tpu.vector_store %arg15[%52, %c0_27], %51 {strides = array<i32>} : memref<64x128xf32, #tpu.memory_space<vmem>>, vector<8x128xf32>,
    %c1_i32 = arith.constant 1 : i32
    %c8_i32_28 = arith.constant 8 : i32
    %54 = arith.muli %c1_i32, %c8_i32_28 : i32
    %55 = tpu.assume_multiple %54, 8 : i32
    %56 = arith.index_cast %55 : i32 to index
    %c0_29 = arith.constant 0 : index
    %57 = vector.load %arg13[%56, %c0_29] : memref<64x512xf32, #tpu.memory_space<vmem>>, vector<8x512xf32>
    %cst_30 = arith.constant dense<0.000000e+00> : vector<8x512xf32>
    %58 = tpu.matmul %51, %17, %cst_30 {dimension_numbers = #tpu.dot_dimension_numbers<[1], [0], [0], [1], [0, 0, 1, 1], [], []>} : vector<8x128xf32>, vector<128x512xf32>, vector<8x512xf32> -> vector<8x512xf32>
    %59 = arith.addf %57, %58 : vector<8x512xf32>
    %60 = vector.extract_strided_slice %59 {offsets = [0, 0], sizes = [8, 128], strides = [1, 1]} : vector<8x512xf32> to vector<8x128xf32>
    %61 = arith.negf %60 : vector<8x128xf32>
    %62 = math.exp %61 : vector<8x128xf32>
    %cst_31 = arith.constant 1.000000e+00 : f32
    %63 = vector.broadcast %cst_31 : f32 to vector<8x128xf32>
    %64 = arith.addf %63, %62 : vector<8x128xf32>
    %65 = arith.divf %63, %64 : vector<8x128xf32>
    %66 = vector.extract_strided_slice %59 {offsets = [0, 128], sizes = [8, 128], strides = [1, 1]} : vector<8x512xf32> to vector<8x128xf32>
    %67 = arith.negf %66 : vector<8x128xf32>
    %68 = math.exp %67 : vector<8x128xf32>
    %cst_32 = arith.constant 1.000000e+00 : f32
    %69 = vector.broadcast %cst_32 : f32 to vector<8x128xf32>
    %70 = arith.addf %69, %68 : vector<8x128xf32>
    %71 = arith.divf %69, %70 : vector<8x128xf32>
    %72 = vector.extract_strided_slice %59 {offsets = [0, 256], sizes = [8, 128], strides = [1, 1]} : vector<8x512xf32> to vector<8x128xf32>
    %73 = math.tanh %72 : vector<8x128xf32>
    %74 = vector.extract_strided_slice %59 {offsets = [0, 384], sizes = [8, 128], strides = [1, 1]} : vector<8x512xf32> to vector<8x128xf32>
    %75 = arith.negf %74 : vector<8x128xf32>
    %76 = math.exp %75 : vector<8x128xf32>
    %cst_33 = arith.constant 1.000000e+00 : f32
    %77 = vector.broadcast %cst_33 : f32 to vector<8x128xf32>
    %78 = arith.addf %77, %76 : vector<8x128xf32>
    %79 = arith.divf %77, %78 : vector<8x128xf32>
    %80 = arith.mulf %71, %49 : vector<8x128xf32>
    %81 = arith.mulf %65, %73 : vector<8x128xf32>
    %82 = arith.addf %80, %81 : vector<8x128xf32>
    %83 = math.tanh %82 : vector<8x128xf32>
    %84 = arith.mulf %79, %83 : vector<8x128xf32>
    %85 = arith.index_cast %55 : i32 to index
    %c0_34 = arith.constant 0 : index
    %86 = vector.load %arg15[%85, %c0_34] : memref<64x128xf32, #tpu.memory_space<vmem>>, vector<8x128xf32>
    tpu.vector_store %arg15[%85, %c0_34], %84 {strides = array<i32>} : memref<64x128xf32, #tpu.memory_space<vmem>>, vector<8x128xf32>,
    %c2_i32 = arith.constant 2 : i32
    %c8_i32_35 = arith.constant 8 : i32
    %87 = arith.muli %c2_i32, %c8_i32_35 : i32
    %88 = tpu.assume_multiple %87, 8 : i32
    %89 = arith.index_cast %88 : i32 to index
    %c0_36 = arith.constant 0 : index
    %90 = vector.load %arg13[%89, %c0_36] : memref<64x512xf32, #tpu.memory_space<vmem>>, vector<8x512xf32>
    %cst_37 = arith.constant dense<0.000000e+00> : vector<8x512xf32>
    %91 = tpu.matmul %84, %17, %cst_37 {dimension_numbers = #tpu.dot_dimension_numbers<[1], [0], [0], [1], [0, 0, 1, 1], [], []>} : vector<8x128xf32>, vector<128x512xf32>, vector<8x512xf32> -> vector<8x512xf32>
    %92 = arith.addf %90, %91 : vector<8x512xf32>
    %93 = vector.extract_strided_slice %92 {offsets = [0, 0], sizes = [8, 128], strides = [1, 1]} : vector<8x512xf32> to vector<8x128xf32>
    %94 = arith.negf %93 : vector<8x128xf32>
    %95 = math.exp %94 : vector<8x128xf32>
    %cst_38 = arith.constant 1.000000e+00 : f32
    %96 = vector.broadcast %cst_38 : f32 to vector<8x128xf32>
    %97 = arith.addf %96, %95 : vector<8x128xf32>
    %98 = arith.divf %96, %97 : vector<8x128xf32>
    %99 = vector.extract_strided_slice %92 {offsets = [0, 128], sizes = [8, 128], strides = [1, 1]} : vector<8x512xf32> to vector<8x128xf32>
    %100 = arith.negf %99 : vector<8x128xf32>
    %101 = math.exp %100 : vector<8x128xf32>
    %cst_39 = arith.constant 1.000000e+00 : f32
    %102 = vector.broadcast %cst_39 : f32 to vector<8x128xf32>
    %103 = arith.addf %102, %101 : vector<8x128xf32>
    %104 = arith.divf %102, %103 : vector<8x128xf32>
    %105 = vector.extract_strided_slice %92 {offsets = [0, 256], sizes = [8, 128], strides = [1, 1]} : vector<8x512xf32> to vector<8x128xf32>
    %106 = math.tanh %105 : vector<8x128xf32>
    %107 = vector.extract_strided_slice %92 {offsets = [0, 384], sizes = [8, 128], strides = [1, 1]} : vector<8x512xf32> to vector<8x128xf32>
    %108 = arith.negf %107 : vector<8x128xf32>
    %109 = math.exp %108 : vector<8x128xf32>
    %cst_40 = arith.constant 1.000000e+00 : f32
    %110 = vector.broadcast %cst_40 : f32 to vector<8x128xf32>
    %111 = arith.addf %110, %109 : vector<8x128xf32>
    %112 = arith.divf %110, %111 : vector<8x128xf32>
    %113 = arith.mulf %104, %82 : vector<8x128xf32>
    %114 = arith.mulf %98, %106 : vector<8x128xf32>
    %115 = arith.addf %113, %114 : vector<8x128xf32>
    %116 = math.tanh %115 : vector<8x128xf32>
    %117 = arith.mulf %112, %116 : vector<8x128xf32>
    %118 = arith.index_cast %88 : i32 to index
    %c0_41 = arith.constant 0 : index
    %119 = vector.load %arg15[%118, %c0_41] : memref<64x128xf32, #tpu.memory_space<vmem>>, vector<8x128xf32>
    tpu.vector_store %arg15[%118, %c0_41], %117 {strides = array<i32>} : memref<64x128xf32, #tpu.memory_space<vmem>>, vector<8x128xf32>,
    %c3_i32 = arith.constant 3 : i32
    %c8_i32_42 = arith.constant 8 : i32
    %120 = arith.muli %c3_i32, %c8_i32_42 : i32
    %121 = tpu.assume_multiple %120, 8 : i32
    %122 = arith.index_cast %121 : i32 to index
    %c0_43 = arith.constant 0 : index
    %123 = vector.load %arg13[%122, %c0_43] : memref<64x512xf32, #tpu.memory_space<vmem>>, vector<8x512xf32>
    %cst_44 = arith.constant dense<0.000000e+00> : vector<8x512xf32>
    %124 = tpu.matmul %117, %17, %cst_44 {dimension_numbers = #tpu.dot_dimension_numbers<[1], [0], [0], [1], [0, 0, 1, 1], [], []>} : vector<8x128xf32>, vector<128x512xf32>, vector<8x512xf32> -> vector<8x512xf32>
    %125 = arith.addf %123, %124 : vector<8x512xf32>
    %126 = vector.extract_strided_slice %125 {offsets = [0, 0], sizes = [8, 128], strides = [1, 1]} : vector<8x512xf32> to vector<8x128xf32>
    %127 = arith.negf %126 : vector<8x128xf32>
    %128 = math.exp %127 : vector<8x128xf32>
    %cst_45 = arith.constant 1.000000e+00 : f32
    %129 = vector.broadcast %cst_45 : f32 to vector<8x128xf32>
    %130 = arith.addf %129, %128 : vector<8x128xf32>
    %131 = arith.divf %129, %130 : vector<8x128xf32>
    %132 = vector.extract_strided_slice %125 {offsets = [0, 128], sizes = [8, 128], strides = [1, 1]} : vector<8x512xf32> to vector<8x128xf32>
    %133 = arith.negf %132 : vector<8x128xf32>
    %134 = math.exp %133 : vector<8x128xf32>
    %cst_46 = arith.constant 1.000000e+00 : f32
    %135 = vector.broadcast %cst_46 : f32 to vector<8x128xf32>
    %136 = arith.addf %135, %134 : vector<8x128xf32>
    %137 = arith.divf %135, %136 : vector<8x128xf32>
    %138 = vector.extract_strided_slice %125 {offsets = [0, 256], sizes = [8, 128], strides = [1, 1]} : vector<8x512xf32> to vector<8x128xf32>
    %139 = math.tanh %138 : vector<8x128xf32>
    %140 = vector.extract_strided_slice %125 {offsets = [0, 384], sizes = [8, 128], strides = [1, 1]} : vector<8x512xf32> to vector<8x128xf32>
    %141 = arith.negf %140 : vector<8x128xf32>
    %142 = math.exp %141 : vector<8x128xf32>
    %cst_47 = arith.constant 1.000000e+00 : f32
    %143 = vector.broadcast %cst_47 : f32 to vector<8x128xf32>
    %144 = arith.addf %143, %142 : vector<8x128xf32>
    %145 = arith.divf %143, %144 : vector<8x128xf32>
    %146 = arith.mulf %137, %115 : vector<8x128xf32>
    %147 = arith.mulf %131, %139 : vector<8x128xf32>
    %148 = arith.addf %146, %147 : vector<8x128xf32>
    %149 = math.tanh %148 : vector<8x128xf32>
    %150 = arith.mulf %145, %149 : vector<8x128xf32>
    %151 = arith.index_cast %121 : i32 to index
    %c0_48 = arith.constant 0 : index
    %152 = vector.load %arg15[%151, %c0_48] : memref<64x128xf32, #tpu.memory_space<vmem>>, vector<8x128xf32>
    tpu.vector_store %arg15[%151, %c0_48], %150 {strides = array<i32>} : memref<64x128xf32, #tpu.memory_space<vmem>>, vector<8x128xf32>,
    %c4_i32 = arith.constant 4 : i32
    %c8_i32_49 = arith.constant 8 : i32
    %153 = arith.muli %c4_i32, %c8_i32_49 : i32
    %154 = tpu.assume_multiple %153, 8 : i32
    %155 = arith.index_cast %154 : i32 to index
    %c0_50 = arith.constant 0 : index
    %156 = vector.load %arg13[%155, %c0_50] : memref<64x512xf32, #tpu.memory_space<vmem>>, vector<8x512xf32>
    %cst_51 = arith.constant dense<0.000000e+00> : vector<8x512xf32>
    %157 = tpu.matmul %150, %17, %cst_51 {dimension_numbers = #tpu.dot_dimension_numbers<[1], [0], [0], [1], [0, 0, 1, 1], [], []>} : vector<8x128xf32>, vector<128x512xf32>, vector<8x512xf32> -> vector<8x512xf32>
    %158 = arith.addf %156, %157 : vector<8x512xf32>
    %159 = vector.extract_strided_slice %158 {offsets = [0, 0], sizes = [8, 128], strides = [1, 1]} : vector<8x512xf32> to vector<8x128xf32>
    %160 = arith.negf %159 : vector<8x128xf32>
    %161 = math.exp %160 : vector<8x128xf32>
    %cst_52 = arith.constant 1.000000e+00 : f32
    %162 = vector.broadcast %cst_52 : f32 to vector<8x128xf32>
    %163 = arith.addf %162, %161 : vector<8x128xf32>
    %164 = arith.divf %162, %163 : vector<8x128xf32>
    %165 = vector.extract_strided_slice %158 {offsets = [0, 128], sizes = [8, 128], strides = [1, 1]} : vector<8x512xf32> to vector<8x128xf32>
    %166 = arith.negf %165 : vector<8x128xf32>
    %167 = math.exp %166 : vector<8x128xf32>
    %cst_53 = arith.constant 1.000000e+00 : f32
    %168 = vector.broadcast %cst_53 : f32 to vector<8x128xf32>
    %169 = arith.addf %168, %167 : vector<8x128xf32>
    %170 = arith.divf %168, %169 : vector<8x128xf32>
    %171 = vector.extract_strided_slice %158 {offsets = [0, 256], sizes = [8, 128], strides = [1, 1]} : vector<8x512xf32> to vector<8x128xf32>
    %172 = math.tanh %171 : vector<8x128xf32>
    %173 = vector.extract_strided_slice %158 {offsets = [0, 384], sizes = [8, 128], strides = [1, 1]} : vector<8x512xf32> to vector<8x128xf32>
    %174 = arith.negf %173 : vector<8x128xf32>
    %175 = math.exp %174 : vector<8x128xf32>
    %cst_54 = arith.constant 1.000000e+00 : f32
    %176 = vector.broadcast %cst_54 : f32 to vector<8x128xf32>
    %177 = arith.addf %176, %175 : vector<8x128xf32>
    %178 = arith.divf %176, %177 : vector<8x128xf32>
    %179 = arith.mulf %170, %148 : vector<8x128xf32>
    %180 = arith.mulf %164, %172 : vector<8x128xf32>
    %181 = arith.addf %179, %180 : vector<8x128xf32>
    %182 = math.tanh %181 : vector<8x128xf32>
    %183 = arith.mulf %178, %182 : vector<8x128xf32>
    %184 = arith.index_cast %154 : i32 to index
    %c0_55 = arith.constant 0 : index
    %185 = vector.load %arg15[%184, %c0_55] : memref<64x128xf32, #tpu.memory_space<vmem>>, vector<8x128xf32>
    tpu.vector_store %arg15[%184, %c0_55], %183 {strides = array<i32>} : memref<64x128xf32, #tpu.memory_space<vmem>>, vector<8x128xf32>,
    %c5_i32 = arith.constant 5 : i32
    %c8_i32_56 = arith.constant 8 : i32
    %186 = arith.muli %c5_i32, %c8_i32_56 : i32
    %187 = tpu.assume_multiple %186, 8 : i32
    %188 = arith.index_cast %187 : i32 to index
    %c0_57 = arith.constant 0 : index
    %189 = vector.load %arg13[%188, %c0_57] : memref<64x512xf32, #tpu.memory_space<vmem>>, vector<8x512xf32>
    %cst_58 = arith.constant dense<0.000000e+00> : vector<8x512xf32>
    %190 = tpu.matmul %183, %17, %cst_58 {dimension_numbers = #tpu.dot_dimension_numbers<[1], [0], [0], [1], [0, 0, 1, 1], [], []>} : vector<8x128xf32>, vector<128x512xf32>, vector<8x512xf32> -> vector<8x512xf32>
    %191 = arith.addf %189, %190 : vector<8x512xf32>
    %192 = vector.extract_strided_slice %191 {offsets = [0, 0], sizes = [8, 128], strides = [1, 1]} : vector<8x512xf32> to vector<8x128xf32>
    %193 = arith.negf %192 : vector<8x128xf32>
    %194 = math.exp %193 : vector<8x128xf32>
    %cst_59 = arith.constant 1.000000e+00 : f32
    %195 = vector.broadcast %cst_59 : f32 to vector<8x128xf32>
    %196 = arith.addf %195, %194 : vector<8x128xf32>
    %197 = arith.divf %195, %196 : vector<8x128xf32>
    %198 = vector.extract_strided_slice %191 {offsets = [0, 128], sizes = [8, 128], strides = [1, 1]} : vector<8x512xf32> to vector<8x128xf32>
    %199 = arith.negf %198 : vector<8x128xf32>
    %200 = math.exp %199 : vector<8x128xf32>
    %cst_60 = arith.constant 1.000000e+00 : f32
    %201 = vector.broadcast %cst_60 : f32 to vector<8x128xf32>
    %202 = arith.addf %201, %200 : vector<8x128xf32>
    %203 = arith.divf %201, %202 : vector<8x128xf32>
    %204 = vector.extract_strided_slice %191 {offsets = [0, 256], sizes = [8, 128], strides = [1, 1]} : vector<8x512xf32> to vector<8x128xf32>
    %205 = math.tanh %204 : vector<8x128xf32>
    %206 = vector.extract_strided_slice %191 {offsets = [0, 384], sizes = [8, 128], strides = [1, 1]} : vector<8x512xf32> to vector<8x128xf32>
    %207 = arith.negf %206 : vector<8x128xf32>
    %208 = math.exp %207 : vector<8x128xf32>
    %cst_61 = arith.constant 1.000000e+00 : f32
    %209 = vector.broadcast %cst_61 : f32 to vector<8x128xf32>
    %210 = arith.addf %209, %208 : vector<8x128xf32>
    %211 = arith.divf %209, %210 : vector<8x128xf32>
    %212 = arith.mulf %203, %181 : vector<8x128xf32>
    %213 = arith.mulf %197, %205 : vector<8x128xf32>
    %214 = arith.addf %212, %213 : vector<8x128xf32>
    %215 = math.tanh %214 : vector<8x128xf32>
    %216 = arith.mulf %211, %215 : vector<8x128xf32>
    %217 = arith.index_cast %187 : i32 to index
    %c0_62 = arith.constant 0 : index
    %218 = vector.load %arg15[%217, %c0_62] : memref<64x128xf32, #tpu.memory_space<vmem>>, vector<8x128xf32>
    tpu.vector_store %arg15[%217, %c0_62], %216 {strides = array<i32>} : memref<64x128xf32, #tpu.memory_space<vmem>>, vector<8x128xf32>,
    %c6_i32 = arith.constant 6 : i32
    %c8_i32_63 = arith.constant 8 : i32
    %219 = arith.muli %c6_i32, %c8_i32_63 : i32
    %220 = tpu.assume_multiple %219, 8 : i32
    %221 = arith.index_cast %220 : i32 to index
    %c0_64 = arith.constant 0 : index
    %222 = vector.load %arg13[%221, %c0_64] : memref<64x512xf32, #tpu.memory_space<vmem>>, vector<8x512xf32>
    %cst_65 = arith.constant dense<0.000000e+00> : vector<8x512xf32>
    %223 = tpu.matmul %216, %17, %cst_65 {dimension_numbers = #tpu.dot_dimension_numbers<[1], [0], [0], [1], [0, 0, 1, 1], [], []>} : vector<8x128xf32>, vector<128x512xf32>, vector<8x512xf32> -> vector<8x512xf32>
    %224 = arith.addf %222, %223 : vector<8x512xf32>
    %225 = vector.extract_strided_slice %224 {offsets = [0, 0], sizes = [8, 128], strides = [1, 1]} : vector<8x512xf32> to vector<8x128xf32>
    %226 = arith.negf %225 : vector<8x128xf32>
    %227 = math.exp %226 : vector<8x128xf32>
    %cst_66 = arith.constant 1.000000e+00 : f32
    %228 = vector.broadcast %cst_66 : f32 to vector<8x128xf32>
    %229 = arith.addf %228, %227 : vector<8x128xf32>
    %230 = arith.divf %228, %229 : vector<8x128xf32>
    %231 = vector.extract_strided_slice %224 {offsets = [0, 128], sizes = [8, 128], strides = [1, 1]} : vector<8x512xf32> to vector<8x128xf32>
    %232 = arith.negf %231 : vector<8x128xf32>
    %233 = math.exp %232 : vector<8x128xf32>
    %cst_67 = arith.constant 1.000000e+00 : f32
    %234 = vector.broadcast %cst_67 : f32 to vector<8x128xf32>
    %235 = arith.addf %234, %233 : vector<8x128xf32>
    %236 = arith.divf %234, %235 : vector<8x128xf32>
    %237 = vector.extract_strided_slice %224 {offsets = [0, 256], sizes = [8, 128], strides = [1, 1]} : vector<8x512xf32> to vector<8x128xf32>
    %238 = math.tanh %237 : vector<8x128xf32>
    %239 = vector.extract_strided_slice %224 {offsets = [0, 384], sizes = [8, 128], strides = [1, 1]} : vector<8x512xf32> to vector<8x128xf32>
    %240 = arith.negf %239 : vector<8x128xf32>
    %241 = math.exp %240 : vector<8x128xf32>
    %cst_68 = arith.constant 1.000000e+00 : f32
    %242 = vector.broadcast %cst_68 : f32 to vector<8x128xf32>
    %243 = arith.addf %242, %241 : vector<8x128xf32>
    %244 = arith.divf %242, %243 : vector<8x128xf32>
    %245 = arith.mulf %236, %214 : vector<8x128xf32>
    %246 = arith.mulf %230, %238 : vector<8x128xf32>
    %247 = arith.addf %245, %246 : vector<8x128xf32>
    %248 = math.tanh %247 : vector<8x128xf32>
    %249 = arith.mulf %244, %248 : vector<8x128xf32>
    %250 = arith.index_cast %220 : i32 to index
    %c0_69 = arith.constant 0 : index
    %251 = vector.load %arg15[%250, %c0_69] : memref<64x128xf32, #tpu.memory_space<vmem>>, vector<8x128xf32>
    tpu.vector_store %arg15[%250, %c0_69], %249 {strides = array<i32>} : memref<64x128xf32, #tpu.memory_space<vmem>>, vector<8x128xf32>,
    %c7_i32 = arith.constant 7 : i32
    %c8_i32_70 = arith.constant 8 : i32
    %252 = arith.muli %c7_i32, %c8_i32_70 : i32
    %253 = tpu.assume_multiple %252, 8 : i32
    %254 = arith.index_cast %253 : i32 to index
    %c0_71 = arith.constant 0 : index
    %255 = vector.load %arg13[%254, %c0_71] : memref<64x512xf32, #tpu.memory_space<vmem>>, vector<8x512xf32>
    %cst_72 = arith.constant dense<0.000000e+00> : vector<8x512xf32>
    %256 = tpu.matmul %249, %17, %cst_72 {dimension_numbers = #tpu.dot_dimension_numbers<[1], [0], [0], [1], [0, 0, 1, 1], [], []>} : vector<8x128xf32>, vector<128x512xf32>, vector<8x512xf32> -> vector<8x512xf32>
    %257 = arith.addf %255, %256 : vector<8x512xf32>
    %258 = vector.extract_strided_slice %257 {offsets = [0, 0], sizes = [8, 128], strides = [1, 1]} : vector<8x512xf32> to vector<8x128xf32>
    %259 = arith.negf %258 : vector<8x128xf32>
    %260 = math.exp %259 : vector<8x128xf32>
    %cst_73 = arith.constant 1.000000e+00 : f32
    %261 = vector.broadcast %cst_73 : f32 to vector<8x128xf32>
    %262 = arith.addf %261, %260 : vector<8x128xf32>
    %263 = arith.divf %261, %262 : vector<8x128xf32>
    %264 = vector.extract_strided_slice %257 {offsets = [0, 128], sizes = [8, 128], strides = [1, 1]} : vector<8x512xf32> to vector<8x128xf32>
    %265 = arith.negf %264 : vector<8x128xf32>
    %266 = math.exp %265 : vector<8x128xf32>
    %cst_74 = arith.constant 1.000000e+00 : f32
    %267 = vector.broadcast %cst_74 : f32 to vector<8x128xf32>
    %268 = arith.addf %267, %266 : vector<8x128xf32>
    %269 = arith.divf %267, %268 : vector<8x128xf32>
    %270 = vector.extract_strided_slice %257 {offsets = [0, 256], sizes = [8, 128], strides = [1, 1]} : vector<8x512xf32> to vector<8x128xf32>
    %271 = math.tanh %270 : vector<8x128xf32>
    %272 = vector.extract_strided_slice %257 {offsets = [0, 384], sizes = [8, 128], strides = [1, 1]} : vector<8x512xf32> to vector<8x128xf32>
    %273 = arith.negf %272 : vector<8x128xf32>
    %274 = math.exp %273 : vector<8x128xf32>
    %cst_75 = arith.constant 1.000000e+00 : f32
    %275 = vector.broadcast %cst_75 : f32 to vector<8x128xf32>
    %276 = arith.addf %275, %274 : vector<8x128xf32>
    %277 = arith.divf %275, %276 : vector<8x128xf32>
    %278 = arith.mulf %269, %247 : vector<8x128xf32>
    %279 = arith.mulf %263, %271 : vector<8x128xf32>
    %280 = arith.addf %278, %279 : vector<8x128xf32>
    %281 = math.tanh %280 : vector<8x128xf32>
    %282 = arith.mulf %277, %281 : vector<8x128xf32>
    %283 = arith.index_cast %253 : i32 to index
    %c0_76 = arith.constant 0 : index
    %284 = vector.load %arg15[%283, %c0_76] : memref<64x128xf32, #tpu.memory_space<vmem>>, vector<8x128xf32>
    tpu.vector_store %arg15[%283, %c0_76], %282 {strides = array<i32>} : memref<64x128xf32, #tpu.memory_space<vmem>>, vector<8x128xf32>,
    %c8_i32_77 = arith.constant 8 : i32
    %cst_78 = arith.constant 0xFF800000 : f32
    %285 = vector.broadcast %cst_78 : f32 to vector<8x128xf32>
    %c0_i32_79 = arith.constant 0 : i32
    %c8_i32_80 = arith.constant 8 : i32
    %286 = arith.muli %c0_i32_79, %c8_i32_80 : i32
    %287 = tpu.assume_multiple %286, 8 : i32
    %288 = arith.index_cast %287 : i32 to index
    %c0_81 = arith.constant 0 : index
    %289 = vector.load %arg14[%288, %c0_81] : memref<64x384xf32, #tpu.memory_space<vmem>>, vector<8x384xf32>
    %cst_82 = arith.constant dense<0.000000e+00> : vector<8x384xf32>
    %290 = tpu.matmul %282, %18, %cst_82 {dimension_numbers = #tpu.dot_dimension_numbers<[1], [0], [0], [1], [0, 0, 1, 1], [], []>} : vector<8x128xf32>, vector<128x384xf32>, vector<8x384xf32> -> vector<8x384xf32>
    %291 = vector.broadcast %19 : vector<1x384xf32> to vector<8x384xf32>
    %292 = arith.addf %290, %291 : vector<8x384xf32>
    %293 = vector.extract_strided_slice %289 {offsets = [0, 0], sizes = [8, 128], strides = [1, 1]} : vector<8x384xf32> to vector<8x128xf32>
    %294 = vector.extract_strided_slice %292 {offsets = [0, 0], sizes = [8, 128], strides = [1, 1]} : vector<8x384xf32> to vector<8x128xf32>
    %295 = arith.addf %293, %294 : vector<8x128xf32>
    %296 = arith.negf %295 : vector<8x128xf32>
    %297 = math.exp %296 : vector<8x128xf32>
    %cst_83 = arith.constant 1.000000e+00 : f32
    %298 = vector.broadcast %cst_83 : f32 to vector<8x128xf32>
    %299 = arith.addf %298, %297 : vector<8x128xf32>
    %300 = arith.divf %298, %299 : vector<8x128xf32>
    %301 = vector.extract_strided_slice %289 {offsets = [0, 128], sizes = [8, 128], strides = [1, 1]} : vector<8x384xf32> to vector<8x128xf32>
    %302 = vector.extract_strided_slice %292 {offsets = [0, 128], sizes = [8, 128], strides = [1, 1]} : vector<8x384xf32> to vector<8x128xf32>
    %303 = arith.addf %301, %302 : vector<8x128xf32>
    %304 = arith.negf %303 : vector<8x128xf32>
    %305 = math.exp %304 : vector<8x128xf32>
    %cst_84 = arith.constant 1.000000e+00 : f32
    %306 = vector.broadcast %cst_84 : f32 to vector<8x128xf32>
    %307 = arith.addf %306, %305 : vector<8x128xf32>
    %308 = arith.divf %306, %307 : vector<8x128xf32>
    %309 = vector.extract_strided_slice %289 {offsets = [0, 256], sizes = [8, 128], strides = [1, 1]} : vector<8x384xf32> to vector<8x128xf32>
    %310 = vector.extract_strided_slice %292 {offsets = [0, 256], sizes = [8, 128], strides = [1, 1]} : vector<8x384xf32> to vector<8x128xf32>
    %311 = arith.mulf %300, %310 : vector<8x128xf32>
    %312 = arith.addf %309, %311 : vector<8x128xf32>
    %313 = math.tanh %312 : vector<8x128xf32>
    %cst_85 = arith.constant 1.000000e+00 : f32
    %314 = vector.broadcast %cst_85 : f32 to vector<8x128xf32>
    %315 = arith.subf %314, %308 : vector<8x128xf32>
    %316 = arith.mulf %315, %313 : vector<8x128xf32>
    %317 = arith.mulf %308, %282 : vector<8x128xf32>
    %318 = arith.addf %316, %317 : vector<8x128xf32>
    %319 = arith.index_cast %287 : i32 to index
    %c0_86 = arith.constant 0 : index
    %320 = vector.load %arg15[%319, %c0_86] : memref<64x128xf32, #tpu.memory_space<vmem>>, vector<8x128xf32>
    %321 = arith.addf %320, %318 : vector<8x128xf32>
    %322 = arith.maximumf %285, %321 : vector<8x128xf32>
    %c1_i32_87 = arith.constant 1 : i32
    %c8_i32_88 = arith.constant 8 : i32
    %323 = arith.muli %c1_i32_87, %c8_i32_88 : i32
    %324 = tpu.assume_multiple %323, 8 : i32
    %325 = arith.index_cast %324 : i32 to index
    %c0_89 = arith.constant 0 : index
    %326 = vector.load %arg14[%325, %c0_89] : memref<64x384xf32, #tpu.memory_space<vmem>>, vector<8x384xf32>
    %cst_90 = arith.constant dense<0.000000e+00> : vector<8x384xf32>
    %327 = tpu.matmul %318, %18, %cst_90 {dimension_numbers = #tpu.dot_dimension_numbers<[1], [0], [0], [1], [0, 0, 1, 1], [], []>} : vector<8x128xf32>, vector<128x384xf32>, vector<8x384xf32> -> vector<8x384xf32>
    %328 = vector.broadcast %19 : vector<1x384xf32> to vector<8x384xf32>
    %329 = arith.addf %327, %328 : vector<8x384xf32>
    %330 = vector.extract_strided_slice %326 {offsets = [0, 0], sizes = [8, 128], strides = [1, 1]} : vector<8x384xf32> to vector<8x128xf32>
    %331 = vector.extract_strided_slice %329 {offsets = [0, 0], sizes = [8, 128], strides = [1, 1]} : vector<8x384xf32> to vector<8x128xf32>
    %332 = arith.addf %330, %331 : vector<8x128xf32>
    %333 = arith.negf %332 : vector<8x128xf32>
    %334 = math.exp %333 : vector<8x128xf32>
    %cst_91 = arith.constant 1.000000e+00 : f32
    %335 = vector.broadcast %cst_91 : f32 to vector<8x128xf32>
    %336 = arith.addf %335, %334 : vector<8x128xf32>
    %337 = arith.divf %335, %336 : vector<8x128xf32>
    %338 = vector.extract_strided_slice %326 {offsets = [0, 128], sizes = [8, 128], strides = [1, 1]} : vector<8x384xf32> to vector<8x128xf32>
    %339 = vector.extract_strided_slice %329 {offsets = [0, 128], sizes = [8, 128], strides = [1, 1]} : vector<8x384xf32> to vector<8x128xf32>
    %340 = arith.addf %338, %339 : vector<8x128xf32>
    %341 = arith.negf %340 : vector<8x128xf32>
    %342 = math.exp %341 : vector<8x128xf32>
    %cst_92 = arith.constant 1.000000e+00 : f32
    %343 = vector.broadcast %cst_92 : f32 to vector<8x128xf32>
    %344 = arith.addf %343, %342 : vector<8x128xf32>
    %345 = arith.divf %343, %344 : vector<8x128xf32>
    %346 = vector.extract_strided_slice %326 {offsets = [0, 256], sizes = [8, 128], strides = [1, 1]} : vector<8x384xf32> to vector<8x128xf32>
    %347 = vector.extract_strided_slice %329 {offsets = [0, 256], sizes = [8, 128], strides = [1, 1]} : vector<8x384xf32> to vector<8x128xf32>
    %348 = arith.mulf %337, %347 : vector<8x128xf32>
    %349 = arith.addf %346, %348 : vector<8x128xf32>
    %350 = math.tanh %349 : vector<8x128xf32>
    %cst_93 = arith.constant 1.000000e+00 : f32
    %351 = vector.broadcast %cst_93 : f32 to vector<8x128xf32>
    %352 = arith.subf %351, %345 : vector<8x128xf32>
    %353 = arith.mulf %352, %350 : vector<8x128xf32>
    %354 = arith.mulf %345, %318 : vector<8x128xf32>
    %355 = arith.addf %353, %354 : vector<8x128xf32>
    %356 = arith.index_cast %324 : i32 to index
    %c0_94 = arith.constant 0 : index
    %357 = vector.load %arg15[%356, %c0_94] : memref<64x128xf32, #tpu.memory_space<vmem>>, vector<8x128xf32>
    %358 = arith.addf %357, %355 : vector<8x128xf32>
    %359 = arith.maximumf %322, %358 : vector<8x128xf32>
    %c2_i32_95 = arith.constant 2 : i32
    %c8_i32_96 = arith.constant 8 : i32
    %360 = arith.muli %c2_i32_95, %c8_i32_96 : i32
    %361 = tpu.assume_multiple %360, 8 : i32
    %362 = arith.index_cast %361 : i32 to index
    %c0_97 = arith.constant 0 : index
    %363 = vector.load %arg14[%362, %c0_97] : memref<64x384xf32, #tpu.memory_space<vmem>>, vector<8x384xf32>
    %cst_98 = arith.constant dense<0.000000e+00> : vector<8x384xf32>
    %364 = tpu.matmul %355, %18, %cst_98 {dimension_numbers = #tpu.dot_dimension_numbers<[1], [0], [0], [1], [0, 0, 1, 1], [], []>} : vector<8x128xf32>, vector<128x384xf32>, vector<8x384xf32> -> vector<8x384xf32>
    %365 = vector.broadcast %19 : vector<1x384xf32> to vector<8x384xf32>
    %366 = arith.addf %364, %365 : vector<8x384xf32>
    %367 = vector.extract_strided_slice %363 {offsets = [0, 0], sizes = [8, 128], strides = [1, 1]} : vector<8x384xf32> to vector<8x128xf32>
    %368 = vector.extract_strided_slice %366 {offsets = [0, 0], sizes = [8, 128], strides = [1, 1]} : vector<8x384xf32> to vector<8x128xf32>
    %369 = arith.addf %367, %368 : vector<8x128xf32>
    %370 = arith.negf %369 : vector<8x128xf32>
    %371 = math.exp %370 : vector<8x128xf32>
    %cst_99 = arith.constant 1.000000e+00 : f32
    %372 = vector.broadcast %cst_99 : f32 to vector<8x128xf32>
    %373 = arith.addf %372, %371 : vector<8x128xf32>
    %374 = arith.divf %372, %373 : vector<8x128xf32>
    %375 = vector.extract_strided_slice %363 {offsets = [0, 128], sizes = [8, 128], strides = [1, 1]} : vector<8x384xf32> to vector<8x128xf32>
    %376 = vector.extract_strided_slice %366 {offsets = [0, 128], sizes = [8, 128], strides = [1, 1]} : vector<8x384xf32> to vector<8x128xf32>
    %377 = arith.addf %375, %376 : vector<8x128xf32>
    %378 = arith.negf %377 : vector<8x128xf32>
    %379 = math.exp %378 : vector<8x128xf32>
    %cst_100 = arith.constant 1.000000e+00 : f32
    %380 = vector.broadcast %cst_100 : f32 to vector<8x128xf32>
    %381 = arith.addf %380, %379 : vector<8x128xf32>
    %382 = arith.divf %380, %381 : vector<8x128xf32>
    %383 = vector.extract_strided_slice %363 {offsets = [0, 256], sizes = [8, 128], strides = [1, 1]} : vector<8x384xf32> to vector<8x128xf32>
    %384 = vector.extract_strided_slice %366 {offsets = [0, 256], sizes = [8, 128], strides = [1, 1]} : vector<8x384xf32> to vector<8x128xf32>
    %385 = arith.mulf %374, %384 : vector<8x128xf32>
    %386 = arith.addf %383, %385 : vector<8x128xf32>
    %387 = math.tanh %386 : vector<8x128xf32>
    %cst_101 = arith.constant 1.000000e+00 : f32
    %388 = vector.broadcast %cst_101 : f32 to vector<8x128xf32>
    %389 = arith.subf %388, %382 : vector<8x128xf32>
    %390 = arith.mulf %389, %387 : vector<8x128xf32>
    %391 = arith.mulf %382, %355 : vector<8x128xf32>
    %392 = arith.addf %390, %391 : vector<8x128xf32>
    %393 = arith.index_cast %361 : i32 to index
    %c0_102 = arith.constant 0 : index
    %394 = vector.load %arg15[%393, %c0_102] : memref<64x128xf32, #tpu.memory_space<vmem>>, vector<8x128xf32>
    %395 = arith.addf %394, %392 : vector<8x128xf32>
    %396 = arith.maximumf %359, %395 : vector<8x128xf32>
    %c3_i32_103 = arith.constant 3 : i32
    %c8_i32_104 = arith.constant 8 : i32
    %397 = arith.muli %c3_i32_103, %c8_i32_104 : i32
    %398 = tpu.assume_multiple %397, 8 : i32
    %399 = arith.index_cast %398 : i32 to index
    %c0_105 = arith.constant 0 : index
    %400 = vector.load %arg14[%399, %c0_105] : memref<64x384xf32, #tpu.memory_space<vmem>>, vector<8x384xf32>
    %cst_106 = arith.constant dense<0.000000e+00> : vector<8x384xf32>
    %401 = tpu.matmul %392, %18, %cst_106 {dimension_numbers = #tpu.dot_dimension_numbers<[1], [0], [0], [1], [0, 0, 1, 1], [], []>} : vector<8x128xf32>, vector<128x384xf32>, vector<8x384xf32> -> vector<8x384xf32>
    %402 = vector.broadcast %19 : vector<1x384xf32> to vector<8x384xf32>
    %403 = arith.addf %401, %402 : vector<8x384xf32>
    %404 = vector.extract_strided_slice %400 {offsets = [0, 0], sizes = [8, 128], strides = [1, 1]} : vector<8x384xf32> to vector<8x128xf32>
    %405 = vector.extract_strided_slice %403 {offsets = [0, 0], sizes = [8, 128], strides = [1, 1]} : vector<8x384xf32> to vector<8x128xf32>
    %406 = arith.addf %404, %405 : vector<8x128xf32>
    %407 = arith.negf %406 : vector<8x128xf32>
    %408 = math.exp %407 : vector<8x128xf32>
    %cst_107 = arith.constant 1.000000e+00 : f32
    %409 = vector.broadcast %cst_107 : f32 to vector<8x128xf32>
    %410 = arith.addf %409, %408 : vector<8x128xf32>
    %411 = arith.divf %409, %410 : vector<8x128xf32>
    %412 = vector.extract_strided_slice %400 {offsets = [0, 128], sizes = [8, 128], strides = [1, 1]} : vector<8x384xf32> to vector<8x128xf32>
    %413 = vector.extract_strided_slice %403 {offsets = [0, 128], sizes = [8, 128], strides = [1, 1]} : vector<8x384xf32> to vector<8x128xf32>
    %414 = arith.addf %412, %413 : vector<8x128xf32>
    %415 = arith.negf %414 : vector<8x128xf32>
    %416 = math.exp %415 : vector<8x128xf32>
    %cst_108 = arith.constant 1.000000e+00 : f32
    %417 = vector.broadcast %cst_108 : f32 to vector<8x128xf32>
    %418 = arith.addf %417, %416 : vector<8x128xf32>
    %419 = arith.divf %417, %418 : vector<8x128xf32>
    %420 = vector.extract_strided_slice %400 {offsets = [0, 256], sizes = [8, 128], strides = [1, 1]} : vector<8x384xf32> to vector<8x128xf32>
    %421 = vector.extract_strided_slice %403 {offsets = [0, 256], sizes = [8, 128], strides = [1, 1]} : vector<8x384xf32> to vector<8x128xf32>
    %422 = arith.mulf %411, %421 : vector<8x128xf32>
    %423 = arith.addf %420, %422 : vector<8x128xf32>
    %424 = math.tanh %423 : vector<8x128xf32>
    %cst_109 = arith.constant 1.000000e+00 : f32
    %425 = vector.broadcast %cst_109 : f32 to vector<8x128xf32>
    %426 = arith.subf %425, %419 : vector<8x128xf32>
    %427 = arith.mulf %426, %424 : vector<8x128xf32>
    %428 = arith.mulf %419, %392 : vector<8x128xf32>
    %429 = arith.addf %427, %428 : vector<8x128xf32>
    %430 = arith.index_cast %398 : i32 to index
    %c0_110 = arith.constant 0 : index
    %431 = vector.load %arg15[%430, %c0_110] : memref<64x128xf32, #tpu.memory_space<vmem>>, vector<8x128xf32>
    %432 = arith.addf %431, %429 : vector<8x128xf32>
    %433 = arith.maximumf %396, %432 : vector<8x128xf32>
    %c4_i32_111 = arith.constant 4 : i32
    %c8_i32_112 = arith.constant 8 : i32
    %434 = arith.muli %c4_i32_111, %c8_i32_112 : i32
    %435 = tpu.assume_multiple %434, 8 : i32
    %436 = arith.index_cast %435 : i32 to index
    %c0_113 = arith.constant 0 : index
    %437 = vector.load %arg14[%436, %c0_113] : memref<64x384xf32, #tpu.memory_space<vmem>>, vector<8x384xf32>
    %cst_114 = arith.constant dense<0.000000e+00> : vector<8x384xf32>
    %438 = tpu.matmul %429, %18, %cst_114 {dimension_numbers = #tpu.dot_dimension_numbers<[1], [0], [0], [1], [0, 0, 1, 1], [], []>} : vector<8x128xf32>, vector<128x384xf32>, vector<8x384xf32> -> vector<8x384xf32>
    %439 = vector.broadcast %19 : vector<1x384xf32> to vector<8x384xf32>
    %440 = arith.addf %438, %439 : vector<8x384xf32>
    %441 = vector.extract_strided_slice %437 {offsets = [0, 0], sizes = [8, 128], strides = [1, 1]} : vector<8x384xf32> to vector<8x128xf32>
    %442 = vector.extract_strided_slice %440 {offsets = [0, 0], sizes = [8, 128], strides = [1, 1]} : vector<8x384xf32> to vector<8x128xf32>
    %443 = arith.addf %441, %442 : vector<8x128xf32>
    %444 = arith.negf %443 : vector<8x128xf32>
    %445 = math.exp %444 : vector<8x128xf32>
    %cst_115 = arith.constant 1.000000e+00 : f32
    %446 = vector.broadcast %cst_115 : f32 to vector<8x128xf32>
    %447 = arith.addf %446, %445 : vector<8x128xf32>
    %448 = arith.divf %446, %447 : vector<8x128xf32>
    %449 = vector.extract_strided_slice %437 {offsets = [0, 128], sizes = [8, 128], strides = [1, 1]} : vector<8x384xf32> to vector<8x128xf32>
    %450 = vector.extract_strided_slice %440 {offsets = [0, 128], sizes = [8, 128], strides = [1, 1]} : vector<8x384xf32> to vector<8x128xf32>
    %451 = arith.addf %449, %450 : vector<8x128xf32>
    %452 = arith.negf %451 : vector<8x128xf32>
    %453 = math.exp %452 : vector<8x128xf32>
    %cst_116 = arith.constant 1.000000e+00 : f32
    %454 = vector.broadcast %cst_116 : f32 to vector<8x128xf32>
    %455 = arith.addf %454, %453 : vector<8x128xf32>
    %456 = arith.divf %454, %455 : vector<8x128xf32>
    %457 = vector.extract_strided_slice %437 {offsets = [0, 256], sizes = [8, 128], strides = [1, 1]} : vector<8x384xf32> to vector<8x128xf32>
    %458 = vector.extract_strided_slice %440 {offsets = [0, 256], sizes = [8, 128], strides = [1, 1]} : vector<8x384xf32> to vector<8x128xf32>
    %459 = arith.mulf %448, %458 : vector<8x128xf32>
    %460 = arith.addf %457, %459 : vector<8x128xf32>
    %461 = math.tanh %460 : vector<8x128xf32>
    %cst_117 = arith.constant 1.000000e+00 : f32
    %462 = vector.broadcast %cst_117 : f32 to vector<8x128xf32>
    %463 = arith.subf %462, %456 : vector<8x128xf32>
    %464 = arith.mulf %463, %461 : vector<8x128xf32>
    %465 = arith.mulf %456, %429 : vector<8x128xf32>
    %466 = arith.addf %464, %465 : vector<8x128xf32>
    %467 = arith.index_cast %435 : i32 to index
    %c0_118 = arith.constant 0 : index
    %468 = vector.load %arg15[%467, %c0_118] : memref<64x128xf32, #tpu.memory_space<vmem>>, vector<8x128xf32>
    %469 = arith.addf %468, %466 : vector<8x128xf32>
    %470 = arith.maximumf %433, %469 : vector<8x128xf32>
    %c5_i32_119 = arith.constant 5 : i32
    %c8_i32_120 = arith.constant 8 : i32
    %471 = arith.muli %c5_i32_119, %c8_i32_120 : i32
    %472 = tpu.assume_multiple %471, 8 : i32
    %473 = arith.index_cast %472 : i32 to index
    %c0_121 = arith.constant 0 : index
    %474 = vector.load %arg14[%473, %c0_121] : memref<64x384xf32, #tpu.memory_space<vmem>>, vector<8x384xf32>
    %cst_122 = arith.constant dense<0.000000e+00> : vector<8x384xf32>
    %475 = tpu.matmul %466, %18, %cst_122 {dimension_numbers = #tpu.dot_dimension_numbers<[1], [0], [0], [1], [0, 0, 1, 1], [], []>} : vector<8x128xf32>, vector<128x384xf32>, vector<8x384xf32> -> vector<8x384xf32>
    %476 = vector.broadcast %19 : vector<1x384xf32> to vector<8x384xf32>
    %477 = arith.addf %475, %476 : vector<8x384xf32>
    %478 = vector.extract_strided_slice %474 {offsets = [0, 0], sizes = [8, 128], strides = [1, 1]} : vector<8x384xf32> to vector<8x128xf32>
    %479 = vector.extract_strided_slice %477 {offsets = [0, 0], sizes = [8, 128], strides = [1, 1]} : vector<8x384xf32> to vector<8x128xf32>
    %480 = arith.addf %478, %479 : vector<8x128xf32>
    %481 = arith.negf %480 : vector<8x128xf32>
    %482 = math.exp %481 : vector<8x128xf32>
    %cst_123 = arith.constant 1.000000e+00 : f32
    %483 = vector.broadcast %cst_123 : f32 to vector<8x128xf32>
    %484 = arith.addf %483, %482 : vector<8x128xf32>
    %485 = arith.divf %483, %484 : vector<8x128xf32>
    %486 = vector.extract_strided_slice %474 {offsets = [0, 128], sizes = [8, 128], strides = [1, 1]} : vector<8x384xf32> to vector<8x128xf32>
    %487 = vector.extract_strided_slice %477 {offsets = [0, 128], sizes = [8, 128], strides = [1, 1]} : vector<8x384xf32> to vector<8x128xf32>
    %488 = arith.addf %486, %487 : vector<8x128xf32>
    %489 = arith.negf %488 : vector<8x128xf32>
    %490 = math.exp %489 : vector<8x128xf32>
    %cst_124 = arith.constant 1.000000e+00 : f32
    %491 = vector.broadcast %cst_124 : f32 to vector<8x128xf32>
    %492 = arith.addf %491, %490 : vector<8x128xf32>
    %493 = arith.divf %491, %492 : vector<8x128xf32>
    %494 = vector.extract_strided_slice %474 {offsets = [0, 256], sizes = [8, 128], strides = [1, 1]} : vector<8x384xf32> to vector<8x128xf32>
    %495 = vector.extract_strided_slice %477 {offsets = [0, 256], sizes = [8, 128], strides = [1, 1]} : vector<8x384xf32> to vector<8x128xf32>
    %496 = arith.mulf %485, %495 : vector<8x128xf32>
    %497 = arith.addf %494, %496 : vector<8x128xf32>
    %498 = math.tanh %497 : vector<8x128xf32>
    %cst_125 = arith.constant 1.000000e+00 : f32
    %499 = vector.broadcast %cst_125 : f32 to vector<8x128xf32>
    %500 = arith.subf %499, %493 : vector<8x128xf32>
    %501 = arith.mulf %500, %498 : vector<8x128xf32>
    %502 = arith.mulf %493, %466 : vector<8x128xf32>
    %503 = arith.addf %501, %502 : vector<8x128xf32>
    %504 = arith.index_cast %472 : i32 to index
    %c0_126 = arith.constant 0 : index
    %505 = vector.load %arg15[%504, %c0_126] : memref<64x128xf32, #tpu.memory_space<vmem>>, vector<8x128xf32>
    %506 = arith.addf %505, %503 : vector<8x128xf32>
    %507 = arith.maximumf %470, %506 : vector<8x128xf32>
    %c6_i32_127 = arith.constant 6 : i32
    %c8_i32_128 = arith.constant 8 : i32
    %508 = arith.muli %c6_i32_127, %c8_i32_128 : i32
    %509 = tpu.assume_multiple %508, 8 : i32
    %510 = arith.index_cast %509 : i32 to index
    %c0_129 = arith.constant 0 : index
    %511 = vector.load %arg14[%510, %c0_129] : memref<64x384xf32, #tpu.memory_space<vmem>>, vector<8x384xf32>
    %cst_130 = arith.constant dense<0.000000e+00> : vector<8x384xf32>
    %512 = tpu.matmul %503, %18, %cst_130 {dimension_numbers = #tpu.dot_dimension_numbers<[1], [0], [0], [1], [0, 0, 1, 1], [], []>} : vector<8x128xf32>, vector<128x384xf32>, vector<8x384xf32> -> vector<8x384xf32>
    %513 = vector.broadcast %19 : vector<1x384xf32> to vector<8x384xf32>
    %514 = arith.addf %512, %513 : vector<8x384xf32>
    %515 = vector.extract_strided_slice %511 {offsets = [0, 0], sizes = [8, 128], strides = [1, 1]} : vector<8x384xf32> to vector<8x128xf32>
    %516 = vector.extract_strided_slice %514 {offsets = [0, 0], sizes = [8, 128], strides = [1, 1]} : vector<8x384xf32> to vector<8x128xf32>
    %517 = arith.addf %515, %516 : vector<8x128xf32>
    %518 = arith.negf %517 : vector<8x128xf32>
    %519 = math.exp %518 : vector<8x128xf32>
    %cst_131 = arith.constant 1.000000e+00 : f32
    %520 = vector.broadcast %cst_131 : f32 to vector<8x128xf32>
    %521 = arith.addf %520, %519 : vector<8x128xf32>
    %522 = arith.divf %520, %521 : vector<8x128xf32>
    %523 = vector.extract_strided_slice %511 {offsets = [0, 128], sizes = [8, 128], strides = [1, 1]} : vector<8x384xf32> to vector<8x128xf32>
    %524 = vector.extract_strided_slice %514 {offsets = [0, 128], sizes = [8, 128], strides = [1, 1]} : vector<8x384xf32> to vector<8x128xf32>
    %525 = arith.addf %523, %524 : vector<8x128xf32>
    %526 = arith.negf %525 : vector<8x128xf32>
    %527 = math.exp %526 : vector<8x128xf32>
    %cst_132 = arith.constant 1.000000e+00 : f32
    %528 = vector.broadcast %cst_132 : f32 to vector<8x128xf32>
    %529 = arith.addf %528, %527 : vector<8x128xf32>
    %530 = arith.divf %528, %529 : vector<8x128xf32>
    %531 = vector.extract_strided_slice %511 {offsets = [0, 256], sizes = [8, 128], strides = [1, 1]} : vector<8x384xf32> to vector<8x128xf32>
    %532 = vector.extract_strided_slice %514 {offsets = [0, 256], sizes = [8, 128], strides = [1, 1]} : vector<8x384xf32> to vector<8x128xf32>
    %533 = arith.mulf %522, %532 : vector<8x128xf32>
    %534 = arith.addf %531, %533 : vector<8x128xf32>
    %535 = math.tanh %534 : vector<8x128xf32>
    %cst_133 = arith.constant 1.000000e+00 : f32
    %536 = vector.broadcast %cst_133 : f32 to vector<8x128xf32>
    %537 = arith.subf %536, %530 : vector<8x128xf32>
    %538 = arith.mulf %537, %535 : vector<8x128xf32>
    %539 = arith.mulf %530, %503 : vector<8x128xf32>
    %540 = arith.addf %538, %539 : vector<8x128xf32>
    %541 = arith.index_cast %509 : i32 to index
    %c0_134 = arith.constant 0 : index
    %542 = vector.load %arg15[%541, %c0_134] : memref<64x128xf32, #tpu.memory_space<vmem>>, vector<8x128xf32>
    %543 = arith.addf %542, %540 : vector<8x128xf32>
    %544 = arith.maximumf %507, %543 : vector<8x128xf32>
    %c7_i32_135 = arith.constant 7 : i32
    %c8_i32_136 = arith.constant 8 : i32
    %545 = arith.muli %c7_i32_135, %c8_i32_136 : i32
    %546 = tpu.assume_multiple %545, 8 : i32
    %547 = arith.index_cast %546 : i32 to index
    %c0_137 = arith.constant 0 : index
    %548 = vector.load %arg14[%547, %c0_137] : memref<64x384xf32, #tpu.memory_space<vmem>>, vector<8x384xf32>
    %cst_138 = arith.constant dense<0.000000e+00> : vector<8x384xf32>
    %549 = tpu.matmul %540, %18, %cst_138 {dimension_numbers = #tpu.dot_dimension_numbers<[1], [0], [0], [1], [0, 0, 1, 1], [], []>} : vector<8x128xf32>, vector<128x384xf32>, vector<8x384xf32> -> vector<8x384xf32>
    %550 = vector.broadcast %19 : vector<1x384xf32> to vector<8x384xf32>
    %551 = arith.addf %549, %550 : vector<8x384xf32>
    %552 = vector.extract_strided_slice %548 {offsets = [0, 0], sizes = [8, 128], strides = [1, 1]} : vector<8x384xf32> to vector<8x128xf32>
    %553 = vector.extract_strided_slice %551 {offsets = [0, 0], sizes = [8, 128], strides = [1, 1]} : vector<8x384xf32> to vector<8x128xf32>
    %554 = arith.addf %552, %553 : vector<8x128xf32>
    %555 = arith.negf %554 : vector<8x128xf32>
    %556 = math.exp %555 : vector<8x128xf32>
    %cst_139 = arith.constant 1.000000e+00 : f32
    %557 = vector.broadcast %cst_139 : f32 to vector<8x128xf32>
    %558 = arith.addf %557, %556 : vector<8x128xf32>
    %559 = arith.divf %557, %558 : vector<8x128xf32>
    %560 = vector.extract_strided_slice %548 {offsets = [0, 128], sizes = [8, 128], strides = [1, 1]} : vector<8x384xf32> to vector<8x128xf32>
    %561 = vector.extract_strided_slice %551 {offsets = [0, 128], sizes = [8, 128], strides = [1, 1]} : vector<8x384xf32> to vector<8x128xf32>
    %562 = arith.addf %560, %561 : vector<8x128xf32>
    %563 = arith.negf %562 : vector<8x128xf32>
    %564 = math.exp %563 : vector<8x128xf32>
    %cst_140 = arith.constant 1.000000e+00 : f32
    %565 = vector.broadcast %cst_140 : f32 to vector<8x128xf32>
    %566 = arith.addf %565, %564 : vector<8x128xf32>
    %567 = arith.divf %565, %566 : vector<8x128xf32>
    %568 = vector.extract_strided_slice %548 {offsets = [0, 256], sizes = [8, 128], strides = [1, 1]} : vector<8x384xf32> to vector<8x128xf32>
    %569 = vector.extract_strided_slice %551 {offsets = [0, 256], sizes = [8, 128], strides = [1, 1]} : vector<8x384xf32> to vector<8x128xf32>
    %570 = arith.mulf %559, %569 : vector<8x128xf32>
    %571 = arith.addf %568, %570 : vector<8x128xf32>
    %572 = math.tanh %571 : vector<8x128xf32>
    %cst_141 = arith.constant 1.000000e+00 : f32
    %573 = vector.broadcast %cst_141 : f32 to vector<8x128xf32>
    %574 = arith.subf %573, %567 : vector<8x128xf32>
    %575 = arith.mulf %574, %572 : vector<8x128xf32>
    %576 = arith.mulf %567, %540 : vector<8x128xf32>
    %577 = arith.addf %575, %576 : vector<8x128xf32>
    %578 = arith.index_cast %546 : i32 to index
    %c0_142 = arith.constant 0 : index
    %579 = vector.load %arg15[%578, %c0_142] : memref<64x128xf32, #tpu.memory_space<vmem>>, vector<8x128xf32>
    %580 = arith.addf %579, %577 : vector<8x128xf32>
    %581 = arith.maximumf %544, %580 : vector<8x128xf32>
    %c8_i32_143 = arith.constant 8 : i32
    %c0_144 = arith.constant 0 : index
    %c0_145 = arith.constant 0 : index
    %582 = vector.load %arg8[%c0_144, %c0_145] : memref<128x128xf32, #tpu.memory_space<vmem>>, vector<128x128xf32>
    %cst_146 = arith.constant dense<0.000000e+00> : vector<8x128xf32>
    %583 = tpu.matmul %581, %582, %cst_146 {dimension_numbers = #tpu.dot_dimension_numbers<[1], [0], [0], [1], [0, 0, 1, 1], [], []>} : vector<8x128xf32>, vector<128x128xf32>, vector<8x128xf32> -> vector<8x128xf32>
    %c0_147 = arith.constant 0 : index
    %c0_148 = arith.constant 0 : index
    %584 = vector.load %arg9[%c0_147, %c0_148] : memref<1x128xf32, #tpu.memory_space<vmem>>, vector<1x128xf32>
    %585 = vector.broadcast %584 : vector<1x128xf32> to vector<8x128xf32>
    %586 = arith.addf %583, %585 : vector<8x128xf32>
    %cst_149 = arith.constant 0.000000e+00 : f32
    %587 = vector.broadcast %cst_149 : f32 to vector<8x128xf32>
    %588 = arith.maximumf %586, %587 : vector<8x128xf32>
    %c0_150 = arith.constant 0 : index
    %c0_151 = arith.constant 0 : index
    %589 = vector.load %arg10[%c0_150, %c0_151] : memref<1x128xf32, #tpu.memory_space<vmem>>, vector<1x128xf32>
    %590 = vector.broadcast %589 : vector<1x128xf32> to vector<8x128xf32>
    %591 = arith.mulf %588, %590 : vector<8x128xf32>
    %cst_152 = arith.constant dense<0.000000e+00> : vector<8xf32>
    %592 = vector.multi_reduction <add>, %591, %cst_152 [1] : vector<8x128xf32> to vector<8xf32>
    %593 = vector.shape_cast %592 : vector<8xf32> to vector<8x1xf32>
    %c0_153 = arith.constant 0 : index
    %594 = memref.load %arg11[%c0_153] : memref<1xf32, #tpu.memory_space<smem>>
    %595 = vector.broadcast %594 : f32 to vector<8x1xf32>
    %596 = arith.addf %593, %595 : vector<8x1xf32>
    %597 = vector.shape_cast %596 : vector<8x1xf32> to vector<8x1xf32>
    %598 = vector.broadcast %597 : vector<8x1xf32> to vector<8x128xf32>
    %c0_154 = arith.constant 0 : index
    %c0_155 = arith.constant 0 : index
    %599 = vector.load %arg12[%c0_154, %c0_155] : memref<8x128xf32, #tpu.memory_space<vmem>>, vector<8x128xf32>
    tpu.vector_store %arg12[%c0_154, %c0_155], %598 {strides = array<i32>} : memref<8x128xf32, #tpu.memory_space<vmem>>, vector<8x128xf32>,
    return
  }
}

</mosaic_0001>

<llo_original>
// kernel: tpu_custom_call.1
$region0: #{tpu_custom_call.1}
  #allocation0 [shape = 'u32[]', space=smem, size = 0x4, offset = 0x4, fixed_abs, tag = 'smem constant byte address 0x4 - core index']
  #allocation1 [shape = 'u32[144,128]{1,0:T(1,128)}', space=vmem, size = 0x12000, scoped, tag = 'internal scratch']
  #allocation2 [shape = 'f32[64,512]{1,0:T(8,128)}', space=vmem, size = 0x20000, scoped, tag = 'scratch operand']
  #allocation3 [shape = 'f32[64,384]{1,0:T(8,128)}', space=vmem, size = 0x18000, scoped, tag = 'scratch operand']
  #allocation4 [shape = 'f32[64,128]{1,0:T(8,128)}', space=vmem, size = 0x8000, scoped, tag = 'scratch operand']
  #allocation5 [shape = 'f32[1]{0:T(128)S(6)}', space=smem, size = 0x200, scoped, tag = 'scoped memory for tpu_custom_call.1']
  %s0 = inlined_call_operand.vmem [shape: f32[64,32], index: 0, kind: input, shape index: {}]
  %s1 = inlined_call_operand.hbm [shape: f32[32,640], index: 1, kind: input, shape index: {}]
  %s2 = inlined_call_operand.vmem [shape: f32[1,640], index: 2, kind: input, shape index: {}]
  %s3 = inlined_call_operand.hbm [shape: f32[128,512], index: 3, kind: input, shape index: {}]
  %s4 = inlined_call_operand.hbm [shape: f32[128,384], index: 4, kind: input, shape index: {}]
  %s5 = inlined_call_operand.vmem [shape: f32[1,384], index: 5, kind: input, shape index: {}]
  %s6 = inlined_call_operand.hbm [shape: f32[128,384], index: 6, kind: input, shape index: {}]
  %s7 = inlined_call_operand.vmem [shape: f32[1,384], index: 7, kind: input, shape index: {}]
  %s8 = inlined_call_operand.hbm [shape: f32[128,128], index: 8, kind: input, shape index: {}]
  %s9 = inlined_call_operand.vmem [shape: f32[1,128], index: 9, kind: input, shape index: {}]
  %s10 = inlined_call_operand.vmem [shape: f32[1,128], index: 10, kind: input, shape index: {}]
  %s11 = inlined_call_operand.<no memory space> [shape: f32[1], index: 11, kind: input, shape index: {}]
  %s12 = inlined_call_operand.hbm [shape: f32[8,128], index: 12, kind: output, shape index: {}]
  %s13 = sld [smem:[#allocation0]]
  $region78: #{tpu_custom_call.1} parent=0
    _
  %s15 = ssub.s32 1, %s13
  %s16 = scalar_select 0, %s15, %s13
  %17 = sst [smem:[#allocation5]] %s11
  $region1: #{tpu_custom_call.1} parent=0
    #allocation6 [shape = 'u8[81920]{0}', space=vmem, size = 0x14000, scoped, tag = 'input window, operand 1, single buffered']
    #allocation7 [shape = 's32[1]{0}', space=sflag, size = 0x4, scoped, tag = 'scoped memory for tpu_custom_call.1']
    #allocation8 [shape = 's32[1]{0}', space=sflag, size = 0x4, scoped, tag = 'scoped memory for tpu_custom_call.1']
    #allocation9 [shape = 'u8[262144]{0}', space=vmem, size = 0x40000, scoped, tag = 'input window, operand 3, single buffered']
    #allocation10 [shape = 's32[1]{0}', space=sflag, size = 0x4, scoped, tag = 'scoped memory for tpu_custom_call.1']
    #allocation11 [shape = 'u8[196608]{0}', space=vmem, size = 0x30000, scoped, tag = 'input window, operand 4, single buffered']
    #allocation12 [shape = 'u8[196608]{0}', space=vmem, size = 0x30000, scoped, tag = 'input window, operand 6, single buffered']
    #allocation13 [shape = 's32[1]{0}', space=sflag, size = 0x4, scoped, tag = 'scoped memory for tpu_custom_call.1']
    #allocation14 [shape = 'u8[65536]{0}', space=vmem, size = 0x10000, scoped, tag = 'input window, operand 8, single buffered']
    #allocation15 [shape = 'u8[4096]{0}', space=vmem, size = 0x1000, scoped, tag = 'output window, operand 0, single buffered']
    %18 = vsyncpa [#allocation7], 0
    %19 = vsyncpa [#allocation10], 0
    %20 = vsyncpa [#allocation13], 0
    %21 = vsyncpa [#allocation8], 0
    // Predicated region
    $region2: #{tpu_custom_call.1} parent=1 // pred_check
      _
    $region3: #{tpu_custom_call.1} parent=1 // pred_check_branch
      %23 = sbr.rel (0) target = $region5
    $region4: #{tpu_custom_call.1} parent=1 // pred_region
      _
    $region5: #{tpu_custom_call.1} parent=1 // pred_fallthru
      _
    // Predicated region
    $region6: #{tpu_custom_call.1} parent=1 // pred_check
      _
    $region7: #{tpu_custom_call.1} parent=1 // pred_check_branch
      %25 = sbr.rel (0) target = $region9
    $region8: #{tpu_custom_call.1} parent=1 // pred_region
      %s27 = ssub.s32 2560, 2560
      %28 = vsyncadd [#allocation7], %s27
      %s29 = sshll.u32 [#allocation6], 4
      %s30 = int_to_ptr.vmem [resolvable:$true] %s29
      %35 = dma.hbm_to_vmem [thread:$0]  %s1, 2560, %s30, [#allocation7], 640, 640, 40
    $region9: #{tpu_custom_call.1} parent=1 // pred_fallthru
      _
    // Predicated region
    $region10: #{tpu_custom_call.1} parent=1 // pred_check
      _
    $region11: #{tpu_custom_call.1} parent=1 // pred_check_branch
      %37 = sbr.rel (0) target = $region13
    $region12: #{tpu_custom_call.1} parent=1 // pred_region
      _
    $region13: #{tpu_custom_call.1} parent=1 // pred_fallthru
      _
    // Predicated region
    $region14: #{tpu_custom_call.1} parent=1 // pred_check
      _
    $region15: #{tpu_custom_call.1} parent=1 // pred_check_branch
      %39 = sbr.rel (0) target = $region17
    $region16: #{tpu_custom_call.1} parent=1 // pred_region
      %s41 = ssub.s32 8192, 8192
      %42 = vsyncadd [#allocation10], %s41
      %s43 = sshll.u32 [#allocation9], 4
      %s44 = int_to_ptr.vmem [resolvable:$true] %s43
      %49 = dma.hbm_to_vmem [thread:$0]  %s3, 8192, %s44, [#allocation10], 512, 512, 32
    $region17: #{tpu_custom_call.1} parent=1 // pred_fallthru
      _
    // Predicated region
    $region18: #{tpu_custom_call.1} parent=1 // pred_check
      _
    $region19: #{tpu_custom_call.1} parent=1 // pred_check_branch
      %51 = sbr.rel (0) target = $region21
    $region20: #{tpu_custom_call.1} parent=1 // pred_region
      %s53 = ssub.s32 6144, 6144
      %54 = vsyncadd [#allocation10], %s53
      %s55 = sshll.u32 [#allocation11], 4
      %s56 = int_to_ptr.vmem [resolvable:$true] %s55
      %61 = dma.hbm_to_vmem [thread:$0]  %s4, 6144, %s56, [#allocation10], 384, 384, 24
    $region21: #{tpu_custom_call.1} parent=1 // pred_fallthru
      _
    // Predicated region
    $region22: #{tpu_custom_call.1} parent=1 // pred_check
      _
    $region23: #{tpu_custom_call.1} parent=1 // pred_check_branch
      %63 = sbr.rel (0) target = $region25
    $region24: #{tpu_custom_call.1} parent=1 // pred_region
      _
    $region25: #{tpu_custom_call.1} parent=1 // pred_fallthru
      _
    // Predicated region
    $region26: #{tpu_custom_call.1} parent=1 // pred_check
      _
    $region27: #{tpu_custom_call.1} parent=1 // pred_check_branch
      %65 = sbr.rel (0) target = $region29
    $region28: #{tpu_custom_call.1} parent=1 // pred_region
      %s67 = ssub.s32 6144, 6144
      %68 = vsyncadd [#allocation13], %s67
      %s69 = sshll.u32 [#allocation12], 4
      %s70 = int_to_ptr.vmem [resolvable:$true] %s69
      %75 = dma.hbm_to_vmem [thread:$0]  %s6, 6144, %s70, [#allocation13], 384, 384, 24
    $region29: #{tpu_custom_call.1} parent=1 // pred_fallthru
      _
    // Predicated region
    $region30: #{tpu_custom_call.1} parent=1 // pred_check
      _
    $region31: #{tpu_custom_call.1} parent=1 // pred_check_branch
      %77 = sbr.rel (0) target = $region33
    $region32: #{tpu_custom_call.1} parent=1 // pred_region
      _
    $region33: #{tpu_custom_call.1} parent=1 // pred_fallthru
      _
    // Predicated region
    $region34: #{tpu_custom_call.1} parent=1 // pred_check
      _
    $region35: #{tpu_custom_call.1} parent=1 // pred_check_branch
      %79 = sbr.rel (0) target = $region37
    $region36: #{tpu_custom_call.1} parent=1 // pred_region
      %s81 = ssub.s32 2048, 2048
      %82 = vsyncadd [#allocation13], %s81
      %s83 = sshll.u32 [#allocation14], 4
      %s84 = int_to_ptr.vmem [resolvable:$true] %s83
      %89 = dma.hbm_to_vmem [thread:$0]  %s8, 2048, %s84, [#allocation13], 128, 128, 8
    $region37: #{tpu_custom_call.1} parent=1 // pred_fallthru
      _
    // Predicated region
    $region38: #{tpu_custom_call.1} parent=1 // pred_check
      _
    $region39: #{tpu_custom_call.1} parent=1 // pred_check_branch
      %91 = sbr.rel (0) target = $region41
    $region40: #{tpu_custom_call.1} parent=1 // pred_region
      _
    $region41: #{tpu_custom_call.1} parent=1 // pred_fallthru
      _
    // Predicated region
    $region42: #{tpu_custom_call.1} parent=1 // pred_check
      _
    $region43: #{tpu_custom_call.1} parent=1 // pred_check_branch
      %93 = sbr.rel (0) target = $region45
    $region44: #{tpu_custom_call.1} parent=1 // pred_region
      _
    $region45: #{tpu_custom_call.1} parent=1 // pred_fallthru
      _
    // Predicated region
    $region46: #{tpu_custom_call.1} parent=1 // pred_check
      _
    $region47: #{tpu_custom_call.1} parent=1 // pred_check_branch
      %95 = sbr.rel (0) target = $region49
    $region48: #{tpu_custom_call.1} parent=1 // pred_region
      _
    $region49: #{tpu_custom_call.1} parent=1 // pred_fallthru
      _
    // Predicated region
    $region50: #{tpu_custom_call.1} parent=1 // pred_check
      _
    $region51: #{tpu_custom_call.1} parent=1 // pred_check_branch
      %97 = sbr.rel (0) target = $region53
    $region52: #{tpu_custom_call.1} parent=1 // pred_region
      %98 = dma.done [#allocation7], 2560
    $region53: #{tpu_custom_call.1} parent=1 // pred_fallthru
      _
    // Predicated region
    $region54: #{tpu_custom_call.1} parent=1 // pred_check
      _
    $region55: #{tpu_custom_call.1} parent=1 // pred_check_branch
      %100 = sbr.rel (0) target = $region57
    $region56: #{tpu_custom_call.1} parent=1 // pred_region
      %101 = dma.done [#allocation10], 8192
    $region57: #{tpu_custom_call.1} parent=1 // pred_fallthru
      _
    // Predicated region
    $region58: #{tpu_custom_call.1} parent=1 // pred_check
      _
    $region59: #{tpu_custom_call.1} parent=1 // pred_check_branch
      %103 = sbr.rel (0) target = $region61
    $region60: #{tpu_custom_call.1} parent=1 // pred_region
      %104 = dma.done [#allocation10], 6144
    $region61: #{tpu_custom_call.1} parent=1 // pred_fallthru
      _
    // Predicated region
    $region62: #{tpu_custom_call.1} parent=1 // pred_check
      _
    $region63: #{tpu_custom_call.1} parent=1 // pred_check_branch
      %106 = sbr.rel (0) target = $region65
    $region64: #{tpu_custom_call.1} parent=1 // pred_region
      %107 = dma.done [#allocation13], 6144
    $region65: #{tpu_custom_call.1} parent=1 // pred_fallthru
      _
    // Predicated region
    $region66: #{tpu_custom_call.1} parent=1 // pred_check
      _
    $region67: #{tpu_custom_call.1} parent=1 // pred_check_branch
      %109 = sbr.rel (0) target = $region69
    $region68: #{tpu_custom_call.1} parent=1 // pred_region
      %110 = dma.done [#allocation13], 2048
    $region69: #{tpu_custom_call.1} parent=1 // pred_fallthru
      _
    %v111 = vld [vmem:[%s0] sm:$0xff]
    %v112 = vld [vmem:[%s0 + $0x8] sm:$0xff]
    %v113 = vld [vmem:[%s0 + $0x10] sm:$0xff]
    %v114 = vld [vmem:[%s0 + $0x18] sm:$0xff]
    %v115 = vld [vmem:[%s0 + $0x20] sm:$0xff]
    %v116 = vld [vmem:[%s0 + $0x28] sm:$0xff]
    %v117 = vld [vmem:[%s0 + $0x30] sm:$0xff]
    %v118 = vld [vmem:[%s0 + $0x38] sm:$0xff]
    %v119 = vld [vmem:[#allocation6] sm:$0xff]
    %v120 = vld [vmem:[#allocation6 + $0x8] sm:$0xff]
    %v121 = vld [vmem:[#allocation6 + $0x10] sm:$0xff]
    %v122 = vld [vmem:[#allocation6 + $0x18] sm:$0xff]
    %v123 = vld [vmem:[#allocation6 + $0x20] sm:$0xff]
    %v124 = vld [vmem:[#allocation6 + $0x28] sm:$0xff]
    %v125 = vld [vmem:[#allocation6 + $0x30] sm:$0xff]
    %v126 = vld [vmem:[#allocation6 + $0x38] sm:$0xff]
    %v127 = vld [vmem:[#allocation6 + $0x40] sm:$0xff]
    %v128 = vld [vmem:[#allocation6 + $0x48] sm:$0xff]
    %v129 = vld [vmem:[#allocation6 + $0x50] sm:$0xff]
    %v130 = vld [vmem:[#allocation6 + $0x58] sm:$0xff]
    %v131 = vld [vmem:[#allocation6 + $0x60] sm:$0xff]
    %v132 = vld [vmem:[#allocation6 + $0x68] sm:$0xff]
    %v133 = vld [vmem:[#allocation6 + $0x70] sm:$0xff]
    %v134 = vld [vmem:[#allocation6 + $0x78] sm:$0xff]
    %v135 = vld [vmem:[#allocation6 + $0x80] sm:$0xff]
    %v136 = vld [vmem:[#allocation6 + $0x88] sm:$0xff]
    %v137 = vld [vmem:[#allocation6 + $0x90] sm:$0xff]
    %v138 = vld [vmem:[#allocation6 + $0x98] sm:$0xff]
    %v139 = vld [vmem:[%s2] sm:$0x1f]
    %v141 = vlaneseq
    %v142 = vshrl.u32 %v141, 7
    %v143 = vsub.s32 0, %v142
    %v144 = vrot.slane %v139, %v143
    %v145 = vlaneseq
    %v146 = vshrl.u32 %v145, 7
    %v147 = vsub.s32 1, %v146
    %v148 = vrot.slane %v139, %v147
    %v149 = vlaneseq
    %v150 = vshrl.u32 %v149, 7
    %v151 = vsub.s32 2, %v150
    %v152 = vrot.slane %v139, %v151
    %v153 = vlaneseq
    %v154 = vshrl.u32 %v153, 7
    %v155 = vsub.s32 3, %v154
    %v156 = vrot.slane %v139, %v155
    %v157 = vlaneseq
    %v158 = vshrl.u32 %v157, 7
    %v159 = vsub.s32 4, %v158
    %v160 = vrot.slane %v139, %v159
    %vm166 = vcmask 261120
    %v168 = vsel %vm166, %v111, 0
    %v171 = vsel %vm166, %v112, 0
    %v174 = vsel %vm166, %v113, 0
    %v177 = vsel %vm166, %v114, 0
    %v180 = vsel %vm166, %v115, 0
    %v183 = vsel %vm166, %v116, 0
    %v186 = vsel %vm166, %v117, 0
    %v189 = vsel %vm166, %v118, 0
    %191 = vmatprep.subr.mxu0 0.0
    %192 = vmatpush1.msra.mxu0 0.0
    %193 = vmatprep.subr.mxu0 0.0
    %194 = vmatpush1.msra.mxu0 0.0
    %195 = vmatprep.subr.mxu0 0.0
    %196 = vmatpush1.msra.mxu0 0.0
    %197 = vmatprep.subr.mxu0 0.0
    %198 = vmatpush1.msra.mxu0 0.0
    %199 = vmatprep.subr.mxu0 0.0
    %200 = vmatpush1.msra.mxu0 0.0
    %201 = vmatprep.subr.mxu0 0.0
    %202 = vmatpush1.msra.mxu0 0.0
    %203 = vmatprep.subr.mxu0 0.0
    %204 = vmatpush1.msra.mxu0 0.0
    %205 = vmatprep.subr.mxu0 0.0
    %206 = vmatpush1.msra.mxu0 0.0
    %207 = vmatprep.subr.mxu0 0.0
    %208 = vmatpush1.msra.mxu0 0.0
    %209 = vmatprep.subr.mxu0 0.0
    %210 = vmatpush1.msra.mxu0 0.0
    %211 = vmatprep.subr.mxu0 0.0
    %212 = vmatpush1.msra.mxu0 0.0
    %213 = vmatprep.subr.mxu0 0.0
    %214 = vmatpush1.msra.mxu0 0.0
    %215 = vmatprep.subr.mxu0 %v135
    %216 = vmatpush1.msra.mxu0 %v134
    %217 = vmatprep.subr.mxu0 %v130
    %218 = vmatpush1.msra.mxu0 %v129
    %219 = vmatprep.subr.mxu0 %v125
    %220 = vmatpush1.msra.mxu0 %v124
    %221 = vmatprep.subr.mxu0 %v120
    %222 = vmatpush1.msra.mxu0 %v119
    %223 = vmatprep.subr.mxu0 0.0
    %224 = vmatpush2.msra.mxu0 0.0
    %225 = vmatprep.subr.mxu0 0.0
    %226 = vmatpush2.msra.mxu0 0.0
    %227 = vmatprep.subr.mxu0 0.0
    %228 = vmatpush2.msra.mxu0 0.0
    %229 = vmatprep.subr.mxu0 0.0
    %230 = vmatpush2.msra.mxu0 0.0
    %231 = vmatprep.subr.mxu0 0.0
    %232 = vmatpush2.msra.mxu0 0.0
    %233 = vmatprep.subr.mxu0 0.0
    %234 = vmatpush2.msra.mxu0 0.0
    %235 = vmatprep.subr.mxu0 0.0
    %236 = vmatpush2.msra.mxu0 0.0
    %237 = vmatprep.subr.mxu0 0.0
    %238 = vmatpush2.msra.mxu0 0.0
    %239 = vmatprep.subr.mxu0 0.0
    %240 = vmatpush2.msra.mxu0 0.0
    %241 = vmatprep.subr.mxu0 0.0
    %242 = vmatpush2.msra.mxu0 0.0
    %243 = vmatprep.subr.mxu0 0.0
    %244 = vmatpush2.msra.mxu0 0.0
    %245 = vmatprep.subr.mxu0 0.0
    %246 = vmatpush2.msra.mxu0 0.0
    %247 = vmatprep.subr.mxu0 0.0
    %248 = vmatpush2.msra.mxu0 0.0
    %249 = vmatprep.subr.mxu0 0.0
    %250 = vmatpush2.msra.mxu0 0.0
    %251 = vmatprep.subr.mxu0 0.0
    %252 = vmatpush2.msra.mxu0 0.0
    %253 = vmatprep.subr.mxu0 0.0
    %254 = vmatpush2.msra.mxu0 0.0
    %255 = vmatprep.mubr.f32.mxu0 0.0
    %256 = vmatmul.mubr.f32.gmra.mxu0 %v168
    %v257 = vpop.f32.mrf.mxu0
    %v258 = vadd.f32 %v144, %v257
    %v259 = vpop.f32.mrf.mxu0
    %v260 = vadd.f32 %v148, %v259
    %261 = vmatprep.mubr.f32.mxu0 0.0
    %262 = vmatmul.mubr.f32.gmra.mxu0 %v171
    %v263 = vpop.f32.mrf.mxu0
    %v264 = vadd.f32 %v144, %v263
    %v265 = vpop.f32.mrf.mxu0
    %v266 = vadd.f32 %v148, %v265
    %267 = vmatprep.mubr.f32.mxu0 0.0
    %268 = vmatmul.mubr.f32.gmra.mxu0 %v174
    %v269 = vpop.f32.mrf.mxu0
    %v270 = vadd.f32 %v144, %v269
    %v271 = vpop.f32.mrf.mxu0
    %v272 = vadd.f32 %v148, %v271
    %273 = vmatprep.mubr.f32.mxu0 0.0
    %274 = vmatmul.mubr.f32.gmra.mxu0 %v177
    %v275 = vpop.f32.mrf.mxu0
    %v276 = vadd.f32 %v144, %v275
    %v277 = vpop.f32.mrf.mxu0
    %v278 = vadd.f32 %v148, %v277
    %279 = vmatprep.mubr.f32.mxu0 0.0
    %280 = vmatmul.mubr.f32.gmra.mxu0 %v180
    %v281 = vpop.f32.mrf.mxu0
    %v282 = vadd.f32 %v144, %v281
    %v283 = vpop.f32.mrf.mxu0
    %v284 = vadd.f32 %v148, %v283
    %285 = vmatprep.mubr.f32.mxu0 0.0
    %286 = vmatmul.mubr.f32.gmra.mxu0 %v183
    %v287 = vpop.f32.mrf.mxu0
    %v288 = vadd.f32 %v144, %v287
    %v289 = vpop.f32.mrf.mxu0
    %v290 = vadd.f32 %v148, %v289
    %291 = vmatprep.mubr.f32.mxu0 0.0
    %292 = vmatmul.mubr.f32.gmra.mxu0 %v186
    %v293 = vpop.f32.mrf.mxu0
    %v294 = vadd.f32 %v144, %v293
    %v295 = vpop.f32.mrf.mxu0
    %v296 = vadd.f32 %v148, %v295
    %297 = vmatprep.mubr.f32.mxu0 0.0
    %298 = vmatmul.mubr.f32.gmra.mxu0 %v189
    %v299 = vpop.f32.mrf.mxu0
    %v300 = vadd.f32 %v144, %v299
    %v301 = vpop.f32.mrf.mxu0
    %v302 = vadd.f32 %v148, %v301
    %303 = vdwg.mxu0
    %304 = vmatprep.subr.mxu0 0.0
    %305 = vmatpush1.msra.mxu0 0.0
    %306 = vmatprep.subr.mxu0 0.0
    %307 = vmatpush1.msra.mxu0 0.0
    %308 = vmatprep.subr.mxu0 0.0
    %309 = vmatpush1.msra.mxu0 0.0
    %310 = vmatprep.subr.mxu0 0.0
    %311 = vmatpush1.msra.mxu0 0.0
    %312 = vmatprep.subr.mxu0 0.0
    %313 = vmatpush1.msra.mxu0 0.0
    %314 = vmatprep.subr.mxu0 0.0
    %315 = vmatpush1.msra.mxu0 0.0
    %316 = vmatprep.subr.mxu0 0.0
    %317 = vmatpush1.msra.mxu0 0.0
    %318 = vmatprep.subr.mxu0 0.0
    %319 = vmatpush1.msra.mxu0 0.0
    %320 = vmatprep.subr.mxu0 0.0
    %321 = vmatpush1.msra.mxu0 0.0
    %322 = vmatprep.subr.mxu0 0.0
    %323 = vmatpush1.msra.mxu0 0.0
    %324 = vmatprep.subr.mxu0 0.0
    %325 = vmatpush1.msra.mxu0 0.0
    %326 = vmatprep.subr.mxu0 0.0
    %327 = vmatpush1.msra.mxu0 0.0
    %328 = vmatprep.subr.mxu0 %v137
    %329 = vmatpush1.msra.mxu0 %v136
    %330 = vmatprep.subr.mxu0 %v132
    %331 = vmatpush1.msra.mxu0 %v131
    %332 = vmatprep.subr.mxu0 %v127
    %333 = vmatpush1.msra.mxu0 %v126
    %334 = vmatprep.subr.mxu0 %v122
    %335 = vmatpush1.msra.mxu0 %v121
    %336 = vmatprep.subr.mxu0 0.0
    %337 = vmatpush2.msra.mxu0 0.0
    %338 = vmatprep.subr.mxu0 0.0
    %339 = vmatpush2.msra.mxu0 0.0
    %340 = vmatprep.subr.mxu0 0.0
    %341 = vmatpush2.msra.mxu0 0.0
    %342 = vmatprep.subr.mxu0 0.0
    %343 = vmatpush2.msra.mxu0 0.0
    %344 = vmatprep.subr.mxu0 0.0
    %345 = vmatpush2.msra.mxu0 0.0
    %346 = vmatprep.subr.mxu0 0.0
    %347 = vmatpush2.msra.mxu0 0.0
    %348 = vmatprep.subr.mxu0 0.0
    %349 = vmatpush2.msra.mxu0 0.0
    %350 = vmatprep.subr.mxu0 0.0
    %351 = vmatpush2.msra.mxu0 0.0
    %352 = vmatprep.subr.mxu0 0.0
    %353 = vmatpush2.msra.mxu0 0.0
    %354 = vmatprep.subr.mxu0 0.0
    %355 = vmatpush2.msra.mxu0 0.0
    %356 = vmatprep.subr.mxu0 0.0
    %357 = vmatpush2.msra.mxu0 0.0
    %358 = vmatprep.subr.mxu0 0.0
    %359 = vmatpush2.msra.mxu0 0.0
    %360 = vmatprep.subr.mxu0 0.0
    %361 = vmatpush2.msra.mxu0 0.0
    %362 = vmatprep.subr.mxu0 0.0
    %363 = vmatpush2.msra.mxu0 0.0
    %364 = vmatprep.subr.mxu0 0.0
    %365 = vmatpush2.msra.mxu0 0.0
    %366 = vmatprep.subr.mxu0 0.0
    %367 = vmatpush2.msra.mxu0 0.0
    %368 = vmatprep.mubr.f32.mxu0 0.0
    %369 = vmatmul.mubr.f32.gmra.mxu0 %v168
    %v370 = vpop.f32.mrf.mxu0
    %v371 = vadd.f32 %v152, %v370
    %v372 = vpop.f32.mrf.mxu0
    %v373 = vadd.f32 %v156, %v372
    %374 = vmatprep.mubr.f32.mxu0 0.0
    %375 = vmatmul.mubr.f32.gmra.mxu0 %v171
    %v376 = vpop.f32.mrf.mxu0
    %v377 = vadd.f32 %v152, %v376
    %v378 = vpop.f32.mrf.mxu0
    %v379 = vadd.f32 %v156, %v378
    %380 = vmatprep.mubr.f32.mxu0 0.0
    %381 = vmatmul.mubr.f32.gmra.mxu0 %v174
    %v382 = vpop.f32.mrf.mxu0
    %v383 = vadd.f32 %v152, %v382
    %v384 = vpop.f32.mrf.mxu0
    %v385 = vadd.f32 %v156, %v384
    %386 = vmatprep.mubr.f32.mxu0 0.0
    %387 = vmatmul.mubr.f32.gmra.mxu0 %v177
    %v388 = vpop.f32.mrf.mxu0
    %v389 = vadd.f32 %v152, %v388
    %v390 = vpop.f32.mrf.mxu0
    %v391 = vadd.f32 %v156, %v390
    %392 = vmatprep.mubr.f32.mxu0 0.0
    %393 = vmatmul.mubr.f32.gmra.mxu0 %v180
    %v394 = vpop.f32.mrf.mxu0
    %v395 = vadd.f32 %v152, %v394
    %v396 = vpop.f32.mrf.mxu0
    %v397 = vadd.f32 %v156, %v396
    %398 = vmatprep.mubr.f32.mxu0 0.0
    %399 = vmatmul.mubr.f32.gmra.mxu0 %v183
    %v400 = vpop.f32.mrf.mxu0
    %v401 = vadd.f32 %v152, %v400
    %v402 = vpop.f32.mrf.mxu0
    %v403 = vadd.f32 %v156, %v402
    %404 = vmatprep.mubr.f32.mxu0 0.0
    %405 = vmatmul.mubr.f32.gmra.mxu0 %v186
    %v406 = vpop.f32.mrf.mxu0
    %v407 = vadd.f32 %v152, %v406
    %v408 = vpop.f32.mrf.mxu0
    %v409 = vadd.f32 %v156, %v408
    %410 = vmatprep.mubr.f32.mxu0 0.0
    %411 = vmatmul.mubr.f32.gmra.mxu0 %v189
    %v412 = vpop.f32.mrf.mxu0
    %v413 = vadd.f32 %v152, %v412
    %v414 = vpop.f32.mrf.mxu0
    %v415 = vadd.f32 %v156, %v414
    %416 = vdwg.mxu0
    %417 = vmatprep.subr.mxu0 0.0
    %418 = vmatpush1.msra.mxu0 0.0
    %419 = vmatprep.subr.mxu0 0.0
    %420 = vmatpush1.msra.mxu0 0.0
    %421 = vmatprep.subr.mxu0 0.0
    %422 = vmatpush1.msra.mxu0 0.0
    %423 = vmatprep.subr.mxu0 0.0
    %424 = vmatpush1.msra.mxu0 0.0
    %425 = vmatprep.subr.mxu0 0.0
    %426 = vmatpush1.msra.mxu0 0.0
    %427 = vmatprep.subr.mxu0 0.0
    %428 = vmatpush1.msra.mxu0 0.0
    %429 = vmatprep.subr.mxu0 0.0
    %430 = vmatpush1.msra.mxu0 0.0
    %431 = vmatprep.subr.mxu0 0.0
    %432 = vmatpush1.msra.mxu0 0.0
    %433 = vmatprep.subr.mxu0 0.0
    %434 = vmatpush1.msra.mxu0 0.0
    %435 = vmatprep.subr.mxu0 0.0
    %436 = vmatpush1.msra.mxu0 0.0
    %437 = vmatprep.subr.mxu0 0.0
    %438 = vmatpush1.msra.mxu0 0.0
    %439 = vmatprep.subr.mxu0 0.0
    %440 = vmatpush1.msra.mxu0 0.0
    %441 = vmatprep.subr.mxu0 0.0
    %442 = vmatpush1.msra.mxu0 %v138
    %443 = vmatprep.subr.mxu0 0.0
    %444 = vmatpush1.msra.mxu0 %v133
    %445 = vmatprep.subr.mxu0 0.0
    %446 = vmatpush1.msra.mxu0 %v128
    %447 = vmatprep.subr.mxu0 0.0
    %448 = vmatpush1.msra.mxu0 %v123
    %449 = vmatprep.subr.mxu0 0.0
    %450 = vmatpush2.msra.mxu0 0.0
    %451 = vmatprep.subr.mxu0 0.0
    %452 = vmatpush2.msra.mxu0 0.0
    %453 = vmatprep.subr.mxu0 0.0
    %454 = vmatpush2.msra.mxu0 0.0
    %455 = vmatprep.subr.mxu0 0.0
    %456 = vmatpush2.msra.mxu0 0.0
    %457 = vmatprep.subr.mxu0 0.0
    %458 = vmatpush2.msra.mxu0 0.0
    %459 = vmatprep.subr.mxu0 0.0
    %460 = vmatpush2.msra.mxu0 0.0
    %461 = vmatprep.subr.mxu0 0.0
    %462 = vmatpush2.msra.mxu0 0.0
    %463 = vmatprep.subr.mxu0 0.0
    %464 = vmatpush2.msra.mxu0 0.0
    %465 = vmatprep.subr.mxu0 0.0
    %466 = vmatpush2.msra.mxu0 0.0
    %467 = vmatprep.subr.mxu0 0.0
    %468 = vmatpush2.msra.mxu0 0.0
    %469 = vmatprep.subr.mxu0 0.0
    %470 = vmatpush2.msra.mxu0 0.0
    %471 = vmatprep.subr.mxu0 0.0
    %472 = vmatpush2.msra.mxu0 0.0
    %473 = vmatprep.subr.mxu0 0.0
    %474 = vmatpush2.msra.mxu0 0.0
    %475 = vmatprep.subr.mxu0 0.0
    %476 = vmatpush2.msra.mxu0 0.0
    %477 = vmatprep.subr.mxu0 0.0
    %478 = vmatpush2.msra.mxu0 0.0
    %479 = vmatprep.subr.mxu0 0.0
    %480 = vmatpush2.msra.mxu0 0.0
    %481 = vmatprep.mubr.f32.mxu0 0.0
    %482 = vmatmul.mubr.f32.gmra.mxu0 %v168
    %v483 = vpop.f32.mrf.mxu0
    %v484 = vadd.f32 %v160, %v483
    %v485 = vpop.f32.mrf.mxu0
    %486 = vmatprep.mubr.f32.mxu0 0.0
    %487 = vmatmul.mubr.f32.gmra.mxu0 %v171
    %v488 = vpop.f32.mrf.mxu0
    %v489 = vadd.f32 %v160, %v488
    %v490 = vpop.f32.mrf.mxu0
    %491 = vmatprep.mubr.f32.mxu0 0.0
    %492 = vmatmul.mubr.f32.gmra.mxu0 %v174
    %v493 = vpop.f32.mrf.mxu0
    %v494 = vadd.f32 %v160, %v493
    %v495 = vpop.f32.mrf.mxu0
    %496 = vmatprep.mubr.f32.mxu0 0.0
    %497 = vmatmul.mubr.f32.gmra.mxu0 %v177
    %v498 = vpop.f32.mrf.mxu0
    %v499 = vadd.f32 %v160, %v498
    %v500 = vpop.f32.mrf.mxu0
    %501 = vmatprep.mubr.f32.mxu0 0.0
    %502 = vmatmul.mubr.f32.gmra.mxu0 %v180
    %v503 = vpop.f32.mrf.mxu0
    %v504 = vadd.f32 %v160, %v503
    %v505 = vpop.f32.mrf.mxu0
    %506 = vmatprep.mubr.f32.mxu0 0.0
    %507 = vmatmul.mubr.f32.gmra.mxu0 %v183
    %v508 = vpop.f32.mrf.mxu0
    %v509 = vadd.f32 %v160, %v508
    %v510 = vpop.f32.mrf.mxu0
    %511 = vmatprep.mubr.f32.mxu0 0.0
    %512 = vmatmul.mubr.f32.gmra.mxu0 %v186
    %v513 = vpop.f32.mrf.mxu0
    %v514 = vadd.f32 %v160, %v513
    %v515 = vpop.f32.mrf.mxu0
    %516 = vmatprep.mubr.f32.mxu0 0.0
    %517 = vmatmul.mubr.f32.gmra.mxu0 %v189
    %v518 = vpop.f32.mrf.mxu0
    %v519 = vadd.f32 %v160, %v518
    %v520 = vpop.f32.mrf.mxu0
    %521 = vdwg.mxu0
    %522 = vst [vmem:[#allocation2] sm:$0xff] %v258
    %523 = vst [vmem:[#allocation2 + $0x8] sm:$0xff] %v260
    %524 = vst [vmem:[#allocation2 + $0x10] sm:$0xff] %v371
    %525 = vst [vmem:[#allocation2 + $0x18] sm:$0xff] %v373
    %526 = vst [vmem:[#allocation2 + $0x20] sm:$0xff] %v264
    %527 = vst [vmem:[#allocation2 + $0x28] sm:$0xff] %v266
    %528 = vst [vmem:[#allocation2 + $0x30] sm:$0xff] %v377
    %529 = vst [vmem:[#allocation2 + $0x38] sm:$0xff] %v379
    %530 = vst [vmem:[#allocation2 + $0x40] sm:$0xff] %v270
    %531 = vst [vmem:[#allocation2 + $0x48] sm:$0xff] %v272
    %532 = vst [vmem:[#allocation2 + $0x50] sm:$0xff] %v383
    %533 = vst [vmem:[#allocation2 + $0x58] sm:$0xff] %v385
    %534 = vst [vmem:[#allocation2 + $0x60] sm:$0xff] %v276
    %535 = vst [vmem:[#allocation2 + $0x68] sm:$0xff] %v278
    %536 = vst [vmem:[#allocation2 + $0x70] sm:$0xff] %v389
    %537 = vst [vmem:[#allocation2 + $0x78] sm:$0xff] %v391
    %538 = vst [vmem:[#allocation2 + $0x80] sm:$0xff] %v282
    %539 = vst [vmem:[#allocation2 + $0x88] sm:$0xff] %v284
    %540 = vst [vmem:[#allocation2 + $0x90] sm:$0xff] %v395
    %541 = vst [vmem:[#allocation2 + $0x98] sm:$0xff] %v397
    %542 = vst [vmem:[#allocation2 + $0xa0] sm:$0xff] %v288
    %543 = vst [vmem:[#allocation2 + $0xa8] sm:$0xff] %v290
    %544 = vst [vmem:[#allocation2 + $0xb0] sm:$0xff] %v401
    %545 = vst [vmem:[#allocation2 + $0xb8] sm:$0xff] %v403
    %546 = vst [vmem:[#allocation2 + $0xc0] sm:$0xff] %v294
    %547 = vst [vmem:[#allocation2 + $0xc8] sm:$0xff] %v296
    %548 = vst [vmem:[#allocation2 + $0xd0] sm:$0xff] %v407
    %549 = vst [vmem:[#allocation2 + $0xd8] sm:$0xff] %v409
    %550 = vst [vmem:[#allocation2 + $0xe0] sm:$0xff] %v300
    %551 = vst [vmem:[#allocation2 + $0xe8] sm:$0xff] %v302
    %552 = vst [vmem:[#allocation2 + $0xf0] sm:$0xff] %v413
    %553 = vst [vmem:[#allocation2 + $0xf8] sm:$0xff] %v415
    %v554 = vmax.f32 %v484, 0.0
    %v555 = vmax.f32 %v489, 0.0
    %v556 = vmax.f32 %v494, 0.0
    %v557 = vmax.f32 %v499, 0.0
    %v558 = vmax.f32 %v504, 0.0
    %v559 = vmax.f32 %v509, 0.0
    %v560 = vmax.f32 %v514, 0.0
    %v561 = vmax.f32 %v519, 0.0
    %v562 = vld [vmem:[#allocation11] sm:$0xff]
    %v563 = vld [vmem:[#allocation11 + $0x8] sm:$0xff]
    %v564 = vld [vmem:[#allocation11 + $0x10] sm:$0xff]
    %v565 = vld [vmem:[#allocation11 + $0x18] sm:$0xff]
    %v566 = vld [vmem:[#allocation11 + $0x20] sm:$0xff]
    %v567 = vld [vmem:[#allocation11 + $0x28] sm:$0xff]
    %v568 = vld [vmem:[#allocation11 + $0x30] sm:$0xff]
    %v569 = vld [vmem:[#allocation11 + $0x38] sm:$0xff]
    %v570 = vld [vmem:[#allocation11 + $0x40] sm:$0xff]
    %v571 = vld [vmem:[#allocation11 + $0x48] sm:$0xff]
    %v572 = vld [vmem:[#allocation11 + $0x50] sm:$0xff]
    %v573 = vld [vmem:[#allocation11 + $0x58] sm:$0xff]
    %v574 = vld [vmem:[#allocation11 + $0x60] sm:$0xff]
    %v575 = vld [vmem:[#allocation11 + $0x68] sm:$0xff]
    %v576 = vld [vmem:[#allocation11 + $0x70] sm:$0xff]
    %v577 = vld [vmem:[#allocation11 + $0x78] sm:$0xff]
    %v578 = vld [vmem:[#allocation11 + $0x80] sm:$0xff]
    %v579 = vld [vmem:[#allocation11 + $0x88] sm:$0xff]
    %v580 = vld [vmem:[#allocation11 + $0x90] sm:$0xff]
    %v581 = vld [vmem:[#allocation11 + $0x98] sm:$0xff]
    %v582 = vld [vmem:[#allocation11 + $0xa0] sm:$0xff]
    %v583 = vld [vmem:[#allocation11 + $0xa8] sm:$0xff]
    %v584 = vld [vmem:[#allocation11 + $0xb0] sm:$0xff]
    %v585 = vld [vmem:[#allocation11 + $0xb8] sm:$0xff]
    %v586 = vld [vmem:[#allocation11 + $0xc0] sm:$0xff]
    %v587 = vld [vmem:[#allocation11 + $0xc8] sm:$0xff]
    %v588 = vld [vmem:[#allocation11 + $0xd0] sm:$0xff]
    %v589 = vld [vmem:[#allocation11 + $0xd8] sm:$0xff]
    %v590 = vld [vmem:[#allocation11 + $0xe0] sm:$0xff]
    %v591 = vld [vmem:[#allocation11 + $0xe8] sm:$0xff]
    %v592 = vld [vmem:[#allocation11 + $0xf0] sm:$0xff]
    %v593 = vld [vmem:[#allocation11 + $0xf8] sm:$0xff]
    %v594 = vld [vmem:[#allocation11 + $0x100] sm:$0xff]
    %v595 = vld [vmem:[#allocation11 + $0x108] sm:$0xff]
    %v596 = vld [vmem:[#allocation11 + $0x110] sm:$0xff]
    %v597 = vld [vmem:[#allocation11 + $0x118] sm:$0xff]
    %v598 = vld [vmem:[#allocation11 + $0x120] sm:$0xff]
    %v599 = vld [vmem:[#allocation11 + $0x128] sm:$0xff]
    %v600 = vld [vmem:[#allocation11 + $0x130] sm:$0xff]
    %v601 = vld [vmem:[#allocation11 + $0x138] sm:$0xff]
    %v602 = vld [vmem:[#allocation11 + $0x140] sm:$0xff]
    %v603 = vld [vmem:[#allocation11 + $0x148] sm:$0xff]
    %v604 = vld [vmem:[#allocation11 + $0x150] sm:$0xff]
    %v605 = vld [vmem:[#allocation11 + $0x158] sm:$0xff]
    %v606 = vld [vmem:[#allocation11 + $0x160] sm:$0xff]
    %v607 = vld [vmem:[#allocation11 + $0x168] sm:$0xff]
    %v608 = vld [vmem:[#allocation11 + $0x170] sm:$0xff]
    %v609 = vld [vmem:[#allocation11 + $0x178] sm:$0xff]
    %v610 = vld [vmem:[%s5] sm:$0x7]
    %v612 = vlaneseq
    %v613 = vshrl.u32 %v612, 7
    %v614 = vsub.s32 0, %v613
    %v615 = vrot.slane %v610, %v614
    %v616 = vlaneseq
    %v617 = vshrl.u32 %v616, 7
    %v618 = vsub.s32 1, %v617
    %v619 = vrot.slane %v610, %v618
    %v620 = vlaneseq
    %v621 = vshrl.u32 %v620, 7
    %v622 = vsub.s32 2, %v621
    %v623 = vrot.slane %v610, %v622
    %627 = vmatprep.subr.mxu0 %v608
    %628 = vmatpush1.msra.mxu0 %v607
    %629 = vmatprep.subr.mxu0 %v605
    %630 = vmatpush1.msra.mxu0 %v604
    %631 = vmatprep.subr.mxu0 %v602
    %632 = vmatpush1.msra.mxu0 %v601
    %633 = vmatprep.subr.mxu0 %v599
    %634 = vmatpush1.msra.mxu0 %v598
    %635 = vmatprep.subr.mxu0 %v596
    %636 = vmatpush1.msra.mxu0 %v595
    %637 = vmatprep.subr.mxu0 %v593
    %638 = vmatpush1.msra.mxu0 %v592
    %639 = vmatprep.subr.mxu0 %v590
    %640 = vmatpush1.msra.mxu0 %v589
    %641 = vmatprep.subr.mxu0 %v587
    %642 = vmatpush1.msra.mxu0 %v586
    %643 = vmatprep.subr.mxu0 %v584
    %644 = vmatpush1.msra.mxu0 %v583
    %645 = vmatprep.subr.mxu0 %v581
    %646 = vmatpush1.msra.mxu0 %v580
    %647 = vmatprep.subr.mxu0 %v578
    %648 = vmatpush1.msra.mxu0 %v577
    %649 = vmatprep.subr.mxu0 %v575
    %650 = vmatpush1.msra.mxu0 %v574
    %651 = vmatprep.subr.mxu0 %v572
    %652 = vmatpush1.msra.mxu0 %v571
    %653 = vmatprep.subr.mxu0 %v569
    %654 = vmatpush1.msra.mxu0 %v568
    %655 = vmatprep.subr.mxu0 %v566
    %656 = vmatpush1.msra.mxu0 %v565
    %657 = vmatprep.subr.mxu0 %v563
    %658 = vmatpush1.msra.mxu0 %v562
    %659 = vmatprep.subr.mxu0 0.0
    %660 = vmatpush2.msra.mxu0 0.0
    %661 = vmatprep.subr.mxu0 0.0
    %662 = vmatpush2.msra.mxu0 0.0
    %663 = vmatprep.subr.mxu0 0.0
    %664 = vmatpush2.msra.mxu0 0.0
    %665 = vmatprep.subr.mxu0 0.0
    %666 = vmatpush2.msra.mxu0 0.0
    %667 = vmatprep.subr.mxu0 0.0
    %668 = vmatpush2.msra.mxu0 0.0
    %669 = vmatprep.subr.mxu0 0.0
    %670 = vmatpush2.msra.mxu0 0.0
    %671 = vmatprep.subr.mxu0 0.0
    %672 = vmatpush2.msra.mxu0 0.0
    %673 = vmatprep.subr.mxu0 0.0
    %674 = vmatpush2.msra.mxu0 0.0
    %675 = vmatprep.subr.mxu0 0.0
    %676 = vmatpush2.msra.mxu0 0.0
    %677 = vmatprep.subr.mxu0 0.0
    %678 = vmatpush2.msra.mxu0 0.0
    %679 = vmatprep.subr.mxu0 0.0
    %680 = vmatpush2.msra.mxu0 0.0
    %681 = vmatprep.subr.mxu0 0.0
    %682 = vmatpush2.msra.mxu0 0.0
    %683 = vmatprep.subr.mxu0 0.0
    %684 = vmatpush2.msra.mxu0 0.0
    %685 = vmatprep.subr.mxu0 0.0
    %686 = vmatpush2.msra.mxu0 0.0
    %687 = vmatprep.subr.mxu0 0.0
    %688 = vmatpush2.msra.mxu0 0.0
    %689 = vmatprep.subr.mxu0 0.0
    %690 = vmatpush2.msra.mxu0 0.0
    %691 = vmatprep.mubr.f32.mxu0 0.0
    %692 = vmatmul.mubr.f32.gmra.mxu0 %v554
    %v693 = vpop.f32.mrf.mxu0
    %v694 = vadd.f32 %v615, %v693
    %v695 = vpop.f32.mrf.mxu0
    %v696 = vadd.f32 %v619, %v695
    %697 = vmatprep.mubr.f32.mxu0 0.0
    %698 = vmatmul.mubr.f32.gmra.mxu0 %v555
    %v699 = vpop.f32.mrf.mxu0
    %v700 = vadd.f32 %v615, %v699
    %v701 = vpop.f32.mrf.mxu0
    %v702 = vadd.f32 %v619, %v701
    %703 = vmatprep.mubr.f32.mxu0 0.0
    %704 = vmatmul.mubr.f32.gmra.mxu0 %v556
    %v705 = vpop.f32.mrf.mxu0
    %v706 = vadd.f32 %v615, %v705
    %v707 = vpop.f32.mrf.mxu0
    %v708 = vadd.f32 %v619, %v707
    %709 = vmatprep.mubr.f32.mxu0 0.0
    %710 = vmatmul.mubr.f32.gmra.mxu0 %v557
    %v711 = vpop.f32.mrf.mxu0
    %v712 = vadd.f32 %v615, %v711
    %v713 = vpop.f32.mrf.mxu0
    %v714 = vadd.f32 %v619, %v713
    %715 = vmatprep.mubr.f32.mxu0 0.0
    %716 = vmatmul.mubr.f32.gmra.mxu0 %v558
    %v717 = vpop.f32.mrf.mxu0
    %v718 = vadd.f32 %v615, %v717
    %v719 = vpop.f32.mrf.mxu0
    %v720 = vadd.f32 %v619, %v719
    %721 = vmatprep.mubr.f32.mxu0 0.0
    %722 = vmatmul.mubr.f32.gmra.mxu0 %v559
    %v723 = vpop.f32.mrf.mxu0
    %v724 = vadd.f32 %v615, %v723
    %v725 = vpop.f32.mrf.mxu0
    %v726 = vadd.f32 %v619, %v725
    %727 = vmatprep.mubr.f32.mxu0 0.0
    %728 = vmatmul.mubr.f32.gmra.mxu0 %v560
    %v729 = vpop.f32.mrf.mxu0
    %v730 = vadd.f32 %v615, %v729
    %v731 = vpop.f32.mrf.mxu0
    %v732 = vadd.f32 %v619, %v731
    %733 = vmatprep.mubr.f32.mxu0 0.0
    %734 = vmatmul.mubr.f32.gmra.mxu0 %v561
    %v735 = vpop.f32.mrf.mxu0
    %v736 = vadd.f32 %v615, %v735
    %v737 = vpop.f32.mrf.mxu0
    %v738 = vadd.f32 %v619, %v737
    %739 = vdwg.mxu0
    %740 = vmatprep.subr.mxu0 0.0
    %741 = vmatpush1.msra.mxu0 %v609
    %742 = vmatprep.subr.mxu0 0.0
    %743 = vmatpush1.msra.mxu0 %v606
    %744 = vmatprep.subr.mxu0 0.0
    %745 = vmatpush1.msra.mxu0 %v603
    %746 = vmatprep.subr.mxu0 0.0
    %747 = vmatpush1.msra.mxu0 %v600
    %748 = vmatprep.subr.mxu0 0.0
    %749 = vmatpush1.msra.mxu0 %v597
    %750 = vmatprep.subr.mxu0 0.0
    %751 = vmatpush1.msra.mxu0 %v594
    %752 = vmatprep.subr.mxu0 0.0
    %753 = vmatpush1.msra.mxu0 %v591
    %754 = vmatprep.subr.mxu0 0.0
    %755 = vmatpush1.msra.mxu0 %v588
    %756 = vmatprep.subr.mxu0 0.0
    %757 = vmatpush1.msra.mxu0 %v585
    %758 = vmatprep.subr.mxu0 0.0
    %759 = vmatpush1.msra.mxu0 %v582
    %760 = vmatprep.subr.mxu0 0.0
    %761 = vmatpush1.msra.mxu0 %v579
    %762 = vmatprep.subr.mxu0 0.0
    %763 = vmatpush1.msra.mxu0 %v576
    %764 = vmatprep.subr.mxu0 0.0
    %765 = vmatpush1.msra.mxu0 %v573
    %766 = vmatprep.subr.mxu0 0.0
    %767 = vmatpush1.msra.mxu0 %v570
    %768 = vmatprep.subr.mxu0 0.0
    %769 = vmatpush1.msra.mxu0 %v567
    %770 = vmatprep.subr.mxu0 0.0
    %771 = vmatpush1.msra.mxu0 %v564
    %772 = vmatprep.subr.mxu0 0.0
    %773 = vmatpush2.msra.mxu0 0.0
    %774 = vmatprep.subr.mxu0 0.0
    %775 = vmatpush2.msra.mxu0 0.0
    %776 = vmatprep.subr.mxu0 0.0
    %777 = vmatpush2.msra.mxu0 0.0
    %778 = vmatprep.subr.mxu0 0.0
    %779 = vmatpush2.msra.mxu0 0.0
    %780 = vmatprep.subr.mxu0 0.0
    %781 = vmatpush2.msra.mxu0 0.0
    %782 = vmatprep.subr.mxu0 0.0
    %783 = vmatpush2.msra.mxu0 0.0
    %784 = vmatprep.subr.mxu0 0.0
    %785 = vmatpush2.msra.mxu0 0.0
    %786 = vmatprep.subr.mxu0 0.0
    %787 = vmatpush2.msra.mxu0 0.0
    %788 = vmatprep.subr.mxu0 0.0
    %789 = vmatpush2.msra.mxu0 0.0
    %790 = vmatprep.subr.mxu0 0.0
    %791 = vmatpush2.msra.mxu0 0.0
    %792 = vmatprep.subr.mxu0 0.0
    %793 = vmatpush2.msra.mxu0 0.0
    %794 = vmatprep.subr.mxu0 0.0
    %795 = vmatpush2.msra.mxu0 0.0
    %796 = vmatprep.subr.mxu0 0.0
    %797 = vmatpush2.msra.mxu0 0.0
    %798 = vmatprep.subr.mxu0 0.0
    %799 = vmatpush2.msra.mxu0 0.0
    %800 = vmatprep.subr.mxu0 0.0
    %801 = vmatpush2.msra.mxu0 0.0
    %802 = vmatprep.subr.mxu0 0.0
    %803 = vmatpush2.msra.mxu0 0.0
    %804 = vmatprep.mubr.f32.mxu0 0.0
    %805 = vmatmul.mubr.f32.gmra.mxu0 %v554
    %v806 = vpop.f32.mrf.mxu0
    %v807 = vadd.f32 %v623, %v806
    %v808 = vpop.f32.mrf.mxu0
    %809 = vmatprep.mubr.f32.mxu0 0.0
    %810 = vmatmul.mubr.f32.gmra.mxu0 %v555
    %v811 = vpop.f32.mrf.mxu0
    %v812 = vadd.f32 %v623, %v811
    %v813 = vpop.f32.mrf.mxu0
    %814 = vmatprep.mubr.f32.mxu0 0.0
    %815 = vmatmul.mubr.f32.gmra.mxu0 %v556
    %v816 = vpop.f32.mrf.mxu0
    %v817 = vadd.f32 %v623, %v816
    %v818 = vpop.f32.mrf.mxu0
    %819 = vmatprep.mubr.f32.mxu0 0.0
    %820 = vmatmul.mubr.f32.gmra.mxu0 %v557
    %v821 = vpop.f32.mrf.mxu0
    %v822 = vadd.f32 %v623, %v821
    %v823 = vpop.f32.mrf.mxu0
    %824 = vmatprep.mubr.f32.mxu0 0.0
    %825 = vmatmul.mubr.f32.gmra.mxu0 %v558
    %v826 = vpop.f32.mrf.mxu0
    %v827 = vadd.f32 %v623, %v826
    %v828 = vpop.f32.mrf.mxu0
    %829 = vmatprep.mubr.f32.mxu0 0.0
    %830 = vmatmul.mubr.f32.gmra.mxu0 %v559
    %v831 = vpop.f32.mrf.mxu0
    %v832 = vadd.f32 %v623, %v831
    %v833 = vpop.f32.mrf.mxu0
    %834 = vmatprep.mubr.f32.mxu0 0.0
    %835 = vmatmul.mubr.f32.gmra.mxu0 %v560
    %v836 = vpop.f32.mrf.mxu0
    %v837 = vadd.f32 %v623, %v836
    %v838 = vpop.f32.mrf.mxu0
    %839 = vmatprep.mubr.f32.mxu0 0.0
    %840 = vmatmul.mubr.f32.gmra.mxu0 %v561
    %v841 = vpop.f32.mrf.mxu0
    %v842 = vadd.f32 %v623, %v841
    %v843 = vpop.f32.mrf.mxu0
    %844 = vdwg.mxu0
    %845 = vst [vmem:[#allocation3] sm:$0xff] %v694
    %846 = vst [vmem:[#allocation3 + $0x8] sm:$0xff] %v696
    %847 = vst [vmem:[#allocation3 + $0x10] sm:$0xff] %v807
    %848 = vst [vmem:[#allocation3 + $0x18] sm:$0xff] %v700
    %849 = vst [vmem:[#allocation3 + $0x20] sm:$0xff] %v702
    %850 = vst [vmem:[#allocation3 + $0x28] sm:$0xff] %v812
    %851 = vst [vmem:[#allocation3 + $0x30] sm:$0xff] %v706
    %852 = vst [vmem:[#allocation3 + $0x38] sm:$0xff] %v708
    %853 = vst [vmem:[#allocation3 + $0x40] sm:$0xff] %v817
    %854 = vst [vmem:[#allocation3 + $0x48] sm:$0xff] %v712
    %855 = vst [vmem:[#allocation3 + $0x50] sm:$0xff] %v714
    %856 = vst [vmem:[#allocation3 + $0x58] sm:$0xff] %v822
    %857 = vst [vmem:[#allocation3 + $0x60] sm:$0xff] %v718
    %858 = vst [vmem:[#allocation3 + $0x68] sm:$0xff] %v720
    %859 = vst [vmem:[#allocation3 + $0x70] sm:$0xff] %v827
    %860 = vst [vmem:[#allocation3 + $0x78] sm:$0xff] %v724
    %861 = vst [vmem:[#allocation3 + $0x80] sm:$0xff] %v726
    %862 = vst [vmem:[#allocation3 + $0x88] sm:$0xff] %v832
    %863 = vst [vmem:[#allocation3 + $0x90] sm:$0xff] %v730
    %864 = vst [vmem:[#allocation3 + $0x98] sm:$0xff] %v732
    %865 = vst [vmem:[#allocation3 + $0xa0] sm:$0xff] %v837
    %866 = vst [vmem:[#allocation3 + $0xa8] sm:$0xff] %v736
    %867 = vst [vmem:[#allocation3 + $0xb0] sm:$0xff] %v738
    %868 = vst [vmem:[#allocation3 + $0xb8] sm:$0xff] %v842
    %v869 = vld [vmem:[#allocation9] sm:$0xff]
    %v870 = vld [vmem:[#allocation9 + $0x8] sm:$0xff]
    %v871 = vld [vmem:[#allocation9 + $0x10] sm:$0xff]
    %v872 = vld [vmem:[#allocation9 + $0x18] sm:$0xff]
    %v873 = vld [vmem:[#allocation9 + $0x20] sm:$0xff]
    %v874 = vld [vmem:[#allocation9 + $0x28] sm:$0xff]
    %v875 = vld [vmem:[#allocation9 + $0x30] sm:$0xff]
    %v876 = vld [vmem:[#allocation9 + $0x38] sm:$0xff]
    %v877 = vld [vmem:[#allocation9 + $0x40] sm:$0xff]
    %v878 = vld [vmem:[#allocation9 + $0x48] sm:$0xff]
    %v879 = vld [vmem:[#allocation9 + $0x50] sm:$0xff]
    %v880 = vld [vmem:[#allocation9 + $0x58] sm:$0xff]
    %v881 = vld [vmem:[#allocation9 + $0x60] sm:$0xff]
    %v882 = vld [vmem:[#allocation9 + $0x68] sm:$0xff]
    %v883 = vld [vmem:[#allocation9 + $0x70] sm:$0xff]
    %v884 = vld [vmem:[#allocation9 + $0x78] sm:$0xff]
    %v885 = vld [vmem:[#allocation9 + $0x80] sm:$0xff]
    %v886 = vld [vmem:[#allocation9 + $0x88] sm:$0xff]
    %v887 = vld [vmem:[#allocation9 + $0x90] sm:$0xff]
    %v888 = vld [vmem:[#allocation9 + $0x98] sm:$0xff]
    %v889 = vld [vmem:[#allocation9 + $0xa0] sm:$0xff]
    %v890 = vld [vmem:[#allocation9 + $0xa8] sm:$0xff]
    %v891 = vld [vmem:[#allocation9 + $0xb0] sm:$0xff]
    %v892 = vld [vmem:[#allocation9 + $0xb8] sm:$0xff]
    %v893 = vld [vmem:[#allocation9 + $0xc0] sm:$0xff]
    %v894 = vld [vmem:[#allocation9 + $0xc8] sm:$0xff]
    %v895 = vld [vmem:[#allocation9 + $0xd0] sm:$0xff]
    %v896 = vld [vmem:[#allocation9 + $0xd8] sm:$0xff]
    %v897 = vld [vmem:[#allocation9 + $0xe0] sm:$0xff]
    %v898 = vld [vmem:[#allocation9 + $0xe8] sm:$0xff]
    %v899 = vld [vmem:[#allocation9 + $0xf0] sm:$0xff]
    %v900 = vld [vmem:[#allocation9 + $0xf8] sm:$0xff]
    %v901 = vld [vmem:[#allocation9 + $0x100] sm:$0xff]
    %v902 = vld [vmem:[#allocation9 + $0x108] sm:$0xff]
    %v903 = vld [vmem:[#allocation9 + $0x110] sm:$0xff]
    %v904 = vld [vmem:[#allocation9 + $0x118] sm:$0xff]
    %v905 = vld [vmem:[#allocation9 + $0x120] sm:$0xff]
    %v906 = vld [vmem:[#allocation9 + $0x128] sm:$0xff]
    %v907 = vld [vmem:[#allocation9 + $0x130] sm:$0xff]
    %v908 = vld [vmem:[#allocation9 + $0x138] sm:$0xff]
    %v909 = vld [vmem:[#allocation9 + $0x140] sm:$0xff]
    %v910 = vld [vmem:[#allocation9 + $0x148] sm:$0xff]
    %v911 = vld [vmem:[#allocation9 + $0x150] sm:$0xff]
    %v912 = vld [vmem:[#allocation9 + $0x158] sm:$0xff]
    %v913 = vld [vmem:[#allocation9 + $0x160] sm:$0xff]
    %v914 = vld [vmem:[#allocation9 + $0x168] sm:$0xff]
    %v915 = vld [vmem:[#allocation9 + $0x170] sm:$0xff]
    %v916 = vld [vmem:[#allocation9 + $0x178] sm:$0xff]
    %v917 = vld [vmem:[#allocation9 + $0x180] sm:$0xff]
    %v918 = vld [vmem:[#allocation9 + $0x188] sm:$0xff]
    %v919 = vld [vmem:[#allocation9 + $0x190] sm:$0xff]
    %v920 = vld [vmem:[#allocation9 + $0x198] sm:$0xff]
    %v921 = vld [vmem:[#allocation9 + $0x1a0] sm:$0xff]
    %v922 = vld [vmem:[#allocation9 + $0x1a8] sm:$0xff]
    %v923 = vld [vmem:[#allocation9 + $0x1b0] sm:$0xff]
    %v924 = vld [vmem:[#allocation9 + $0x1b8] sm:$0xff]
    %v925 = vld [vmem:[#allocation9 + $0x1c0] sm:$0xff]
    %v926 = vld [vmem:[#allocation9 + $0x1c8] sm:$0xff]
    %v927 = vld [vmem:[#allocation9 + $0x1d0] sm:$0xff]
    %v928 = vld [vmem:[#allocation9 + $0x1d8] sm:$0xff]
    %v929 = vld [vmem:[#allocation9 + $0x1e0] sm:$0xff]
    %v930 = vld [vmem:[#allocation9 + $0x1e8] sm:$0xff]
    %v931 = vld [vmem:[#allocation9 + $0x1f0] sm:$0xff]
    %v932 = vld [vmem:[#allocation9 + $0x1f8] sm:$0xff]
    %v933 = vld [vmem:[#allocation12] sm:$0xff]
    %v934 = vld [vmem:[#allocation12 + $0x8] sm:$0xff]
    %v935 = vld [vmem:[#allocation12 + $0x10] sm:$0xff]
    %v936 = vld [vmem:[#allocation12 + $0x18] sm:$0xff]
    %v937 = vld [vmem:[#allocation12 + $0x20] sm:$0xff]
    %v938 = vld [vmem:[#allocation12 + $0x28] sm:$0xff]
    %v939 = vld [vmem:[#allocation12 + $0x30] sm:$0xff]
    %v940 = vld [vmem:[#allocation12 + $0x38] sm:$0xff]
    %v941 = vld [vmem:[#allocation12 + $0x40] sm:$0xff]
    %v942 = vld [vmem:[#allocation12 + $0x48] sm:$0xff]
    %v943 = vld [vmem:[#allocation12 + $0x50] sm:$0xff]
    %v944 = vld [vmem:[#allocation12 + $0x58] sm:$0xff]
    %v945 = vld [vmem:[#allocation12 + $0x60] sm:$0xff]
    %v946 = vld [vmem:[#allocation12 + $0x68] sm:$0xff]
    %v947 = vld [vmem:[#allocation12 + $0x70] sm:$0xff]
    %v948 = vld [vmem:[#allocation12 + $0x78] sm:$0xff]
    %v949 = vld [vmem:[#allocation12 + $0x80] sm:$0xff]
    %v950 = vld [vmem:[#allocation12 + $0x88] sm:$0xff]
    %v951 = vld [vmem:[#allocation12 + $0x90] sm:$0xff]
    %v952 = vld [vmem:[#allocation12 + $0x98] sm:$0xff]
    %v953 = vld [vmem:[#allocation12 + $0xa0] sm:$0xff]
    %v954 = vld [vmem:[#allocation12 + $0xa8] sm:$0xff]
    %v955 = vld [vmem:[#allocation12 + $0xb0] sm:$0xff]
    %v956 = vld [vmem:[#allocation12 + $0xb8] sm:$0xff]
    %v957 = vld [vmem:[#allocation12 + $0xc0] sm:$0xff]
    %v958 = vld [vmem:[#allocation12 + $0xc8] sm:$0xff]
    %v959 = vld [vmem:[#allocation12 + $0xd0] sm:$0xff]
    %v960 = vld [vmem:[#allocation12 + $0xd8] sm:$0xff]
    %v961 = vld [vmem:[#allocation12 + $0xe0] sm:$0xff]
    %v962 = vld [vmem:[#allocation12 + $0xe8] sm:$0xff]
    %v963 = vld [vmem:[#allocation12 + $0xf0] sm:$0xff]
    %v964 = vld [vmem:[#allocation12 + $0xf8] sm:$0xff]
    %v965 = vld [vmem:[#allocation12 + $0x100] sm:$0xff]
    %v966 = vld [vmem:[#allocation12 + $0x108] sm:$0xff]
    %v967 = vld [vmem:[#allocation12 + $0x110] sm:$0xff]
    %v968 = vld [vmem:[#allocation12 + $0x118] sm:$0xff]
    %v969 = vld [vmem:[#allocation12 + $0x120] sm:$0xff]
    %v970 = vld [vmem:[#allocation12 + $0x128] sm:$0xff]
    %v971 = vld [vmem:[#allocation12 + $0x130] sm:$0xff]
    %v972 = vld [vmem:[#allocation12 + $0x138] sm:$0xff]
    %v973 = vld [vmem:[#allocation12 + $0x140] sm:$0xff]
    %v974 = vld [vmem:[#allocation12 + $0x148] sm:$0xff]
    %v975 = vld [vmem:[#allocation12 + $0x150] sm:$0xff]
    %v976 = vld [vmem:[#allocation12 + $0x158] sm:$0xff]
    %v977 = vld [vmem:[#allocation12 + $0x160] sm:$0xff]
    %v978 = vld [vmem:[#allocation12 + $0x168] sm:$0xff]
    %v979 = vld [vmem:[#allocation12 + $0x170] sm:$0xff]
    %v980 = vld [vmem:[#allocation12 + $0x178] sm:$0xff]
    %v981 = vld [vmem:[%s7] sm:$0x7]
    %s982 = smul.u32 0, 4
    %s983 = smul.addr %s982, 8
    %s984 = scalar_lea.vmem [#allocation2], %s983
    %v985 = vld [vmem:[%s984] sm:$0xff]
    %v986 = vld [vmem:[%s984 + $0x8] sm:$0xff]
    %v987 = vld [vmem:[%s984 + $0x10] sm:$0xff]
    %v988 = vld [vmem:[%s984 + $0x18] sm:$0xff]
    %989 = vmatprep.subr.mxu0 %v930
    %990 = vmatpush1.msra.mxu0 %v929
    %991 = vmatprep.subr.mxu0 %v926
    %992 = vmatpush1.msra.mxu0 %v925
    %993 = vmatprep.subr.mxu0 %v922
    %994 = vmatpush1.msra.mxu0 %v921
    %995 = vmatprep.subr.mxu0 %v918
    %996 = vmatpush1.msra.mxu0 %v917
    %997 = vmatprep.subr.mxu0 %v914
    %998 = vmatpush1.msra.mxu0 %v913
    %999 = vmatprep.subr.mxu0 %v910
    %1000 = vmatpush1.msra.mxu0 %v909
    %1001 = vmatprep.subr.mxu0 %v906
    %1002 = vmatpush1.msra.mxu0 %v905
    %1003 = vmatprep.subr.mxu0 %v902
    %1004 = vmatpush1.msra.mxu0 %v901
    %1005 = vmatprep.subr.mxu0 %v898
    %1006 = vmatpush1.msra.mxu0 %v897
    %1007 = vmatprep.subr.mxu0 %v894
    %1008 = vmatpush1.msra.mxu0 %v893
    %1009 = vmatprep.subr.mxu0 %v890
    %1010 = vmatpush1.msra.mxu0 %v889
    %1011 = vmatprep.subr.mxu0 %v886
    %1012 = vmatpush1.msra.mxu0 %v885
    %1013 = vmatprep.subr.mxu0 %v882
    %1014 = vmatpush1.msra.mxu0 %v881
    %1015 = vmatprep.subr.mxu0 %v878
    %1016 = vmatpush1.msra.mxu0 %v877
    %1017 = vmatprep.subr.mxu0 %v874
    %1018 = vmatpush1.msra.mxu0 %v873
    %1019 = vmatprep.subr.mxu0 %v870
    %1020 = vmatpush1.msra.mxu0 %v869
    %1021 = vmatprep.subr.mxu0 0.0
    %1022 = vmatpush2.msra.mxu0 0.0
    %1023 = vmatprep.subr.mxu0 0.0
    %1024 = vmatpush2.msra.mxu0 0.0
    %1025 = vmatprep.subr.mxu0 0.0
    %1026 = vmatpush2.msra.mxu0 0.0
    %1027 = vmatprep.subr.mxu0 0.0
    %1028 = vmatpush2.msra.mxu0 0.0
    %1029 = vmatprep.subr.mxu0 0.0
    %1030 = vmatpush2.msra.mxu0 0.0
    %1031 = vmatprep.subr.mxu0 0.0
    %1032 = vmatpush2.msra.mxu0 0.0
    %1033 = vmatprep.subr.mxu0 0.0
    %1034 = vmatpush2.msra.mxu0 0.0
    %1035 = vmatprep.subr.mxu0 0.0
    %1036 = vmatpush2.msra.mxu0 0.0
    %1037 = vmatprep.subr.mxu0 0.0
    %1038 = vmatpush2.msra.mxu0 0.0
    %1039 = vmatprep.subr.mxu0 0.0
    %1040 = vmatpush2.msra.mxu0 0.0
    %1041 = vmatprep.subr.mxu0 0.0
    %1042 = vmatpush2.msra.mxu0 0.0
    %1043 = vmatprep.subr.mxu0 0.0
    %1044 = vmatpush2.msra.mxu0 0.0
    %1045 = vmatprep.subr.mxu0 0.0
    %1046 = vmatpush2.msra.mxu0 0.0
    %1047 = vmatprep.subr.mxu0 0.0
    %1048 = vmatpush2.msra.mxu0 0.0
    %1049 = vmatprep.subr.mxu0 0.0
    %1050 = vmatpush2.msra.mxu0 0.0
    %1051 = vmatprep.subr.mxu0 0.0
    %1052 = vmatpush2.msra.mxu0 0.0
    %1053 = vmatprep.mubr.f32.mxu0 0.0
    %1054 = vmatmul.mubr.f32.gmra.mxu0 0.0
    %v1055 = vpop.f32.mrf.mxu0
    %v1056 = vadd.f32 0.0, %v1055
    %v1057 = vpop.f32.mrf.mxu0
    %v1058 = vadd.f32 0.0, %v1057
    %1059 = vdwg.mxu0
    %1060 = vmatprep.subr.mxu0 %v932
    %1061 = vmatpush1.msra.mxu0 %v931
    %1062 = vmatprep.subr.mxu0 %v928
    %1063 = vmatpush1.msra.mxu0 %v927
    %1064 = vmatprep.subr.mxu0 %v924
    %1065 = vmatpush1.msra.mxu0 %v923
    %1066 = vmatprep.subr.mxu0 %v920
    %1067 = vmatpush1.msra.mxu0 %v919
    %1068 = vmatprep.subr.mxu0 %v916
    %1069 = vmatpush1.msra.mxu0 %v915
    %1070 = vmatprep.subr.mxu0 %v912
    %1071 = vmatpush1.msra.mxu0 %v911
    %1072 = vmatprep.subr.mxu0 %v908
    %1073 = vmatpush1.msra.mxu0 %v907
    %1074 = vmatprep.subr.mxu0 %v904
    %1075 = vmatpush1.msra.mxu0 %v903
    %1076 = vmatprep.subr.mxu0 %v900
    %1077 = vmatpush1.msra.mxu0 %v899
    %1078 = vmatprep.subr.mxu0 %v896
    %1079 = vmatpush1.msra.mxu0 %v895
    %1080 = vmatprep.subr.mxu0 %v892
    %1081 = vmatpush1.msra.mxu0 %v891
    %1082 = vmatprep.subr.mxu0 %v888
    %1083 = vmatpush1.msra.mxu0 %v887
    %1084 = vmatprep.subr.mxu0 %v884
    %1085 = vmatpush1.msra.mxu0 %v883
    %1086 = vmatprep.subr.mxu0 %v880
    %1087 = vmatpush1.msra.mxu0 %v879
    %1088 = vmatprep.subr.mxu0 %v876
    %1089 = vmatpush1.msra.mxu0 %v875
    %1090 = vmatprep.subr.mxu0 %v872
    %1091 = vmatpush1.msra.mxu0 %v871
    %1092 = vmatprep.subr.mxu0 0.0
    %1093 = vmatpush2.msra.mxu0 0.0
    %1094 = vmatprep.subr.mxu0 0.0
    %1095 = vmatpush2.msra.mxu0 0.0
    %1096 = vmatprep.subr.mxu0 0.0
    %1097 = vmatpush2.msra.mxu0 0.0
    %1098 = vmatprep.subr.mxu0 0.0
    %1099 = vmatpush2.msra.mxu0 0.0
    %1100 = vmatprep.subr.mxu0 0.0
    %1101 = vmatpush2.msra.mxu0 0.0
    %1102 = vmatprep.subr.mxu0 0.0
    %1103 = vmatpush2.msra.mxu0 0.0
    %1104 = vmatprep.subr.mxu0 0.0
    %1105 = vmatpush2.msra.mxu0 0.0
    %1106 = vmatprep.subr.mxu0 0.0
    %1107 = vmatpush2.msra.mxu0 0.0
    %1108 = vmatprep.subr.mxu0 0.0
    %1109 = vmatpush2.msra.mxu0 0.0
    %1110 = vmatprep.subr.mxu0 0.0
    %1111 = vmatpush2.msra.mxu0 0.0
    %1112 = vmatprep.subr.mxu0 0.0
    %1113 = vmatpush2.msra.mxu0 0.0
    %1114 = vmatprep.subr.mxu0 0.0
    %1115 = vmatpush2.msra.mxu0 0.0
    %1116 = vmatprep.subr.mxu0 0.0
    %1117 = vmatpush2.msra.mxu0 0.0
    %1118 = vmatprep.subr.mxu0 0.0
    %1119 = vmatpush2.msra.mxu0 0.0
    %1120 = vmatprep.subr.mxu0 0.0
    %1121 = vmatpush2.msra.mxu0 0.0
    %1122 = vmatprep.subr.mxu0 0.0
    %1123 = vmatpush2.msra.mxu0 0.0
    %1124 = vmatprep.mubr.f32.mxu0 0.0
    %1125 = vmatmul.mubr.f32.gmra.mxu0 0.0
    %v1126 = vpop.f32.mrf.mxu0
    %v1127 = vadd.f32 0.0, %v1126
    %v1128 = vpop.f32.mrf.mxu0
    %v1129 = vadd.f32 0.0, %v1128
    %1130 = vdwg.mxu0
    %v1131 = vadd.f32 %v985, %v1056
    %v1132 = vadd.f32 %v986, %v1058
    %v1133 = vadd.f32 %v987, %v1127
    %v1134 = vadd.f32 %v988, %v1129
    %v1135 = vxor.u32 %v1131, 2147483648
    %v1136 = vmul.f32 %v1135, 1.442695
    %v1137 = vpow.pop %v1136
    %v1138 = vadd.f32 %v1137, 1.0
    %v1139 = vrcp.pop %v1138
    %v1140 = vmul.f32 1.0, %v1139
    %v1141 = vxor.u32 %v1132, 2147483648
    %v1142 = vmul.f32 %v1141, 1.442695
    %v1143 = vpow.pop %v1142
    %v1144 = vadd.f32 %v1143, 1.0
    %v1145 = vrcp.pop %v1144
    %v1146 = vmul.f32 1.0, %v1145
    %v1147 = vtanh.pop %v1133
    %v1148 = vxor.u32 %v1134, 2147483648
    %v1149 = vmul.f32 %v1148, 1.442695
    %v1150 = vpow.pop %v1149
    %v1151 = vadd.f32 %v1150, 1.0
    %v1152 = vrcp.pop %v1151
    %v1153 = vmul.f32 1.0, %v1152
    %v1154 = vmul.f32 %v1146, 0.0
    %v1155 = vmul.f32 %v1140, %v1147
    %v1156 = vadd.f32 %v1154, %v1155
    %v1157 = vtanh.pop %v1156
    %v1158 = vmul.f32 %v1153, %v1157
    %1159 = vst [vmem:[#allocation4] sm:$0xff] %v1158
    %s1160 = smul.u32 1, 4
    %s1161 = smul.addr %s1160, 8
    %s1162 = scalar_lea.vmem [#allocation2], %s1161
    %v1163 = vld [vmem:[%s1162] sm:$0xff]
    %v1164 = vld [vmem:[%s1162 + $0x8] sm:$0xff]
    %v1165 = vld [vmem:[%s1162 + $0x10] sm:$0xff]
    %v1166 = vld [vmem:[%s1162 + $0x18] sm:$0xff]
    %1167 = vmatprep.subr.mxu0 %v930
    %1168 = vmatpush1.msra.mxu0 %v929
    %1169 = vmatprep.subr.mxu0 %v926
    %1170 = vmatpush1.msra.mxu0 %v925
    %1171 = vmatprep.subr.mxu0 %v922
    %1172 = vmatpush1.msra.mxu0 %v921
    %1173 = vmatprep.subr.mxu0 %v918
    %1174 = vmatpush1.msra.mxu0 %v917
    %1175 = vmatprep.subr.mxu0 %v914
    %1176 = vmatpush1.msra.mxu0 %v913
    %1177 = vmatprep.subr.mxu0 %v910
    %1178 = vmatpush1.msra.mxu0 %v909
    %1179 = vmatprep.subr.mxu0 %v906
    %1180 = vmatpush1.msra.mxu0 %v905
    %1181 = vmatprep.subr.mxu0 %v902
    %1182 = vmatpush1.msra.mxu0 %v901
    %1183 = vmatprep.subr.mxu0 %v898
    %1184 = vmatpush1.msra.mxu0 %v897
    %1185 = vmatprep.subr.mxu0 %v894
    %1186 = vmatpush1.msra.mxu0 %v893
    %1187 = vmatprep.subr.mxu0 %v890
    %1188 = vmatpush1.msra.mxu0 %v889
    %1189 = vmatprep.subr.mxu0 %v886
    %1190 = vmatpush1.msra.mxu0 %v885
    %1191 = vmatprep.subr.mxu0 %v882
    %1192 = vmatpush1.msra.mxu0 %v881
    %1193 = vmatprep.subr.mxu0 %v878
    %1194 = vmatpush1.msra.mxu0 %v877
    %1195 = vmatprep.subr.mxu0 %v874
    %1196 = vmatpush1.msra.mxu0 %v873
    %1197 = vmatprep.subr.mxu0 %v870
    %1198 = vmatpush1.msra.mxu0 %v869
    %1199 = vmatprep.subr.mxu0 0.0
    %1200 = vmatpush2.msra.mxu0 0.0
    %1201 = vmatprep.subr.mxu0 0.0
    %1202 = vmatpush2.msra.mxu0 0.0
    %1203 = vmatprep.subr.mxu0 0.0
    %1204 = vmatpush2.msra.mxu0 0.0
    %1205 = vmatprep.subr.mxu0 0.0
    %1206 = vmatpush2.msra.mxu0 0.0
    %1207 = vmatprep.subr.mxu0 0.0
    %1208 = vmatpush2.msra.mxu0 0.0
    %1209 = vmatprep.subr.mxu0 0.0
    %1210 = vmatpush2.msra.mxu0 0.0
    %1211 = vmatprep.subr.mxu0 0.0
    %1212 = vmatpush2.msra.mxu0 0.0
    %1213 = vmatprep.subr.mxu0 0.0
    %1214 = vmatpush2.msra.mxu0 0.0
    %1215 = vmatprep.subr.mxu0 0.0
    %1216 = vmatpush2.msra.mxu0 0.0
    %1217 = vmatprep.subr.mxu0 0.0
    %1218 = vmatpush2.msra.mxu0 0.0
    %1219 = vmatprep.subr.mxu0 0.0
    %1220 = vmatpush2.msra.mxu0 0.0
    %1221 = vmatprep.subr.mxu0 0.0
    %1222 = vmatpush2.msra.mxu0 0.0
    %1223 = vmatprep.subr.mxu0 0.0
    %1224 = vmatpush2.msra.mxu0 0.0
    %1225 = vmatprep.subr.mxu0 0.0
    %1226 = vmatpush2.msra.mxu0 0.0
    %1227 = vmatprep.subr.mxu0 0.0
    %1228 = vmatpush2.msra.mxu0 0.0
    %1229 = vmatprep.subr.mxu0 0.0
    %1230 = vmatpush2.msra.mxu0 0.0
    %1231 = vmatprep.mubr.f32.mxu0 0.0
    %1232 = vmatmul.mubr.f32.gmra.mxu0 %v1158
    %v1233 = vpop.f32.mrf.mxu0
    %v1234 = vadd.f32 0.0, %v1233
    %v1235 = vpop.f32.mrf.mxu0
    %v1236 = vadd.f32 0.0, %v1235
    %1237 = vdwg.mxu0
    %1238 = vmatprep.subr.mxu0 %v932
    %1239 = vmatpush1.msra.mxu0 %v931
    %1240 = vmatprep.subr.mxu0 %v928
    %1241 = vmatpush1.msra.mxu0 %v927
    %1242 = vmatprep.subr.mxu0 %v924
    %1243 = vmatpush1.msra.mxu0 %v923
    %1244 = vmatprep.subr.mxu0 %v920
    %1245 = vmatpush1.msra.mxu0 %v919
    %1246 = vmatprep.subr.mxu0 %v916
    %1247 = vmatpush1.msra.mxu0 %v915
    %1248 = vmatprep.subr.mxu0 %v912
    %1249 = vmatpush1.msra.mxu0 %v911
    %1250 = vmatprep.subr.mxu0 %v908
    %1251 = vmatpush1.msra.mxu0 %v907
    %1252 = vmatprep.subr.mxu0 %v904
    %1253 = vmatpush1.msra.mxu0 %v903
    %1254 = vmatprep.subr.mxu0 %v900
    %1255 = vmatpush1.msra.mxu0 %v899
    %1256 = vmatprep.subr.mxu0 %v896
    %1257 = vmatpush1.msra.mxu0 %v895
    %1258 = vmatprep.subr.mxu0 %v892
    %1259 = vmatpush1.msra.mxu0 %v891
    %1260 = vmatprep.subr.mxu0 %v888
    %1261 = vmatpush1.msra.mxu0 %v887
    %1262 = vmatprep.subr.mxu0 %v884
    %1263 = vmatpush1.msra.mxu0 %v883
    %1264 = vmatprep.subr.mxu0 %v880
    %1265 = vmatpush1.msra.mxu0 %v879
    %1266 = vmatprep.subr.mxu0 %v876
    %1267 = vmatpush1.msra.mxu0 %v875
    %1268 = vmatprep.subr.mxu0 %v872
    %1269 = vmatpush1.msra.mxu0 %v871
    %1270 = vmatprep.subr.mxu0 0.0
    %1271 = vmatpush2.msra.mxu0 0.0
    %1272 = vmatprep.subr.mxu0 0.0
    %1273 = vmatpush2.msra.mxu0 0.0
    %1274 = vmatprep.subr.mxu0 0.0
    %1275 = vmatpush2.msra.mxu0 0.0
    %1276 = vmatprep.subr.mxu0 0.0
    %1277 = vmatpush2.msra.mxu0 0.0
    %1278 = vmatprep.subr.mxu0 0.0
    %1279 = vmatpush2.msra.mxu0 0.0
    %1280 = vmatprep.subr.mxu0 0.0
    %1281 = vmatpush2.msra.mxu0 0.0
    %1282 = vmatprep.subr.mxu0 0.0
    %1283 = vmatpush2.msra.mxu0 0.0
    %1284 = vmatprep.subr.mxu0 0.0
    %1285 = vmatpush2.msra.mxu0 0.0
    %1286 = vmatprep.subr.mxu0 0.0
    %1287 = vmatpush2.msra.mxu0 0.0
    %1288 = vmatprep.subr.mxu0 0.0
    %1289 = vmatpush2.msra.mxu0 0.0
    %1290 = vmatprep.subr.mxu0 0.0
    %1291 = vmatpush2.msra.mxu0 0.0
    %1292 = vmatprep.subr.mxu0 0.0
    %1293 = vmatpush2.msra.mxu0 0.0
    %1294 = vmatprep.subr.mxu0 0.0
    %1295 = vmatpush2.msra.mxu0 0.0
    %1296 = vmatprep.subr.mxu0 0.0
    %1297 = vmatpush2.msra.mxu0 0.0
    %1298 = vmatprep.subr.mxu0 0.0
    %1299 = vmatpush2.msra.mxu0 0.0
    %1300 = vmatprep.subr.mxu0 0.0
    %1301 = vmatpush2.msra.mxu0 0.0
    %1302 = vmatprep.mubr.f32.mxu0 0.0
    %1303 = vmatmul.mubr.f32.gmra.mxu0 %v1158
    %v1304 = vpop.f32.mrf.mxu0
    %v1305 = vadd.f32 0.0, %v1304
    %v1306 = vpop.f32.mrf.mxu0
    %v1307 = vadd.f32 0.0, %v1306
    %1308 = vdwg.mxu0
    %v1309 = vadd.f32 %v1163, %v1234
    %v1310 = vadd.f32 %v1164, %v1236
    %v1311 = vadd.f32 %v1165, %v1305
    %v1312 = vadd.f32 %v1166, %v1307
    %v1313 = vxor.u32 %v1309, 2147483648
    %v1314 = vmul.f32 %v1313, 1.442695
    %v1315 = vpow.pop %v1314
    %v1316 = vadd.f32 %v1315, 1.0
    %v1317 = vrcp.pop %v1316
    %v1318 = vmul.f32 1.0, %v1317
    %v1319 = vxor.u32 %v1310, 2147483648
    %v1320 = vmul.f32 %v1319, 1.442695
    %v1321 = vpow.pop %v1320
    %v1322 = vadd.f32 %v1321, 1.0
    %v1323 = vrcp.pop %v1322
    %v1324 = vmul.f32 1.0, %v1323
    %v1325 = vtanh.pop %v1311
    %v1326 = vxor.u32 %v1312, 2147483648
    %v1327 = vmul.f32 %v1326, 1.442695
    %v1328 = vpow.pop %v1327
    %v1329 = vadd.f32 %v1328, 1.0
    %v1330 = vrcp.pop %v1329
    %v1331 = vmul.f32 1.0, %v1330
    %v1332 = vmul.f32 %v1324, %v1156
    %v1333 = vmul.f32 %v1318, %v1325
    %v1334 = vadd.f32 %v1332, %v1333
    %v1335 = vtanh.pop %v1334
    %v1336 = vmul.f32 %v1331, %v1335
    %s1337 = scalar_lea.vmem [#allocation4], 8
    %1338 = vst [vmem:[%s1337] sm:$0xff] %v1336
    %s1339 = smul.u32 2, 4
    %s1340 = smul.addr %s1339, 8
    %s1341 = scalar_lea.vmem [#allocation2], %s1340
    %v1342 = vld [vmem:[%s1341] sm:$0xff]
    %v1343 = vld [vmem:[%s1341 + $0x8] sm:$0xff]
    %v1344 = vld [vmem:[%s1341 + $0x10] sm:$0xff]
    %v1345 = vld [vmem:[%s1341 + $0x18] sm:$0xff]
    %1346 = vmatprep.subr.mxu0 %v930
    %1347 = vmatpush1.msra.mxu0 %v929
    %1348 = vmatprep.subr.mxu0 %v926
    %1349 = vmatpush1.msra.mxu0 %v925
    %1350 = vmatprep.subr.mxu0 %v922
    %1351 = vmatpush1.msra.mxu0 %v921
    %1352 = vmatprep.subr.mxu0 %v918
    %1353 = vmatpush1.msra.mxu0 %v917
    %1354 = vmatprep.subr.mxu0 %v914
    %1355 = vmatpush1.msra.mxu0 %v913
    %1356 = vmatprep.subr.mxu0 %v910
    %1357 = vmatpush1.msra.mxu0 %v909
    %1358 = vmatprep.subr.mxu0 %v906
    %1359 = vmatpush1.msra.mxu0 %v905
    %1360 = vmatprep.subr.mxu0 %v902
    %1361 = vmatpush1.msra.mxu0 %v901
    %1362 = vmatprep.subr.mxu0 %v898
    %1363 = vmatpush1.msra.mxu0 %v897
    %1364 = vmatprep.subr.mxu0 %v894
    %1365 = vmatpush1.msra.mxu0 %v893
    %1366 = vmatprep.subr.mxu0 %v890
    %1367 = vmatpush1.msra.mxu0 %v889
    %1368 = vmatprep.subr.mxu0 %v886
    %1369 = vmatpush1.msra.mxu0 %v885
    %1370 = vmatprep.subr.mxu0 %v882
    %1371 = vmatpush1.msra.mxu0 %v881
    %1372 = vmatprep.subr.mxu0 %v878
    %1373 = vmatpush1.msra.mxu0 %v877
    %1374 = vmatprep.subr.mxu0 %v874
    %1375 = vmatpush1.msra.mxu0 %v873
    %1376 = vmatprep.subr.mxu0 %v870
    %1377 = vmatpush1.msra.mxu0 %v869
    %1378 = vmatprep.subr.mxu0 0.0
    %1379 = vmatpush2.msra.mxu0 0.0
    %1380 = vmatprep.subr.mxu0 0.0
    %1381 = vmatpush2.msra.mxu0 0.0
    %1382 = vmatprep.subr.mxu0 0.0
    %1383 = vmatpush2.msra.mxu0 0.0
    %1384 = vmatprep.subr.mxu0 0.0
    %1385 = vmatpush2.msra.mxu0 0.0
    %1386 = vmatprep.subr.mxu0 0.0
    %1387 = vmatpush2.msra.mxu0 0.0
    %1388 = vmatprep.subr.mxu0 0.0
    %1389 = vmatpush2.msra.mxu0 0.0
    %1390 = vmatprep.subr.mxu0 0.0
    %1391 = vmatpush2.msra.mxu0 0.0
    %1392 = vmatprep.subr.mxu0 0.0
    %1393 = vmatpush2.msra.mxu0 0.0
    %1394 = vmatprep.subr.mxu0 0.0
    %1395 = vmatpush2.msra.mxu0 0.0
    %1396 = vmatprep.subr.mxu0 0.0
    %1397 = vmatpush2.msra.mxu0 0.0
    %1398 = vmatprep.subr.mxu0 0.0
    %1399 = vmatpush2.msra.mxu0 0.0
    %1400 = vmatprep.subr.mxu0 0.0
    %1401 = vmatpush2.msra.mxu0 0.0
    %1402 = vmatprep.subr.mxu0 0.0
    %1403 = vmatpush2.msra.mxu0 0.0
    %1404 = vmatprep.subr.mxu0 0.0
    %1405 = vmatpush2.msra.mxu0 0.0
    %1406 = vmatprep.subr.mxu0 0.0
    %1407 = vmatpush2.msra.mxu0 0.0
    %1408 = vmatprep.subr.mxu0 0.0
    %1409 = vmatpush2.msra.mxu0 0.0
    %1410 = vmatprep.mubr.f32.mxu0 0.0
    %1411 = vmatmul.mubr.f32.gmra.mxu0 %v1336
    %v1412 = vpop.f32.mrf.mxu0
    %v1413 = vadd.f32 0.0, %v1412
    %v1414 = vpop.f32.mrf.mxu0
    %v1415 = vadd.f32 0.0, %v1414
    %1416 = vdwg.mxu0
    %1417 = vmatprep.subr.mxu0 %v932
    %1418 = vmatpush1.msra.mxu0 %v931
    %1419 = vmatprep.subr.mxu0 %v928
    %1420 = vmatpush1.msra.mxu0 %v927
    %1421 = vmatprep.subr.mxu0 %v924
    %1422 = vmatpush1.msra.mxu0 %v923
    %1423 = vmatprep.subr.mxu0 %v920
    %1424 = vmatpush1.msra.mxu0 %v919
    %1425 = vmatprep.subr.mxu0 %v916
    %1426 = vmatpush1.msra.mxu0 %v915
    %1427 = vmatprep.subr.mxu0 %v912
    %1428 = vmatpush1.msra.mxu0 %v911
    %1429 = vmatprep.subr.mxu0 %v908
    %1430 = vmatpush1.msra.mxu0 %v907
    %1431 = vmatprep.subr.mxu0 %v904
    %1432 = vmatpush1.msra.mxu0 %v903
    %1433 = vmatprep.subr.mxu0 %v900
    %1434 = vmatpush1.msra.mxu0 %v899
    %1435 = vmatprep.subr.mxu0 %v896
    %1436 = vmatpush1.msra.mxu0 %v895
    %1437 = vmatprep.subr.mxu0 %v892
    %1438 = vmatpush1.msra.mxu0 %v891
    %1439 = vmatprep.subr.mxu0 %v888
    %1440 = vmatpush1.msra.mxu0 %v887
    %1441 = vmatprep.subr.mxu0 %v884
    %1442 = vmatpush1.msra.mxu0 %v883
    %1443 = vmatprep.subr.mxu0 %v880
    %1444 = vmatpush1.msra.mxu0 %v879
    %1445 = vmatprep.subr.mxu0 %v876
    %1446 = vmatpush1.msra.mxu0 %v875
    %1447 = vmatprep.subr.mxu0 %v872
    %1448 = vmatpush1.msra.mxu0 %v871
    %1449 = vmatprep.subr.mxu0 0.0
    %1450 = vmatpush2.msra.mxu0 0.0
    %1451 = vmatprep.subr.mxu0 0.0
    %1452 = vmatpush2.msra.mxu0 0.0
    %1453 = vmatprep.subr.mxu0 0.0
    %1454 = vmatpush2.msra.mxu0 0.0
    %1455 = vmatprep.subr.mxu0 0.0
    %1456 = vmatpush2.msra.mxu0 0.0
    %1457 = vmatprep.subr.mxu0 0.0
    %1458 = vmatpush2.msra.mxu0 0.0
    %1459 = vmatprep.subr.mxu0 0.0
    %1460 = vmatpush2.msra.mxu0 0.0
    %1461 = vmatprep.subr.mxu0 0.0
    %1462 = vmatpush2.msra.mxu0 0.0
    %1463 = vmatprep.subr.mxu0 0.0
    %1464 = vmatpush2.msra.mxu0 0.0
    %1465 = vmatprep.subr.mxu0 0.0
    %1466 = vmatpush2.msra.mxu0 0.0
    %1467 = vmatprep.subr.mxu0 0.0
    %1468 = vmatpush2.msra.mxu0 0.0
    %1469 = vmatprep.subr.mxu0 0.0
    %1470 = vmatpush2.msra.mxu0 0.0
    %1471 = vmatprep.subr.mxu0 0.0
    %1472 = vmatpush2.msra.mxu0 0.0
    %1473 = vmatprep.subr.mxu0 0.0
    %1474 = vmatpush2.msra.mxu0 0.0
    %1475 = vmatprep.subr.mxu0 0.0
    %1476 = vmatpush2.msra.mxu0 0.0
    %1477 = vmatprep.subr.mxu0 0.0
    %1478 = vmatpush2.msra.mxu0 0.0
    %1479 = vmatprep.subr.mxu0 0.0
    %1480 = vmatpush2.msra.mxu0 0.0
    %1481 = vmatprep.mubr.f32.mxu0 0.0
    %1482 = vmatmul.mubr.f32.gmra.mxu0 %v1336
    %v1483 = vpop.f32.mrf.mxu0
    %v1484 = vadd.f32 0.0, %v1483
    %v1485 = vpop.f32.mrf.mxu0
    %v1486 = vadd.f32 0.0, %v1485
    %1487 = vdwg.mxu0
    %v1488 = vadd.f32 %v1342, %v1413
    %v1489 = vadd.f32 %v1343, %v1415
    %v1490 = vadd.f32 %v1344, %v1484
    %v1491 = vadd.f32 %v1345, %v1486
    %v1492 = vxor.u32 %v1488, 2147483648
    %v1493 = vmul.f32 %v1492, 1.442695
    %v1494 = vpow.pop %v1493
    %v1495 = vadd.f32 %v1494, 1.0
    %v1496 = vrcp.pop %v1495
    %v1497 = vmul.f32 1.0, %v1496
    %v1498 = vxor.u32 %v1489, 2147483648
    %v1499 = vmul.f32 %v1498, 1.442695
    %v1500 = vpow.pop %v1499
    %v1501 = vadd.f32 %v1500, 1.0
    %v1502 = vrcp.pop %v1501
    %v1503 = vmul.f32 1.0, %v1502
    %v1504 = vtanh.pop %v1490
    %v1505 = vxor.u32 %v1491, 2147483648
    %v1506 = vmul.f32 %v1505, 1.442695
    %v1507 = vpow.pop %v1506
    %v1508 = vadd.f32 %v1507, 1.0
    %v1509 = vrcp.pop %v1508
    %v1510 = vmul.f32 1.0, %v1509
    %v1511 = vmul.f32 %v1503, %v1334
    %v1512 = vmul.f32 %v1497, %v1504
    %v1513 = vadd.f32 %v1511, %v1512
    %v1514 = vtanh.pop %v1513
    %v1515 = vmul.f32 %v1510, %v1514
    %s1516 = scalar_lea.vmem [#allocation4], 16
    %1517 = vst [vmem:[%s1516] sm:$0xff] %v1515
    %s1518 = smul.u32 3, 4
    %s1519 = smul.addr %s1518, 8
    %s1520 = scalar_lea.vmem [#allocation2], %s1519
    %v1521 = vld [vmem:[%s1520] sm:$0xff]
    %v1522 = vld [vmem:[%s1520 + $0x8] sm:$0xff]
    %v1523 = vld [vmem:[%s1520 + $0x10] sm:$0xff]
    %v1524 = vld [vmem:[%s1520 + $0x18] sm:$0xff]
    %1525 = vmatprep.subr.mxu0 %v930
    %1526 = vmatpush1.msra.mxu0 %v929
    %1527 = vmatprep.subr.mxu0 %v926
    %1528 = vmatpush1.msra.mxu0 %v925
    %1529 = vmatprep.subr.mxu0 %v922
    %1530 = vmatpush1.msra.mxu0 %v921
    %1531 = vmatprep.subr.mxu0 %v918
    %1532 = vmatpush1.msra.mxu0 %v917
    %1533 = vmatprep.subr.mxu0 %v914
    %1534 = vmatpush1.msra.mxu0 %v913
    %1535 = vmatprep.subr.mxu0 %v910
    %1536 = vmatpush1.msra.mxu0 %v909
    %1537 = vmatprep.subr.mxu0 %v906
    %1538 = vmatpush1.msra.mxu0 %v905
    %1539 = vmatprep.subr.mxu0 %v902
    %1540 = vmatpush1.msra.mxu0 %v901
    %1541 = vmatprep.subr.mxu0 %v898
    %1542 = vmatpush1.msra.mxu0 %v897
    %1543 = vmatprep.subr.mxu0 %v894
    %1544 = vmatpush1.msra.mxu0 %v893
    %1545 = vmatprep.subr.mxu0 %v890
    %1546 = vmatpush1.msra.mxu0 %v889
    %1547 = vmatprep.subr.mxu0 %v886
    %1548 = vmatpush1.msra.mxu0 %v885
    %1549 = vmatprep.subr.mxu0 %v882
    %1550 = vmatpush1.msra.mxu0 %v881
    %1551 = vmatprep.subr.mxu0 %v878
    %1552 = vmatpush1.msra.mxu0 %v877
    %1553 = vmatprep.subr.mxu0 %v874
    %1554 = vmatpush1.msra.mxu0 %v873
    %1555 = vmatprep.subr.mxu0 %v870
    %1556 = vmatpush1.msra.mxu0 %v869
    %1557 = vmatprep.subr.mxu0 0.0
    %1558 = vmatpush2.msra.mxu0 0.0
    %1559 = vmatprep.subr.mxu0 0.0
    %1560 = vmatpush2.msra.mxu0 0.0
    %1561 = vmatprep.subr.mxu0 0.0
    %1562 = vmatpush2.msra.mxu0 0.0
    %1563 = vmatprep.subr.mxu0 0.0
    %1564 = vmatpush2.msra.mxu0 0.0
    %1565 = vmatprep.subr.mxu0 0.0
    %1566 = vmatpush2.msra.mxu0 0.0
    %1567 = vmatprep.subr.mxu0 0.0
    %1568 = vmatpush2.msra.mxu0 0.0
    %1569 = vmatprep.subr.mxu0 0.0
    %1570 = vmatpush2.msra.mxu0 0.0
    %1571 = vmatprep.subr.mxu0 0.0
    %1572 = vmatpush2.msra.mxu0 0.0
    %1573 = vmatprep.subr.mxu0 0.0
    %1574 = vmatpush2.msra.mxu0 0.0
    %1575 = vmatprep.subr.mxu0 0.0
    %1576 = vmatpush2.msra.mxu0 0.0
    %1577 = vmatprep.subr.mxu0 0.0
    %1578 = vmatpush2.msra.mxu0 0.0
    %1579 = vmatprep.subr.mxu0 0.0
    %1580 = vmatpush2.msra.mxu0 0.0
    %1581 = vmatprep.subr.mxu0 0.0
    %1582 = vmatpush2.msra.mxu0 0.0
    %1583 = vmatprep.subr.mxu0 0.0
    %1584 = vmatpush2.msra.mxu0 0.0
    %1585 = vmatprep.subr.mxu0 0.0
    %1586 = vmatpush2.msra.mxu0 0.0
    %1587 = vmatprep.subr.mxu0 0.0
    %1588 = vmatpush2.msra.mxu0 0.0
    %1589 = vmatprep.mubr.f32.mxu0 0.0
    %1590 = vmatmul.mubr.f32.gmra.mxu0 %v1515
    %v1591 = vpop.f32.mrf.mxu0
    %v1592 = vadd.f32 0.0, %v1591
    %v1593 = vpop.f32.mrf.mxu0
    %v1594 = vadd.f32 0.0, %v1593
    %1595 = vdwg.mxu0
    %1596 = vmatprep.subr.mxu0 %v932
    %1597 = vmatpush1.msra.mxu0 %v931
    %1598 = vmatprep.subr.mxu0 %v928
    %1599 = vmatpush1.msra.mxu0 %v927
    %1600 = vmatprep.subr.mxu0 %v924
    %1601 = vmatpush1.msra.mxu0 %v923
    %1602 = vmatprep.subr.mxu0 %v920
    %1603 = vmatpush1.msra.mxu0 %v919
    %1604 = vmatprep.subr.mxu0 %v916
    %1605 = vmatpush1.msra.mxu0 %v915
    %1606 = vmatprep.subr.mxu0 %v912
    %1607 = vmatpush1.msra.mxu0 %v911
    %1608 = vmatprep.subr.mxu0 %v908
    %1609 = vmatpush1.msra.mxu0 %v907
    %1610 = vmatprep.subr.mxu0 %v904
    %1611 = vmatpush1.msra.mxu0 %v903
    %1612 = vmatprep.subr.mxu0 %v900
    %1613 = vmatpush1.msra.mxu0 %v899
    %1614 = vmatprep.subr.mxu0 %v896
    %1615 = vmatpush1.msra.mxu0 %v895
    %1616 = vmatprep.subr.mxu0 %v892
    %1617 = vmatpush1.msra.mxu0 %v891
    %1618 = vmatprep.subr.mxu0 %v888
    %1619 = vmatpush1.msra.mxu0 %v887
    %1620 = vmatprep.subr.mxu0 %v884
    %1621 = vmatpush1.msra.mxu0 %v883
    %1622 = vmatprep.subr.mxu0 %v880
    %1623 = vmatpush1.msra.mxu0 %v879
    %1624 = vmatprep.subr.mxu0 %v876
    %1625 = vmatpush1.msra.mxu0 %v875
    %1626 = vmatprep.subr.mxu0 %v872
    %1627 = vmatpush1.msra.mxu0 %v871
    %1628 = vmatprep.subr.mxu0 0.0
    %1629 = vmatpush2.msra.mxu0 0.0
    %1630 = vmatprep.subr.mxu0 0.0
    %1631 = vmatpush2.msra.mxu0 0.0
    %1632 = vmatprep.subr.mxu0 0.0
    %1633 = vmatpush2.msra.mxu0 0.0
    %1634 = vmatprep.subr.mxu0 0.0
    %1635 = vmatpush2.msra.mxu0 0.0
    %1636 = vmatprep.subr.mxu0 0.0
    %1637 = vmatpush2.msra.mxu0 0.0
    %1638 = vmatprep.subr.mxu0 0.0
    %1639 = vmatpush2.msra.mxu0 0.0
    %1640 = vmatprep.subr.mxu0 0.0
    %1641 = vmatpush2.msra.mxu0 0.0
    %1642 = vmatprep.subr.mxu0 0.0
    %1643 = vmatpush2.msra.mxu0 0.0
    %1644 = vmatprep.subr.mxu0 0.0
    %1645 = vmatpush2.msra.mxu0 0.0
    %1646 = vmatprep.subr.mxu0 0.0
    %1647 = vmatpush2.msra.mxu0 0.0
    %1648 = vmatprep.subr.mxu0 0.0
    %1649 = vmatpush2.msra.mxu0 0.0
    %1650 = vmatprep.subr.mxu0 0.0
    %1651 = vmatpush2.msra.mxu0 0.0
    %1652 = vmatprep.subr.mxu0 0.0
    %1653 = vmatpush2.msra.mxu0 0.0
    %1654 = vmatprep.subr.mxu0 0.0
    %1655 = vmatpush2.msra.mxu0 0.0
    %1656 = vmatprep.subr.mxu0 0.0
    %1657 = vmatpush2.msra.mxu0 0.0
    %1658 = vmatprep.subr.mxu0 0.0
    %1659 = vmatpush2.msra.mxu0 0.0
    %1660 = vmatprep.mubr.f32.mxu0 0.0
    %1661 = vmatmul.mubr.f32.gmra.mxu0 %v1515
    %v1662 = vpop.f32.mrf.mxu0
    %v1663 = vadd.f32 0.0, %v1662
    %v1664 = vpop.f32.mrf.mxu0
    %v1665 = vadd.f32 0.0, %v1664
    %1666 = vdwg.mxu0
    %v1667 = vadd.f32 %v1521, %v1592
    %v1668 = vadd.f32 %v1522, %v1594
    %v1669 = vadd.f32 %v1523, %v1663
    %v1670 = vadd.f32 %v1524, %v1665
    %v1671 = vxor.u32 %v1667, 2147483648
    %v1672 = vmul.f32 %v1671, 1.442695
    %v1673 = vpow.pop %v1672
    %v1674 = vadd.f32 %v1673, 1.0
    %v1675 = vrcp.pop %v1674
    %v1676 = vmul.f32 1.0, %v1675
    %v1677 = vxor.u32 %v1668, 2147483648
    %v1678 = vmul.f32 %v1677, 1.442695
    %v1679 = vpow.pop %v1678
    %v1680 = vadd.f32 %v1679, 1.0
    %v1681 = vrcp.pop %v1680
    %v1682 = vmul.f32 1.0, %v1681
    %v1683 = vtanh.pop %v1669
    %v1684 = vxor.u32 %v1670, 2147483648
    %v1685 = vmul.f32 %v1684, 1.442695
    %v1686 = vpow.pop %v1685
    %v1687 = vadd.f32 %v1686, 1.0
    %v1688 = vrcp.pop %v1687
    %v1689 = vmul.f32 1.0, %v1688
    %v1690 = vmul.f32 %v1682, %v1513
    %v1691 = vmul.f32 %v1676, %v1683
    %v1692 = vadd.f32 %v1690, %v1691
    %v1693 = vtanh.pop %v1692
    %v1694 = vmul.f32 %v1689, %v1693
    %s1695 = scalar_lea.vmem [#allocation4], 24
    %1696 = vst [vmem:[%s1695] sm:$0xff] %v1694
    %s1697 = smul.u32 4, 4
    %s1698 = smul.addr %s1697, 8
    %s1699 = scalar_lea.vmem [#allocation2], %s1698
    %v1700 = vld [vmem:[%s1699] sm:$0xff]
    %v1701 = vld [vmem:[%s1699 + $0x8] sm:$0xff]
    %v1702 = vld [vmem:[%s1699 + $0x10] sm:$0xff]
    %v1703 = vld [vmem:[%s1699 + $0x18] sm:$0xff]
    %1704 = vmatprep.subr.mxu0 %v930
    %1705 = vmatpush1.msra.mxu0 %v929
    %1706 = vmatprep.subr.mxu0 %v926
    %1707 = vmatpush1.msra.mxu0 %v925
    %1708 = vmatprep.subr.mxu0 %v922
    %1709 = vmatpush1.msra.mxu0 %v921
    %1710 = vmatprep.subr.mxu0 %v918
    %1711 = vmatpush1.msra.mxu0 %v917
    %1712 = vmatprep.subr.mxu0 %v914
    %1713 = vmatpush1.msra.mxu0 %v913
    %1714 = vmatprep.subr.mxu0 %v910
    %1715 = vmatpush1.msra.mxu0 %v909
    %1716 = vmatprep.subr.mxu0 %v906
    %1717 = vmatpush1.msra.mxu0 %v905
    %1718 = vmatprep.subr.mxu0 %v902
    %1719 = vmatpush1.msra.mxu0 %v901
    %1720 = vmatprep.subr.mxu0 %v898
    %1721 = vmatpush1.msra.mxu0 %v897
    %1722 = vmatprep.subr.mxu0 %v894
    %1723 = vmatpush1.msra.mxu0 %v893
    %1724 = vmatprep.subr.mxu0 %v890
    %1725 = vmatpush1.msra.mxu0 %v889
    %1726 = vmatprep.subr.mxu0 %v886
    %1727 = vmatpush1.msra.mxu0 %v885
    %1728 = vmatprep.subr.mxu0 %v882
    %1729 = vmatpush1.msra.mxu0 %v881
    %1730 = vmatprep.subr.mxu0 %v878
    %1731 = vmatpush1.msra.mxu0 %v877
    %1732 = vmatprep.subr.mxu0 %v874
    %1733 = vmatpush1.msra.mxu0 %v873
    %1734 = vmatprep.subr.mxu0 %v870
    %1735 = vmatpush1.msra.mxu0 %v869
    %1736 = vmatprep.subr.mxu0 0.0
    %1737 = vmatpush2.msra.mxu0 0.0
    %1738 = vmatprep.subr.mxu0 0.0
    %1739 = vmatpush2.msra.mxu0 0.0
    %1740 = vmatprep.subr.mxu0 0.0
    %1741 = vmatpush2.msra.mxu0 0.0
    %1742 = vmatprep.subr.mxu0 0.0
    %1743 = vmatpush2.msra.mxu0 0.0
    %1744 = vmatprep.subr.mxu0 0.0
    %1745 = vmatpush2.msra.mxu0 0.0
    %1746 = vmatprep.subr.mxu0 0.0
    %1747 = vmatpush2.msra.mxu0 0.0
    %1748 = vmatprep.subr.mxu0 0.0
    %1749 = vmatpush2.msra.mxu0 0.0
    %1750 = vmatprep.subr.mxu0 0.0
    %1751 = vmatpush2.msra.mxu0 0.0
    %1752 = vmatprep.subr.mxu0 0.0
    %1753 = vmatpush2.msra.mxu0 0.0
    %1754 = vmatprep.subr.mxu0 0.0
    %1755 = vmatpush2.msra.mxu0 0.0
    %1756 = vmatprep.subr.mxu0 0.0
    %1757 = vmatpush2.msra.mxu0 0.0
    %1758 = vmatprep.subr.mxu0 0.0
    %1759 = vmatpush2.msra.mxu0 0.0
    %1760 = vmatprep.subr.mxu0 0.0
    %1761 = vmatpush2.msra.mxu0 0.0
    %1762 = vmatprep.subr.mxu0 0.0
    %1763 = vmatpush2.msra.mxu0 0.0
    %1764 = vmatprep.subr.mxu0 0.0
    %1765 = vmatpush2.msra.mxu0 0.0
    %1766 = vmatprep.subr.mxu0 0.0
    %1767 = vmatpush2.msra.mxu0 0.0
    %1768 = vmatprep.mubr.f32.mxu0 0.0
    %1769 = vmatmul.mubr.f32.gmra.mxu0 %v1694
    %v1770 = vpop.f32.mrf.mxu0
    %v1771 = vadd.f32 0.0, %v1770
    %v1772 = vpop.f32.mrf.mxu0
    %v1773 = vadd.f32 0.0, %v1772
    %1774 = vdwg.mxu0
    %1775 = vmatprep.subr.mxu0 %v932
    %1776 = vmatpush1.msra.mxu0 %v931
    %1777 = vmatprep.subr.mxu0 %v928
    %1778 = vmatpush1.msra.mxu0 %v927
    %1779 = vmatprep.subr.mxu0 %v924
    %1780 = vmatpush1.msra.mxu0 %v923
    %1781 = vmatprep.subr.mxu0 %v920
    %1782 = vmatpush1.msra.mxu0 %v919
    %1783 = vmatprep.subr.mxu0 %v916
    %1784 = vmatpush1.msra.mxu0 %v915
    %1785 = vmatprep.subr.mxu0 %v912
    %1786 = vmatpush1.msra.mxu0 %v911
    %1787 = vmatprep.subr.mxu0 %v908
    %1788 = vmatpush1.msra.mxu0 %v907
    %1789 = vmatprep.subr.mxu0 %v904
    %1790 = vmatpush1.msra.mxu0 %v903
    %1791 = vmatprep.subr.mxu0 %v900
    %1792 = vmatpush1.msra.mxu0 %v899
    %1793 = vmatprep.subr.mxu0 %v896
    %1794 = vmatpush1.msra.mxu0 %v895
    %1795 = vmatprep.subr.mxu0 %v892
    %1796 = vmatpush1.msra.mxu0 %v891
    %1797 = vmatprep.subr.mxu0 %v888
    %1798 = vmatpush1.msra.mxu0 %v887
    %1799 = vmatprep.subr.mxu0 %v884
    %1800 = vmatpush1.msra.mxu0 %v883
    %1801 = vmatprep.subr.mxu0 %v880
    %1802 = vmatpush1.msra.mxu0 %v879
    %1803 = vmatprep.subr.mxu0 %v876
    %1804 = vmatpush1.msra.mxu0 %v875
    %1805 = vmatprep.subr.mxu0 %v872
    %1806 = vmatpush1.msra.mxu0 %v871
    %1807 = vmatprep.subr.mxu0 0.0
    %1808 = vmatpush2.msra.mxu0 0.0
    %1809 = vmatprep.subr.mxu0 0.0
    %1810 = vmatpush2.msra.mxu0 0.0
    %1811 = vmatprep.subr.mxu0 0.0
    %1812 = vmatpush2.msra.mxu0 0.0
    %1813 = vmatprep.subr.mxu0 0.0
    %1814 = vmatpush2.msra.mxu0 0.0
    %1815 = vmatprep.subr.mxu0 0.0
    %1816 = vmatpush2.msra.mxu0 0.0
    %1817 = vmatprep.subr.mxu0 0.0
    %1818 = vmatpush2.msra.mxu0 0.0
    %1819 = vmatprep.subr.mxu0 0.0
    %1820 = vmatpush2.msra.mxu0 0.0
    %1821 = vmatprep.subr.mxu0 0.0
    %1822 = vmatpush2.msra.mxu0 0.0
    %1823 = vmatprep.subr.mxu0 0.0
    %1824 = vmatpush2.msra.mxu0 0.0
    %1825 = vmatprep.subr.mxu0 0.0
    %1826 = vmatpush2.msra.mxu0 0.0
    %1827 = vmatprep.subr.mxu0 0.0
    %1828 = vmatpush2.msra.mxu0 0.0
    %1829 = vmatprep.subr.mxu0 0.0
    %1830 = vmatpush2.msra.mxu0 0.0
    %1831 = vmatprep.subr.mxu0 0.0
    %1832 = vmatpush2.msra.mxu0 0.0
    %1833 = vmatprep.subr.mxu0 0.0
    %1834 = vmatpush2.msra.mxu0 0.0
    %1835 = vmatprep.subr.mxu0 0.0
    %1836 = vmatpush2.msra.mxu0 0.0
    %1837 = vmatprep.subr.mxu0 0.0
    %1838 = vmatpush2.msra.mxu0 0.0
    %1839 = vmatprep.mubr.f32.mxu0 0.0
    %1840 = vmatmul.mubr.f32.gmra.mxu0 %v1694
    %v1841 = vpop.f32.mrf.mxu0
    %v1842 = vadd.f32 0.0, %v1841
    %v1843 = vpop.f32.mrf.mxu0
    %v1844 = vadd.f32 0.0, %v1843
    %1845 = vdwg.mxu0
    %v1846 = vadd.f32 %v1700, %v1771
    %v1847 = vadd.f32 %v1701, %v1773
    %v1848 = vadd.f32 %v1702, %v1842
    %v1849 = vadd.f32 %v1703, %v1844
    %v1850 = vxor.u32 %v1846, 2147483648
    %v1851 = vmul.f32 %v1850, 1.442695
    %v1852 = vpow.pop %v1851
    %v1853 = vadd.f32 %v1852, 1.0
    %v1854 = vrcp.pop %v1853
    %v1855 = vmul.f32 1.0, %v1854
    %v1856 = vxor.u32 %v1847, 2147483648
    %v1857 = vmul.f32 %v1856, 1.442695
    %v1858 = vpow.pop %v1857
    %v1859 = vadd.f32 %v1858, 1.0
    %v1860 = vrcp.pop %v1859
    %v1861 = vmul.f32 1.0, %v1860
    %v1862 = vtanh.pop %v1848
    %v1863 = vxor.u32 %v1849, 2147483648
    %v1864 = vmul.f32 %v1863, 1.442695
    %v1865 = vpow.pop %v1864
    %v1866 = vadd.f32 %v1865, 1.0
    %v1867 = vrcp.pop %v1866
    %v1868 = vmul.f32 1.0, %v1867
    %v1869 = vmul.f32 %v1861, %v1692
    %v1870 = vmul.f32 %v1855, %v1862
    %v1871 = vadd.f32 %v1869, %v1870
    %v1872 = vtanh.pop %v1871
    %v1873 = vmul.f32 %v1868, %v1872
    %s1874 = scalar_lea.vmem [#allocation4], 32
    %1875 = vst [vmem:[%s1874] sm:$0xff] %v1873
    %s1876 = smul.u32 5, 4
    %s1877 = smul.addr %s1876, 8
    %s1878 = scalar_lea.vmem [#allocation2], %s1877
    %v1879 = vld [vmem:[%s1878] sm:$0xff]
    %v1880 = vld [vmem:[%s1878 + $0x8] sm:$0xff]
    %v1881 = vld [vmem:[%s1878 + $0x10] sm:$0xff]
    %v1882 = vld [vmem:[%s1878 + $0x18] sm:$0xff]
    %1883 = vmatprep.subr.mxu0 %v930
    %1884 = vmatpush1.msra.mxu0 %v929
    %1885 = vmatprep.subr.mxu0 %v926
    %1886 = vmatpush1.msra.mxu0 %v925
    %1887 = vmatprep.subr.mxu0 %v922
    %1888 = vmatpush1.msra.mxu0 %v921
    %1889 = vmatprep.subr.mxu0 %v918
    %1890 = vmatpush1.msra.mxu0 %v917
    %1891 = vmatprep.subr.mxu0 %v914
    %1892 = vmatpush1.msra.mxu0 %v913
    %1893 = vmatprep.subr.mxu0 %v910
    %1894 = vmatpush1.msra.mxu0 %v909
    %1895 = vmatprep.subr.mxu0 %v906
    %1896 = vmatpush1.msra.mxu0 %v905
    %1897 = vmatprep.subr.mxu0 %v902
    %1898 = vmatpush1.msra.mxu0 %v901
    %1899 = vmatprep.subr.mxu0 %v898
    %1900 = vmatpush1.msra.mxu0 %v897
    %1901 = vmatprep.subr.mxu0 %v894
    %1902 = vmatpush1.msra.mxu0 %v893
    %1903 = vmatprep.subr.mxu0 %v890
    %1904 = vmatpush1.msra.mxu0 %v889
    %1905 = vmatprep.subr.mxu0 %v886
    %1906 = vmatpush1.msra.mxu0 %v885
    %1907 = vmatprep.subr.mxu0 %v882
    %1908 = vmatpush1.msra.mxu0 %v881
    %1909 = vmatprep.subr.mxu0 %v878
    %1910 = vmatpush1.msra.mxu0 %v877
    %1911 = vmatprep.subr.mxu0 %v874
    %1912 = vmatpush1.msra.mxu0 %v873
    %1913 = vmatprep.subr.mxu0 %v870
    %1914 = vmatpush1.msra.mxu0 %v869
    %1915 = vmatprep.subr.mxu0 0.0
    %1916 = vmatpush2.msra.mxu0 0.0
    %1917 = vmatprep.subr.mxu0 0.0
    %1918 = vmatpush2.msra.mxu0 0.0
    %1919 = vmatprep.subr.mxu0 0.0
    %1920 = vmatpush2.msra.mxu0 0.0
    %1921 = vmatprep.subr.mxu0 0.0
    %1922 = vmatpush2.msra.mxu0 0.0
    %1923 = vmatprep.subr.mxu0 0.0
    %1924 = vmatpush2.msra.mxu0 0.0
    %1925 = vmatprep.subr.mxu0 0.0
    %1926 = vmatpush2.msra.mxu0 0.0
    %1927 = vmatprep.subr.mxu0 0.0
    %1928 = vmatpush2.msra.mxu0 0.0
    %1929 = vmatprep.subr.mxu0 0.0
    %1930 = vmatpush2.msra.mxu0 0.0
    %1931 = vmatprep.subr.mxu0 0.0
    %1932 = vmatpush2.msra.mxu0 0.0
    %1933 = vmatprep.subr.mxu0 0.0
    %1934 = vmatpush2.msra.mxu0 0.0
    %1935 = vmatprep.subr.mxu0 0.0
    %1936 = vmatpush2.msra.mxu0 0.0
    %1937 = vmatprep.subr.mxu0 0.0
    %1938 = vmatpush2.msra.mxu0 0.0
    %1939 = vmatprep.subr.mxu0 0.0
    %1940 = vmatpush2.msra.mxu0 0.0
    %1941 = vmatprep.subr.mxu0 0.0
    %1942 = vmatpush2.msra.mxu0 0.0
    %1943 = vmatprep.subr.mxu0 0.0
    %1944 = vmatpush2.msra.mxu0 0.0
    %1945 = vmatprep.subr.mxu0 0.0
    %1946 = vmatpush2.msra.mxu0 0.0
    %1947 = vmatprep.mubr.f32.mxu0 0.0
    %1948 = vmatmul.mubr.f32.gmra.mxu0 %v1873
    %v1949 = vpop.f32.mrf.mxu0
    %v1950 = vadd.f32 0.0, %v1949
    %v1951 = vpop.f32.mrf.mxu0
    %v1952 = vadd.f32 0.0, %v1951
    %1953 = vdwg.mxu0
    %1954 = vmatprep.subr.mxu0 %v932
    %1955 = vmatpush1.msra.mxu0 %v931
    %1956 = vmatprep.subr.mxu0 %v928
    %1957 = vmatpush1.msra.mxu0 %v927
    %1958 = vmatprep.subr.mxu0 %v924
    %1959 = vmatpush1.msra.mxu0 %v923
    %1960 = vmatprep.subr.mxu0 %v920
    %1961 = vmatpush1.msra.mxu0 %v919
    %1962 = vmatprep.subr.mxu0 %v916
    %1963 = vmatpush1.msra.mxu0 %v915
    %1964 = vmatprep.subr.mxu0 %v912
    %1965 = vmatpush1.msra.mxu0 %v911
    %1966 = vmatprep.subr.mxu0 %v908
    %1967 = vmatpush1.msra.mxu0 %v907
    %1968 = vmatprep.subr.mxu0 %v904
    %1969 = vmatpush1.msra.mxu0 %v903
    %1970 = vmatprep.subr.mxu0 %v900
    %1971 = vmatpush1.msra.mxu0 %v899
    %1972 = vmatprep.subr.mxu0 %v896
    %1973 = vmatpush1.msra.mxu0 %v895
    %1974 = vmatprep.subr.mxu0 %v892
    %1975 = vmatpush1.msra.mxu0 %v891
    %1976 = vmatprep.subr.mxu0 %v888
    %1977 = vmatpush1.msra.mxu0 %v887
    %1978 = vmatprep.subr.mxu0 %v884
    %1979 = vmatpush1.msra.mxu0 %v883
    %1980 = vmatprep.subr.mxu0 %v880
    %1981 = vmatpush1.msra.mxu0 %v879
    %1982 = vmatprep.subr.mxu0 %v876
    %1983 = vmatpush1.msra.mxu0 %v875
    %1984 = vmatprep.subr.mxu0 %v872
    %1985 = vmatpush1.msra.mxu0 %v871
    %1986 = vmatprep.subr.mxu0 0.0
    %1987 = vmatpush2.msra.mxu0 0.0
    %1988 = vmatprep.subr.mxu0 0.0
    %1989 = vmatpush2.msra.mxu0 0.0
    %1990 = vmatprep.subr.mxu0 0.0
    %1991 = vmatpush2.msra.mxu0 0.0
    %1992 = vmatprep.subr.mxu0 0.0
    %1993 = vmatpush2.msra.mxu0 0.0
    %1994 = vmatprep.subr.mxu0 0.0
    %1995 = vmatpush2.msra.mxu0 0.0
    %1996 = vmatprep.subr.mxu0 0.0
    %1997 = vmatpush2.msra.mxu0 0.0
    %1998 = vmatprep.subr.mxu0 0.0
    %1999 = vmatpush2.msra.mxu0 0.0
    %2000 = vmatprep.subr.mxu0 0.0
    %2001 = vmatpush2.msra.mxu0 0.0
    %2002 = vmatprep.subr.mxu0 0.0
    %2003 = vmatpush2.msra.mxu0 0.0
    %2004 = vmatprep.subr.mxu0 0.0
    %2005 = vmatpush2.msra.mxu0 0.0
    %2006 = vmatprep.subr.mxu0 0.0
    %2007 = vmatpush2.msra.mxu0 0.0
    %2008 = vmatprep.subr.mxu0 0.0
    %2009 = vmatpush2.msra.mxu0 0.0
    %2010 = vmatprep.subr.mxu0 0.0
    %2011 = vmatpush2.msra.mxu0 0.0
    %2012 = vmatprep.subr.mxu0 0.0
    %2013 = vmatpush2.msra.mxu0 0.0
    %2014 = vmatprep.subr.mxu0 0.0
    %2015 = vmatpush2.msra.mxu0 0.0
    %2016 = vmatprep.subr.mxu0 0.0
    %2017 = vmatpush2.msra.mxu0 0.0
    %2018 = vmatprep.mubr.f32.mxu0 0.0
    %2019 = vmatmul.mubr.f32.gmra.mxu0 %v1873
    %v2020 = vpop.f32.mrf.mxu0
    %v2021 = vadd.f32 0.0, %v2020
    %v2022 = vpop.f32.mrf.mxu0
    %v2023 = vadd.f32 0.0, %v2022
    %2024 = vdwg.mxu0
    %v2025 = vadd.f32 %v1879, %v1950
    %v2026 = vadd.f32 %v1880, %v1952
    %v2027 = vadd.f32 %v1881, %v2021
    %v2028 = vadd.f32 %v1882, %v2023
    %v2029 = vxor.u32 %v2025, 2147483648
    %v2030 = vmul.f32 %v2029, 1.442695
    %v2031 = vpow.pop %v2030
    %v2032 = vadd.f32 %v2031, 1.0
    %v2033 = vrcp.pop %v2032
    %v2034 = vmul.f32 1.0, %v2033
    %v2035 = vxor.u32 %v2026, 2147483648
    %v2036 = vmul.f32 %v2035, 1.442695
    %v2037 = vpow.pop %v2036
    %v2038 = vadd.f32 %v2037, 1.0
    %v2039 = vrcp.pop %v2038
    %v2040 = vmul.f32 1.0, %v2039
    %v2041 = vtanh.pop %v2027
    %v2042 = vxor.u32 %v2028, 2147483648
    %v2043 = vmul.f32 %v2042, 1.442695
    %v2044 = vpow.pop %v2043
    %v2045 = vadd.f32 %v2044, 1.0
    %v2046 = vrcp.pop %v2045
    %v2047 = vmul.f32 1.0, %v2046
    %v2048 = vmul.f32 %v2040, %v1871
    %v2049 = vmul.f32 %v2034, %v2041
    %v2050 = vadd.f32 %v2048, %v2049
    %v2051 = vtanh.pop %v2050
    %v2052 = vmul.f32 %v2047, %v2051
    %s2053 = scalar_lea.vmem [#allocation4], 40
    %2054 = vst [vmem:[%s2053] sm:$0xff] %v2052
    %s2055 = smul.u32 6, 4
    %s2056 = smul.addr %s2055, 8
    %s2057 = scalar_lea.vmem [#allocation2], %s2056
    %v2058 = vld [vmem:[%s2057] sm:$0xff]
    %v2059 = vld [vmem:[%s2057 + $0x8] sm:$0xff]
    %v2060 = vld [vmem:[%s2057 + $0x10] sm:$0xff]
    %v2061 = vld [vmem:[%s2057 + $0x18] sm:$0xff]
    %2062 = vmatprep.subr.mxu0 %v930
    %2063 = vmatpush1.msra.mxu0 %v929
    %2064 = vmatprep.subr.mxu0 %v926
    %2065 = vmatpush1.msra.mxu0 %v925
    %2066 = vmatprep.subr.mxu0 %v922
    %2067 = vmatpush1.msra.mxu0 %v921
    %2068 = vmatprep.subr.mxu0 %v918
    %2069 = vmatpush1.msra.mxu0 %v917
    %2070 = vmatprep.subr.mxu0 %v914
    %2071 = vmatpush1.msra.mxu0 %v913
    %2072 = vmatprep.subr.mxu0 %v910
    %2073 = vmatpush1.msra.mxu0 %v909
    %2074 = vmatprep.subr.mxu0 %v906
    %2075 = vmatpush1.msra.mxu0 %v905
    %2076 = vmatprep.subr.mxu0 %v902
    %2077 = vmatpush1.msra.mxu0 %v901
    %2078 = vmatprep.subr.mxu0 %v898
    %2079 = vmatpush1.msra.mxu0 %v897
    %2080 = vmatprep.subr.mxu0 %v894
    %2081 = vmatpush1.msra.mxu0 %v893
    %2082 = vmatprep.subr.mxu0 %v890
    %2083 = vmatpush1.msra.mxu0 %v889
    %2084 = vmatprep.subr.mxu0 %v886
    %2085 = vmatpush1.msra.mxu0 %v885
    %2086 = vmatprep.subr.mxu0 %v882
    %2087 = vmatpush1.msra.mxu0 %v881
    %2088 = vmatprep.subr.mxu0 %v878
    %2089 = vmatpush1.msra.mxu0 %v877
    %2090 = vmatprep.subr.mxu0 %v874
    %2091 = vmatpush1.msra.mxu0 %v873
    %2092 = vmatprep.subr.mxu0 %v870
    %2093 = vmatpush1.msra.mxu0 %v869
    %2094 = vmatprep.subr.mxu0 0.0
    %2095 = vmatpush2.msra.mxu0 0.0
    %2096 = vmatprep.subr.mxu0 0.0
    %2097 = vmatpush2.msra.mxu0 0.0
    %2098 = vmatprep.subr.mxu0 0.0
    %2099 = vmatpush2.msra.mxu0 0.0
    %2100 = vmatprep.subr.mxu0 0.0
    %2101 = vmatpush2.msra.mxu0 0.0
    %2102 = vmatprep.subr.mxu0 0.0
    %2103 = vmatpush2.msra.mxu0 0.0
    %2104 = vmatprep.subr.mxu0 0.0
    %2105 = vmatpush2.msra.mxu0 0.0
    %2106 = vmatprep.subr.mxu0 0.0
    %2107 = vmatpush2.msra.mxu0 0.0
    %2108 = vmatprep.subr.mxu0 0.0
    %2109 = vmatpush2.msra.mxu0 0.0
    %2110 = vmatprep.subr.mxu0 0.0
    %2111 = vmatpush2.msra.mxu0 0.0
    %2112 = vmatprep.subr.mxu0 0.0
    %2113 = vmatpush2.msra.mxu0 0.0
    %2114 = vmatprep.subr.mxu0 0.0
    %2115 = vmatpush2.msra.mxu0 0.0
    %2116 = vmatprep.subr.mxu0 0.0
    %2117 = vmatpush2.msra.mxu0 0.0
    %2118 = vmatprep.subr.mxu0 0.0
    %2119 = vmatpush2.msra.mxu0 0.0
    %2120 = vmatprep.subr.mxu0 0.0
    %2121 = vmatpush2.msra.mxu0 0.0
    %2122 = vmatprep.subr.mxu0 0.0
    %2123 = vmatpush2.msra.mxu0 0.0
    %2124 = vmatprep.subr.mxu0 0.0
    %2125 = vmatpush2.msra.mxu0 0.0
    %2126 = vmatprep.mubr.f32.mxu0 0.0
    %2127 = vmatmul.mubr.f32.gmra.mxu0 %v2052
    %v2128 = vpop.f32.mrf.mxu0
    %v2129 = vadd.f32 0.0, %v2128
    %v2130 = vpop.f32.mrf.mxu0
    %v2131 = vadd.f32 0.0, %v2130
    %2132 = vdwg.mxu0
    %2133 = vmatprep.subr.mxu0 %v932
    %2134 = vmatpush1.msra.mxu0 %v931
    %2135 = vmatprep.subr.mxu0 %v928
    %2136 = vmatpush1.msra.mxu0 %v927
    %2137 = vmatprep.subr.mxu0 %v924
    %2138 = vmatpush1.msra.mxu0 %v923
    %2139 = vmatprep.subr.mxu0 %v920
    %2140 = vmatpush1.msra.mxu0 %v919
    %2141 = vmatprep.subr.mxu0 %v916
    %2142 = vmatpush1.msra.mxu0 %v915
    %2143 = vmatprep.subr.mxu0 %v912
    %2144 = vmatpush1.msra.mxu0 %v911
    %2145 = vmatprep.subr.mxu0 %v908
    %2146 = vmatpush1.msra.mxu0 %v907
    %2147 = vmatprep.subr.mxu0 %v904
    %2148 = vmatpush1.msra.mxu0 %v903
    %2149 = vmatprep.subr.mxu0 %v900
    %2150 = vmatpush1.msra.mxu0 %v899
    %2151 = vmatprep.subr.mxu0 %v896
    %2152 = vmatpush1.msra.mxu0 %v895
    %2153 = vmatprep.subr.mxu0 %v892
    %2154 = vmatpush1.msra.mxu0 %v891
    %2155 = vmatprep.subr.mxu0 %v888
    %2156 = vmatpush1.msra.mxu0 %v887
    %2157 = vmatprep.subr.mxu0 %v884
    %2158 = vmatpush1.msra.mxu0 %v883
    %2159 = vmatprep.subr.mxu0 %v880
    %2160 = vmatpush1.msra.mxu0 %v879
    %2161 = vmatprep.subr.mxu0 %v876
    %2162 = vmatpush1.msra.mxu0 %v875
    %2163 = vmatprep.subr.mxu0 %v872
    %2164 = vmatpush1.msra.mxu0 %v871
    %2165 = vmatprep.subr.mxu0 0.0
    %2166 = vmatpush2.msra.mxu0 0.0
    %2167 = vmatprep.subr.mxu0 0.0
    %2168 = vmatpush2.msra.mxu0 0.0
    %2169 = vmatprep.subr.mxu0 0.0
    %2170 = vmatpush2.msra.mxu0 0.0
    %2171 = vmatprep.subr.mxu0 0.0
    %2172 = vmatpush2.msra.mxu0 0.0
    %2173 = vmatprep.subr.mxu0 0.0
    %2174 = vmatpush2.msra.mxu0 0.0
    %2175 = vmatprep.subr.mxu0 0.0
    %2176 = vmatpush2.msra.mxu0 0.0
    %2177 = vmatprep.subr.mxu0 0.0
    %2178 = vmatpush2.msra.mxu0 0.0
    %2179 = vmatprep.subr.mxu0 0.0
    %2180 = vmatpush2.msra.mxu0 0.0
    %2181 = vmatprep.subr.mxu0 0.0
    %2182 = vmatpush2.msra.mxu0 0.0
    %2183 = vmatprep.subr.mxu0 0.0
    %2184 = vmatpush2.msra.mxu0 0.0
    %2185 = vmatprep.subr.mxu0 0.0
    %2186 = vmatpush2.msra.mxu0 0.0
    %2187 = vmatprep.subr.mxu0 0.0
    %2188 = vmatpush2.msra.mxu0 0.0
    %2189 = vmatprep.subr.mxu0 0.0
    %2190 = vmatpush2.msra.mxu0 0.0
    %2191 = vmatprep.subr.mxu0 0.0
    %2192 = vmatpush2.msra.mxu0 0.0
    %2193 = vmatprep.subr.mxu0 0.0
    %2194 = vmatpush2.msra.mxu0 0.0
    %2195 = vmatprep.subr.mxu0 0.0
    %2196 = vmatpush2.msra.mxu0 0.0
    %2197 = vmatprep.mubr.f32.mxu0 0.0
    %2198 = vmatmul.mubr.f32.gmra.mxu0 %v2052
    %v2199 = vpop.f32.mrf.mxu0
    %v2200 = vadd.f32 0.0, %v2199
    %v2201 = vpop.f32.mrf.mxu0
    %v2202 = vadd.f32 0.0, %v2201
    %2203 = vdwg.mxu0
    %v2204 = vadd.f32 %v2058, %v2129
    %v2205 = vadd.f32 %v2059, %v2131
    %v2206 = vadd.f32 %v2060, %v2200
    %v2207 = vadd.f32 %v2061, %v2202
    %v2208 = vxor.u32 %v2204, 2147483648
    %v2209 = vmul.f32 %v2208, 1.442695
    %v2210 = vpow.pop %v2209
    %v2211 = vadd.f32 %v2210, 1.0
    %v2212 = vrcp.pop %v2211
    %v2213 = vmul.f32 1.0, %v2212
    %v2214 = vxor.u32 %v2205, 2147483648
    %v2215 = vmul.f32 %v2214, 1.442695
    %v2216 = vpow.pop %v2215
    %v2217 = vadd.f32 %v2216, 1.0
    %v2218 = vrcp.pop %v2217
    %v2219 = vmul.f32 1.0, %v2218
    %v2220 = vtanh.pop %v2206
    %v2221 = vxor.u32 %v2207, 2147483648
    %v2222 = vmul.f32 %v2221, 1.442695
    %v2223 = vpow.pop %v2222
    %v2224 = vadd.f32 %v2223, 1.0
    %v2225 = vrcp.pop %v2224
    %v2226 = vmul.f32 1.0, %v2225
    %v2227 = vmul.f32 %v2219, %v2050
    %v2228 = vmul.f32 %v2213, %v2220
    %v2229 = vadd.f32 %v2227, %v2228
    %v2230 = vtanh.pop %v2229
    %v2231 = vmul.f32 %v2226, %v2230
    %s2232 = scalar_lea.vmem [#allocation4], 48
    %2233 = vst [vmem:[%s2232] sm:$0xff] %v2231
    %s2234 = smul.u32 7, 4
    %s2235 = smul.addr %s2234, 8
    %s2236 = scalar_lea.vmem [#allocation2], %s2235
    %v2237 = vld [vmem:[%s2236] sm:$0xff]
    %v2238 = vld [vmem:[%s2236 + $0x8] sm:$0xff]
    %v2239 = vld [vmem:[%s2236 + $0x10] sm:$0xff]
    %v2240 = vld [vmem:[%s2236 + $0x18] sm:$0xff]
    %2241 = vmatprep.subr.mxu0 %v930
    %2242 = vmatpush1.msra.mxu0 %v929
    %2243 = vmatprep.subr.mxu0 %v926
    %2244 = vmatpush1.msra.mxu0 %v925
    %2245 = vmatprep.subr.mxu0 %v922
    %2246 = vmatpush1.msra.mxu0 %v921
    %2247 = vmatprep.subr.mxu0 %v918
    %2248 = vmatpush1.msra.mxu0 %v917
    %2249 = vmatprep.subr.mxu0 %v914
    %2250 = vmatpush1.msra.mxu0 %v913
    %2251 = vmatprep.subr.mxu0 %v910
    %2252 = vmatpush1.msra.mxu0 %v909
    %2253 = vmatprep.subr.mxu0 %v906
    %2254 = vmatpush1.msra.mxu0 %v905
    %2255 = vmatprep.subr.mxu0 %v902
    %2256 = vmatpush1.msra.mxu0 %v901
    %2257 = vmatprep.subr.mxu0 %v898
    %2258 = vmatpush1.msra.mxu0 %v897
    %2259 = vmatprep.subr.mxu0 %v894
    %2260 = vmatpush1.msra.mxu0 %v893
    %2261 = vmatprep.subr.mxu0 %v890
    %2262 = vmatpush1.msra.mxu0 %v889
    %2263 = vmatprep.subr.mxu0 %v886
    %2264 = vmatpush1.msra.mxu0 %v885
    %2265 = vmatprep.subr.mxu0 %v882
    %2266 = vmatpush1.msra.mxu0 %v881
    %2267 = vmatprep.subr.mxu0 %v878
    %2268 = vmatpush1.msra.mxu0 %v877
    %2269 = vmatprep.subr.mxu0 %v874
    %2270 = vmatpush1.msra.mxu0 %v873
    %2271 = vmatprep.subr.mxu0 %v870
    %2272 = vmatpush1.msra.mxu0 %v869
    %2273 = vmatprep.subr.mxu0 0.0
    %2274 = vmatpush2.msra.mxu0 0.0
    %2275 = vmatprep.subr.mxu0 0.0
    %2276 = vmatpush2.msra.mxu0 0.0
    %2277 = vmatprep.subr.mxu0 0.0
    %2278 = vmatpush2.msra.mxu0 0.0
    %2279 = vmatprep.subr.mxu0 0.0
    %2280 = vmatpush2.msra.mxu0 0.0
    %2281 = vmatprep.subr.mxu0 0.0
    %2282 = vmatpush2.msra.mxu0 0.0
    %2283 = vmatprep.subr.mxu0 0.0
    %2284 = vmatpush2.msra.mxu0 0.0
    %2285 = vmatprep.subr.mxu0 0.0
    %2286 = vmatpush2.msra.mxu0 0.0
    %2287 = vmatprep.subr.mxu0 0.0
    %2288 = vmatpush2.msra.mxu0 0.0
    %2289 = vmatprep.subr.mxu0 0.0
    %2290 = vmatpush2.msra.mxu0 0.0
    %2291 = vmatprep.subr.mxu0 0.0
    %2292 = vmatpush2.msra.mxu0 0.0
    %2293 = vmatprep.subr.mxu0 0.0
    %2294 = vmatpush2.msra.mxu0 0.0
    %2295 = vmatprep.subr.mxu0 0.0
    %2296 = vmatpush2.msra.mxu0 0.0
    %2297 = vmatprep.subr.mxu0 0.0
    %2298 = vmatpush2.msra.mxu0 0.0
    %2299 = vmatprep.subr.mxu0 0.0
    %2300 = vmatpush2.msra.mxu0 0.0
    %2301 = vmatprep.subr.mxu0 0.0
    %2302 = vmatpush2.msra.mxu0 0.0
    %2303 = vmatprep.subr.mxu0 0.0
    %2304 = vmatpush2.msra.mxu0 0.0
    %2305 = vmatprep.mubr.f32.mxu0 0.0
    %2306 = vmatmul.mubr.f32.gmra.mxu0 %v2231
    %v2307 = vpop.f32.mrf.mxu0
    %v2308 = vadd.f32 0.0, %v2307
    %v2309 = vpop.f32.mrf.mxu0
    %v2310 = vadd.f32 0.0, %v2309
    %2311 = vdwg.mxu0
    %2312 = vmatprep.subr.mxu0 %v932
    %2313 = vmatpush1.msra.mxu0 %v931
    %2314 = vmatprep.subr.mxu0 %v928
    %2315 = vmatpush1.msra.mxu0 %v927
    %2316 = vmatprep.subr.mxu0 %v924
    %2317 = vmatpush1.msra.mxu0 %v923
    %2318 = vmatprep.subr.mxu0 %v920
    %2319 = vmatpush1.msra.mxu0 %v919
    %2320 = vmatprep.subr.mxu0 %v916
    %2321 = vmatpush1.msra.mxu0 %v915
    %2322 = vmatprep.subr.mxu0 %v912
    %2323 = vmatpush1.msra.mxu0 %v911
    %2324 = vmatprep.subr.mxu0 %v908
    %2325 = vmatpush1.msra.mxu0 %v907
    %2326 = vmatprep.subr.mxu0 %v904
    %2327 = vmatpush1.msra.mxu0 %v903
    %2328 = vmatprep.subr.mxu0 %v900
    %2329 = vmatpush1.msra.mxu0 %v899
    %2330 = vmatprep.subr.mxu0 %v896
    %2331 = vmatpush1.msra.mxu0 %v895
    %2332 = vmatprep.subr.mxu0 %v892
    %2333 = vmatpush1.msra.mxu0 %v891
    %2334 = vmatprep.subr.mxu0 %v888
    %2335 = vmatpush1.msra.mxu0 %v887
    %2336 = vmatprep.subr.mxu0 %v884
    %2337 = vmatpush1.msra.mxu0 %v883
    %2338 = vmatprep.subr.mxu0 %v880
    %2339 = vmatpush1.msra.mxu0 %v879
    %2340 = vmatprep.subr.mxu0 %v876
    %2341 = vmatpush1.msra.mxu0 %v875
    %2342 = vmatprep.subr.mxu0 %v872
    %2343 = vmatpush1.msra.mxu0 %v871
    %2344 = vmatprep.subr.mxu0 0.0
    %2345 = vmatpush2.msra.mxu0 0.0
    %2346 = vmatprep.subr.mxu0 0.0
    %2347 = vmatpush2.msra.mxu0 0.0
    %2348 = vmatprep.subr.mxu0 0.0
    %2349 = vmatpush2.msra.mxu0 0.0
    %2350 = vmatprep.subr.mxu0 0.0
    %2351 = vmatpush2.msra.mxu0 0.0
    %2352 = vmatprep.subr.mxu0 0.0
    %2353 = vmatpush2.msra.mxu0 0.0
    %2354 = vmatprep.subr.mxu0 0.0
    %2355 = vmatpush2.msra.mxu0 0.0
    %2356 = vmatprep.subr.mxu0 0.0
    %2357 = vmatpush2.msra.mxu0 0.0
    %2358 = vmatprep.subr.mxu0 0.0
    %2359 = vmatpush2.msra.mxu0 0.0
    %2360 = vmatprep.subr.mxu0 0.0
    %2361 = vmatpush2.msra.mxu0 0.0
    %2362 = vmatprep.subr.mxu0 0.0
    %2363 = vmatpush2.msra.mxu0 0.0
    %2364 = vmatprep.subr.mxu0 0.0
    %2365 = vmatpush2.msra.mxu0 0.0
    %2366 = vmatprep.subr.mxu0 0.0
    %2367 = vmatpush2.msra.mxu0 0.0
    %2368 = vmatprep.subr.mxu0 0.0
    %2369 = vmatpush2.msra.mxu0 0.0
    %2370 = vmatprep.subr.mxu0 0.0
    %2371 = vmatpush2.msra.mxu0 0.0
    %2372 = vmatprep.subr.mxu0 0.0
    %2373 = vmatpush2.msra.mxu0 0.0
    %2374 = vmatprep.subr.mxu0 0.0
    %2375 = vmatpush2.msra.mxu0 0.0
    %2376 = vmatprep.mubr.f32.mxu0 0.0
    %2377 = vmatmul.mubr.f32.gmra.mxu0 %v2231
    %v2378 = vpop.f32.mrf.mxu0
    %v2379 = vadd.f32 0.0, %v2378
    %v2380 = vpop.f32.mrf.mxu0
    %v2381 = vadd.f32 0.0, %v2380
    %2382 = vdwg.mxu0
    %v2383 = vadd.f32 %v2237, %v2308
    %v2384 = vadd.f32 %v2238, %v2310
    %v2385 = vadd.f32 %v2239, %v2379
    %v2386 = vadd.f32 %v2240, %v2381
    %v2387 = vxor.u32 %v2383, 2147483648
    %v2388 = vmul.f32 %v2387, 1.442695
    %v2389 = vpow.pop %v2388
    %v2390 = vadd.f32 %v2389, 1.0
    %v2391 = vrcp.pop %v2390
    %v2392 = vmul.f32 1.0, %v2391
    %v2393 = vxor.u32 %v2384, 2147483648
    %v2394 = vmul.f32 %v2393, 1.442695
    %v2395 = vpow.pop %v2394
    %v2396 = vadd.f32 %v2395, 1.0
    %v2397 = vrcp.pop %v2396
    %v2398 = vmul.f32 1.0, %v2397
    %v2399 = vtanh.pop %v2385
    %v2400 = vxor.u32 %v2386, 2147483648
    %v2401 = vmul.f32 %v2400, 1.442695
    %v2402 = vpow.pop %v2401
    %v2403 = vadd.f32 %v2402, 1.0
    %v2404 = vrcp.pop %v2403
    %v2405 = vmul.f32 1.0, %v2404
    %v2406 = vmul.f32 %v2398, %v2229
    %v2407 = vmul.f32 %v2392, %v2399
    %v2408 = vadd.f32 %v2406, %v2407
    %v2409 = vtanh.pop %v2408
    %v2410 = vmul.f32 %v2405, %v2409
    %s2411 = scalar_lea.vmem [#allocation4], 56
    %2412 = vst [vmem:[%s2411] sm:$0xff] %v2410
    %s2413 = smul.u32 0, 3
    %s2414 = smul.addr %s2413, 8
    %s2415 = scalar_lea.vmem [#allocation3], %s2414
    %v2416 = vld [vmem:[%s2415] sm:$0xff]
    %v2417 = vld [vmem:[%s2415 + $0x8] sm:$0xff]
    %v2418 = vld [vmem:[%s2415 + $0x10] sm:$0xff]
    %v2420 = vlaneseq
    %v2421 = vshrl.u32 %v2420, 7
    %v2422 = vsub.s32 0, %v2421
    %v2423 = vrot.slane %v981, %v2422
    %v2424 = vlaneseq
    %v2425 = vshrl.u32 %v2424, 7
    %v2426 = vsub.s32 1, %v2425
    %v2427 = vrot.slane %v981, %v2426
    %v2428 = vlaneseq
    %v2429 = vshrl.u32 %v2428, 7
    %v2430 = vsub.s32 2, %v2429
    %v2431 = vrot.slane %v981, %v2430
    %2435 = vmatprep.subr.mxu0 %v979
    %2436 = vmatpush1.msra.mxu0 %v978
    %2437 = vmatprep.subr.mxu0 %v976
    %2438 = vmatpush1.msra.mxu0 %v975
    %2439 = vmatprep.subr.mxu0 %v973
    %2440 = vmatpush1.msra.mxu0 %v972
    %2441 = vmatprep.subr.mxu0 %v970
    %2442 = vmatpush1.msra.mxu0 %v969
    %2443 = vmatprep.subr.mxu0 %v967
    %2444 = vmatpush1.msra.mxu0 %v966
    %2445 = vmatprep.subr.mxu0 %v964
    %2446 = vmatpush1.msra.mxu0 %v963
    %2447 = vmatprep.subr.mxu0 %v961
    %2448 = vmatpush1.msra.mxu0 %v960
    %2449 = vmatprep.subr.mxu0 %v958
    %2450 = vmatpush1.msra.mxu0 %v957
    %2451 = vmatprep.subr.mxu0 %v955
    %2452 = vmatpush1.msra.mxu0 %v954
    %2453 = vmatprep.subr.mxu0 %v952
    %2454 = vmatpush1.msra.mxu0 %v951
    %2455 = vmatprep.subr.mxu0 %v949
    %2456 = vmatpush1.msra.mxu0 %v948
    %2457 = vmatprep.subr.mxu0 %v946
    %2458 = vmatpush1.msra.mxu0 %v945
    %2459 = vmatprep.subr.mxu0 %v943
    %2460 = vmatpush1.msra.mxu0 %v942
    %2461 = vmatprep.subr.mxu0 %v940
    %2462 = vmatpush1.msra.mxu0 %v939
    %2463 = vmatprep.subr.mxu0 %v937
    %2464 = vmatpush1.msra.mxu0 %v936
    %2465 = vmatprep.subr.mxu0 %v934
    %2466 = vmatpush1.msra.mxu0 %v933
    %2467 = vmatprep.subr.mxu0 0.0
    %2468 = vmatpush2.msra.mxu0 0.0
    %2469 = vmatprep.subr.mxu0 0.0
    %2470 = vmatpush2.msra.mxu0 0.0
    %2471 = vmatprep.subr.mxu0 0.0
    %2472 = vmatpush2.msra.mxu0 0.0
    %2473 = vmatprep.subr.mxu0 0.0
    %2474 = vmatpush2.msra.mxu0 0.0
    %2475 = vmatprep.subr.mxu0 0.0
    %2476 = vmatpush2.msra.mxu0 0.0
    %2477 = vmatprep.subr.mxu0 0.0
    %2478 = vmatpush2.msra.mxu0 0.0
    %2479 = vmatprep.subr.mxu0 0.0
    %2480 = vmatpush2.msra.mxu0 0.0
    %2481 = vmatprep.subr.mxu0 0.0
    %2482 = vmatpush2.msra.mxu0 0.0
    %2483 = vmatprep.subr.mxu0 0.0
    %2484 = vmatpush2.msra.mxu0 0.0
    %2485 = vmatprep.subr.mxu0 0.0
    %2486 = vmatpush2.msra.mxu0 0.0
    %2487 = vmatprep.subr.mxu0 0.0
    %2488 = vmatpush2.msra.mxu0 0.0
    %2489 = vmatprep.subr.mxu0 0.0
    %2490 = vmatpush2.msra.mxu0 0.0
    %2491 = vmatprep.subr.mxu0 0.0
    %2492 = vmatpush2.msra.mxu0 0.0
    %2493 = vmatprep.subr.mxu0 0.0
    %2494 = vmatpush2.msra.mxu0 0.0
    %2495 = vmatprep.subr.mxu0 0.0
    %2496 = vmatpush2.msra.mxu0 0.0
    %2497 = vmatprep.subr.mxu0 0.0
    %2498 = vmatpush2.msra.mxu0 0.0
    %2499 = vmatprep.mubr.f32.mxu0 0.0
    %2500 = vmatmul.mubr.f32.gmra.mxu0 %v2410
    %v2501 = vpop.f32.mrf.mxu0
    %v2502 = vadd.f32 %v2423, %v2501
    %v2503 = vpop.f32.mrf.mxu0
    %v2504 = vadd.f32 %v2427, %v2503
    %2505 = vdwg.mxu0
    %2506 = vmatprep.subr.mxu0 0.0
    %2507 = vmatpush1.msra.mxu0 %v980
    %2508 = vmatprep.subr.mxu0 0.0
    %2509 = vmatpush1.msra.mxu0 %v977
    %2510 = vmatprep.subr.mxu0 0.0
    %2511 = vmatpush1.msra.mxu0 %v974
    %2512 = vmatprep.subr.mxu0 0.0
    %2513 = vmatpush1.msra.mxu0 %v971
    %2514 = vmatprep.subr.mxu0 0.0
    %2515 = vmatpush1.msra.mxu0 %v968
    %2516 = vmatprep.subr.mxu0 0.0
    %2517 = vmatpush1.msra.mxu0 %v965
    %2518 = vmatprep.subr.mxu0 0.0
    %2519 = vmatpush1.msra.mxu0 %v962
    %2520 = vmatprep.subr.mxu0 0.0
    %2521 = vmatpush1.msra.mxu0 %v959
    %2522 = vmatprep.subr.mxu0 0.0
    %2523 = vmatpush1.msra.mxu0 %v956
    %2524 = vmatprep.subr.mxu0 0.0
    %2525 = vmatpush1.msra.mxu0 %v953
    %2526 = vmatprep.subr.mxu0 0.0
    %2527 = vmatpush1.msra.mxu0 %v950
    %2528 = vmatprep.subr.mxu0 0.0
    %2529 = vmatpush1.msra.mxu0 %v947
    %2530 = vmatprep.subr.mxu0 0.0
    %2531 = vmatpush1.msra.mxu0 %v944
    %2532 = vmatprep.subr.mxu0 0.0
    %2533 = vmatpush1.msra.mxu0 %v941
    %2534 = vmatprep.subr.mxu0 0.0
    %2535 = vmatpush1.msra.mxu0 %v938
    %2536 = vmatprep.subr.mxu0 0.0
    %2537 = vmatpush1.msra.mxu0 %v935
    %2538 = vmatprep.subr.mxu0 0.0
    %2539 = vmatpush2.msra.mxu0 0.0
    %2540 = vmatprep.subr.mxu0 0.0
    %2541 = vmatpush2.msra.mxu0 0.0
    %2542 = vmatprep.subr.mxu0 0.0
    %2543 = vmatpush2.msra.mxu0 0.0
    %2544 = vmatprep.subr.mxu0 0.0
    %2545 = vmatpush2.msra.mxu0 0.0
    %2546 = vmatprep.subr.mxu0 0.0
    %2547 = vmatpush2.msra.mxu0 0.0
    %2548 = vmatprep.subr.mxu0 0.0
    %2549 = vmatpush2.msra.mxu0 0.0
    %2550 = vmatprep.subr.mxu0 0.0
    %2551 = vmatpush2.msra.mxu0 0.0
    %2552 = vmatprep.subr.mxu0 0.0
    %2553 = vmatpush2.msra.mxu0 0.0
    %2554 = vmatprep.subr.mxu0 0.0
    %2555 = vmatpush2.msra.mxu0 0.0
    %2556 = vmatprep.subr.mxu0 0.0
    %2557 = vmatpush2.msra.mxu0 0.0
    %2558 = vmatprep.subr.mxu0 0.0
    %2559 = vmatpush2.msra.mxu0 0.0
    %2560 = vmatprep.subr.mxu0 0.0
    %2561 = vmatpush2.msra.mxu0 0.0
    %2562 = vmatprep.subr.mxu0 0.0
    %2563 = vmatpush2.msra.mxu0 0.0
    %2564 = vmatprep.subr.mxu0 0.0
    %2565 = vmatpush2.msra.mxu0 0.0
    %2566 = vmatprep.subr.mxu0 0.0
    %2567 = vmatpush2.msra.mxu0 0.0
    %2568 = vmatprep.subr.mxu0 0.0
    %2569 = vmatpush2.msra.mxu0 0.0
    %2570 = vmatprep.mubr.f32.mxu0 0.0
    %2571 = vmatmul.mubr.f32.gmra.mxu0 %v2410
    %v2572 = vpop.f32.mrf.mxu0
    %v2573 = vadd.f32 %v2431, %v2572
    %v2574 = vpop.f32.mrf.mxu0
    %2575 = vdwg.mxu0
    %v2576 = vadd.f32 %v2416, %v2502
    %v2577 = vxor.u32 %v2576, 2147483648
    %v2578 = vmul.f32 %v2577, 1.442695
    %v2579 = vpow.pop %v2578
    %v2580 = vadd.f32 %v2579, 1.0
    %v2581 = vrcp.pop %v2580
    %v2582 = vmul.f32 1.0, %v2581
    %v2583 = vadd.f32 %v2417, %v2504
    %v2584 = vxor.u32 %v2583, 2147483648
    %v2585 = vmul.f32 %v2584, 1.442695
    %v2586 = vpow.pop %v2585
    %v2587 = vadd.f32 %v2586, 1.0
    %v2588 = vrcp.pop %v2587
    %v2589 = vmul.f32 1.0, %v2588
    %v2590 = vmul.f32 %v2582, %v2573
    %v2591 = vadd.f32 %v2418, %v2590
    %v2592 = vtanh.pop %v2591
    %v2593 = vsub.f32 1.0, %v2589
    %v2594 = vmul.f32 %v2593, %v2592
    %v2595 = vmul.f32 %v2589, %v2410
    %v2596 = vadd.f32 %v2594, %v2595
    %v2597 = vld [vmem:[#allocation4] sm:$0xff]
    %v2598 = vadd.f32 %v2597, %v2596
    %s2599 = smul.u32 1, 3
    %s2600 = smul.addr %s2599, 8
    %s2601 = scalar_lea.vmem [#allocation3], %s2600
    %v2602 = vld [vmem:[%s2601] sm:$0xff]
    %v2603 = vld [vmem:[%s2601 + $0x8] sm:$0xff]
    %v2604 = vld [vmem:[%s2601 + $0x10] sm:$0xff]
    %2605 = vmatprep.subr.mxu0 %v979
    %2606 = vmatpush1.msra.mxu0 %v978
    %2607 = vmatprep.subr.mxu0 %v976
    %2608 = vmatpush1.msra.mxu0 %v975
    %2609 = vmatprep.subr.mxu0 %v973
    %2610 = vmatpush1.msra.mxu0 %v972
    %2611 = vmatprep.subr.mxu0 %v970
    %2612 = vmatpush1.msra.mxu0 %v969
    %2613 = vmatprep.subr.mxu0 %v967
    %2614 = vmatpush1.msra.mxu0 %v966
    %2615 = vmatprep.subr.mxu0 %v964
    %2616 = vmatpush1.msra.mxu0 %v963
    %2617 = vmatprep.subr.mxu0 %v961
    %2618 = vmatpush1.msra.mxu0 %v960
    %2619 = vmatprep.subr.mxu0 %v958
    %2620 = vmatpush1.msra.mxu0 %v957
    %2621 = vmatprep.subr.mxu0 %v955
    %2622 = vmatpush1.msra.mxu0 %v954
    %2623 = vmatprep.subr.mxu0 %v952
    %2624 = vmatpush1.msra.mxu0 %v951
    %2625 = vmatprep.subr.mxu0 %v949
    %2626 = vmatpush1.msra.mxu0 %v948
    %2627 = vmatprep.subr.mxu0 %v946
    %2628 = vmatpush1.msra.mxu0 %v945
    %2629 = vmatprep.subr.mxu0 %v943
    %2630 = vmatpush1.msra.mxu0 %v942
    %2631 = vmatprep.subr.mxu0 %v940
    %2632 = vmatpush1.msra.mxu0 %v939
    %2633 = vmatprep.subr.mxu0 %v937
    %2634 = vmatpush1.msra.mxu0 %v936
    %2635 = vmatprep.subr.mxu0 %v934
    %2636 = vmatpush1.msra.mxu0 %v933
    %2637 = vmatprep.subr.mxu0 0.0
    %2638 = vmatpush2.msra.mxu0 0.0
    %2639 = vmatprep.subr.mxu0 0.0
    %2640 = vmatpush2.msra.mxu0 0.0
    %2641 = vmatprep.subr.mxu0 0.0
    %2642 = vmatpush2.msra.mxu0 0.0
    %2643 = vmatprep.subr.mxu0 0.0
    %2644 = vmatpush2.msra.mxu0 0.0
    %2645 = vmatprep.subr.mxu0 0.0
    %2646 = vmatpush2.msra.mxu0 0.0
    %2647 = vmatprep.subr.mxu0 0.0
    %2648 = vmatpush2.msra.mxu0 0.0
    %2649 = vmatprep.subr.mxu0 0.0
    %2650 = vmatpush2.msra.mxu0 0.0
    %2651 = vmatprep.subr.mxu0 0.0
    %2652 = vmatpush2.msra.mxu0 0.0
    %2653 = vmatprep.subr.mxu0 0.0
    %2654 = vmatpush2.msra.mxu0 0.0
    %2655 = vmatprep.subr.mxu0 0.0
    %2656 = vmatpush2.msra.mxu0 0.0
    %2657 = vmatprep.subr.mxu0 0.0
    %2658 = vmatpush2.msra.mxu0 0.0
    %2659 = vmatprep.subr.mxu0 0.0
    %2660 = vmatpush2.msra.mxu0 0.0
    %2661 = vmatprep.subr.mxu0 0.0
    %2662 = vmatpush2.msra.mxu0 0.0
    %2663 = vmatprep.subr.mxu0 0.0
    %2664 = vmatpush2.msra.mxu0 0.0
    %2665 = vmatprep.subr.mxu0 0.0
    %2666 = vmatpush2.msra.mxu0 0.0
    %2667 = vmatprep.subr.mxu0 0.0
    %2668 = vmatpush2.msra.mxu0 0.0
    %2669 = vmatprep.mubr.f32.mxu0 0.0
    %2670 = vmatmul.mubr.f32.gmra.mxu0 %v2596
    %v2671 = vpop.f32.mrf.mxu0
    %v2672 = vadd.f32 %v2423, %v2671
    %v2673 = vpop.f32.mrf.mxu0
    %v2674 = vadd.f32 %v2427, %v2673
    %2675 = vdwg.mxu0
    %2676 = vmatprep.subr.mxu0 0.0
    %2677 = vmatpush1.msra.mxu0 %v980
    %2678 = vmatprep.subr.mxu0 0.0
    %2679 = vmatpush1.msra.mxu0 %v977
    %2680 = vmatprep.subr.mxu0 0.0
    %2681 = vmatpush1.msra.mxu0 %v974
    %2682 = vmatprep.subr.mxu0 0.0
    %2683 = vmatpush1.msra.mxu0 %v971
    %2684 = vmatprep.subr.mxu0 0.0
    %2685 = vmatpush1.msra.mxu0 %v968
    %2686 = vmatprep.subr.mxu0 0.0
    %2687 = vmatpush1.msra.mxu0 %v965
    %2688 = vmatprep.subr.mxu0 0.0
    %2689 = vmatpush1.msra.mxu0 %v962
    %2690 = vmatprep.subr.mxu0 0.0
    %2691 = vmatpush1.msra.mxu0 %v959
    %2692 = vmatprep.subr.mxu0 0.0
    %2693 = vmatpush1.msra.mxu0 %v956
    %2694 = vmatprep.subr.mxu0 0.0
    %2695 = vmatpush1.msra.mxu0 %v953
    %2696 = vmatprep.subr.mxu0 0.0
    %2697 = vmatpush1.msra.mxu0 %v950
    %2698 = vmatprep.subr.mxu0 0.0
    %2699 = vmatpush1.msra.mxu0 %v947
    %2700 = vmatprep.subr.mxu0 0.0
    %2701 = vmatpush1.msra.mxu0 %v944
    %2702 = vmatprep.subr.mxu0 0.0
    %2703 = vmatpush1.msra.mxu0 %v941
    %2704 = vmatprep.subr.mxu0 0.0
    %2705 = vmatpush1.msra.mxu0 %v938
    %2706 = vmatprep.subr.mxu0 0.0
    %2707 = vmatpush1.msra.mxu0 %v935
    %2708 = vmatprep.subr.mxu0 0.0
    %2709 = vmatpush2.msra.mxu0 0.0
    %2710 = vmatprep.subr.mxu0 0.0
    %2711 = vmatpush2.msra.mxu0 0.0
    %2712 = vmatprep.subr.mxu0 0.0
    %2713 = vmatpush2.msra.mxu0 0.0
    %2714 = vmatprep.subr.mxu0 0.0
    %2715 = vmatpush2.msra.mxu0 0.0
    %2716 = vmatprep.subr.mxu0 0.0
    %2717 = vmatpush2.msra.mxu0 0.0
    %2718 = vmatprep.subr.mxu0 0.0
    %2719 = vmatpush2.msra.mxu0 0.0
    %2720 = vmatprep.subr.mxu0 0.0
    %2721 = vmatpush2.msra.mxu0 0.0
    %2722 = vmatprep.subr.mxu0 0.0
    %2723 = vmatpush2.msra.mxu0 0.0
    %2724 = vmatprep.subr.mxu0 0.0
    %2725 = vmatpush2.msra.mxu0 0.0
    %2726 = vmatprep.subr.mxu0 0.0
    %2727 = vmatpush2.msra.mxu0 0.0
    %2728 = vmatprep.subr.mxu0 0.0
    %2729 = vmatpush2.msra.mxu0 0.0
    %2730 = vmatprep.subr.mxu0 0.0
    %2731 = vmatpush2.msra.mxu0 0.0
    %2732 = vmatprep.subr.mxu0 0.0
    %2733 = vmatpush2.msra.mxu0 0.0
    %2734 = vmatprep.subr.mxu0 0.0
    %2735 = vmatpush2.msra.mxu0 0.0
    %2736 = vmatprep.subr.mxu0 0.0
    %2737 = vmatpush2.msra.mxu0 0.0
    %2738 = vmatprep.subr.mxu0 0.0
    %2739 = vmatpush2.msra.mxu0 0.0
    %2740 = vmatprep.mubr.f32.mxu0 0.0
    %2741 = vmatmul.mubr.f32.gmra.mxu0 %v2596
    %v2742 = vpop.f32.mrf.mxu0
    %v2743 = vadd.f32 %v2431, %v2742
    %v2744 = vpop.f32.mrf.mxu0
    %2745 = vdwg.mxu0
    %v2746 = vadd.f32 %v2602, %v2672
    %v2747 = vxor.u32 %v2746, 2147483648
    %v2748 = vmul.f32 %v2747, 1.442695
    %v2749 = vpow.pop %v2748
    %v2750 = vadd.f32 %v2749, 1.0
    %v2751 = vrcp.pop %v2750
    %v2752 = vmul.f32 1.0, %v2751
    %v2753 = vadd.f32 %v2603, %v2674
    %v2754 = vxor.u32 %v2753, 2147483648
    %v2755 = vmul.f32 %v2754, 1.442695
    %v2756 = vpow.pop %v2755
    %v2757 = vadd.f32 %v2756, 1.0
    %v2758 = vrcp.pop %v2757
    %v2759 = vmul.f32 1.0, %v2758
    %v2760 = vmul.f32 %v2752, %v2743
    %v2761 = vadd.f32 %v2604, %v2760
    %v2762 = vtanh.pop %v2761
    %v2763 = vsub.f32 1.0, %v2759
    %v2764 = vmul.f32 %v2763, %v2762
    %v2765 = vmul.f32 %v2759, %v2596
    %v2766 = vadd.f32 %v2764, %v2765
    %v2767 = vld [vmem:[%s1337] sm:$0xff]
    %v2768 = vadd.f32 %v2767, %v2766
    %v2769 = vmax.f32 %v2598, %v2768
    %s2770 = smul.u32 2, 3
    %s2771 = smul.addr %s2770, 8
    %s2772 = scalar_lea.vmem [#allocation3], %s2771
    %v2773 = vld [vmem:[%s2772] sm:$0xff]
    %v2774 = vld [vmem:[%s2772 + $0x8] sm:$0xff]
    %v2775 = vld [vmem:[%s2772 + $0x10] sm:$0xff]
    %2776 = vmatprep.subr.mxu0 %v979
    %2777 = vmatpush1.msra.mxu0 %v978
    %2778 = vmatprep.subr.mxu0 %v976
    %2779 = vmatpush1.msra.mxu0 %v975
    %2780 = vmatprep.subr.mxu0 %v973
    %2781 = vmatpush1.msra.mxu0 %v972
    %2782 = vmatprep.subr.mxu0 %v970
    %2783 = vmatpush1.msra.mxu0 %v969
    %2784 = vmatprep.subr.mxu0 %v967
    %2785 = vmatpush1.msra.mxu0 %v966
    %2786 = vmatprep.subr.mxu0 %v964
    %2787 = vmatpush1.msra.mxu0 %v963
    %2788 = vmatprep.subr.mxu0 %v961
    %2789 = vmatpush1.msra.mxu0 %v960
    %2790 = vmatprep.subr.mxu0 %v958
    %2791 = vmatpush1.msra.mxu0 %v957
    %2792 = vmatprep.subr.mxu0 %v955
    %2793 = vmatpush1.msra.mxu0 %v954
    %2794 = vmatprep.subr.mxu0 %v952
    %2795 = vmatpush1.msra.mxu0 %v951
    %2796 = vmatprep.subr.mxu0 %v949
    %2797 = vmatpush1.msra.mxu0 %v948
    %2798 = vmatprep.subr.mxu0 %v946
    %2799 = vmatpush1.msra.mxu0 %v945
    %2800 = vmatprep.subr.mxu0 %v943
    %2801 = vmatpush1.msra.mxu0 %v942
    %2802 = vmatprep.subr.mxu0 %v940
    %2803 = vmatpush1.msra.mxu0 %v939
    %2804 = vmatprep.subr.mxu0 %v937
    %2805 = vmatpush1.msra.mxu0 %v936
    %2806 = vmatprep.subr.mxu0 %v934
    %2807 = vmatpush1.msra.mxu0 %v933
    %2808 = vmatprep.subr.mxu0 0.0
    %2809 = vmatpush2.msra.mxu0 0.0
    %2810 = vmatprep.subr.mxu0 0.0
    %2811 = vmatpush2.msra.mxu0 0.0
    %2812 = vmatprep.subr.mxu0 0.0
    %2813 = vmatpush2.msra.mxu0 0.0
    %2814 = vmatprep.subr.mxu0 0.0
    %2815 = vmatpush2.msra.mxu0 0.0
    %2816 = vmatprep.subr.mxu0 0.0
    %2817 = vmatpush2.msra.mxu0 0.0
    %2818 = vmatprep.subr.mxu0 0.0
    %2819 = vmatpush2.msra.mxu0 0.0
    %2820 = vmatprep.subr.mxu0 0.0
    %2821 = vmatpush2.msra.mxu0 0.0
    %2822 = vmatprep.subr.mxu0 0.0
    %2823 = vmatpush2.msra.mxu0 0.0
    %2824 = vmatprep.subr.mxu0 0.0
    %2825 = vmatpush2.msra.mxu0 0.0
    %2826 = vmatprep.subr.mxu0 0.0
    %2827 = vmatpush2.msra.mxu0 0.0
    %2828 = vmatprep.subr.mxu0 0.0
    %2829 = vmatpush2.msra.mxu0 0.0
    %2830 = vmatprep.subr.mxu0 0.0
    %2831 = vmatpush2.msra.mxu0 0.0
    %2832 = vmatprep.subr.mxu0 0.0
    %2833 = vmatpush2.msra.mxu0 0.0
    %2834 = vmatprep.subr.mxu0 0.0
    %2835 = vmatpush2.msra.mxu0 0.0
    %2836 = vmatprep.subr.mxu0 0.0
    %2837 = vmatpush2.msra.mxu0 0.0
    %2838 = vmatprep.subr.mxu0 0.0
    %2839 = vmatpush2.msra.mxu0 0.0
    %2840 = vmatprep.mubr.f32.mxu0 0.0
    %2841 = vmatmul.mubr.f32.gmra.mxu0 %v2766
    %v2842 = vpop.f32.mrf.mxu0
    %v2843 = vadd.f32 %v2423, %v2842
    %v2844 = vpop.f32.mrf.mxu0
    %v2845 = vadd.f32 %v2427, %v2844
    %2846 = vdwg.mxu0
    %2847 = vmatprep.subr.mxu0 0.0
    %2848 = vmatpush1.msra.mxu0 %v980
    %2849 = vmatprep.subr.mxu0 0.0
    %2850 = vmatpush1.msra.mxu0 %v977
    %2851 = vmatprep.subr.mxu0 0.0
    %2852 = vmatpush1.msra.mxu0 %v974
    %2853 = vmatprep.subr.mxu0 0.0
    %2854 = vmatpush1.msra.mxu0 %v971
    %2855 = vmatprep.subr.mxu0 0.0
    %2856 = vmatpush1.msra.mxu0 %v968
    %2857 = vmatprep.subr.mxu0 0.0
    %2858 = vmatpush1.msra.mxu0 %v965
    %2859 = vmatprep.subr.mxu0 0.0
    %2860 = vmatpush1.msra.mxu0 %v962
    %2861 = vmatprep.subr.mxu0 0.0
    %2862 = vmatpush1.msra.mxu0 %v959
    %2863 = vmatprep.subr.mxu0 0.0
    %2864 = vmatpush1.msra.mxu0 %v956
    %2865 = vmatprep.subr.mxu0 0.0
    %2866 = vmatpush1.msra.mxu0 %v953
    %2867 = vmatprep.subr.mxu0 0.0
    %2868 = vmatpush1.msra.mxu0 %v950
    %2869 = vmatprep.subr.mxu0 0.0
    %2870 = vmatpush1.msra.mxu0 %v947
    %2871 = vmatprep.subr.mxu0 0.0
    %2872 = vmatpush1.msra.mxu0 %v944
    %2873 = vmatprep.subr.mxu0 0.0
    %2874 = vmatpush1.msra.mxu0 %v941
    %2875 = vmatprep.subr.mxu0 0.0
    %2876 = vmatpush1.msra.mxu0 %v938
    %2877 = vmatprep.subr.mxu0 0.0
    %2878 = vmatpush1.msra.mxu0 %v935
    %2879 = vmatprep.subr.mxu0 0.0
    %2880 = vmatpush2.msra.mxu0 0.0
    %2881 = vmatprep.subr.mxu0 0.0
    %2882 = vmatpush2.msra.mxu0 0.0
    %2883 = vmatprep.subr.mxu0 0.0
    %2884 = vmatpush2.msra.mxu0 0.0
    %2885 = vmatprep.subr.mxu0 0.0
    %2886 = vmatpush2.msra.mxu0 0.0
    %2887 = vmatprep.subr.mxu0 0.0
    %2888 = vmatpush2.msra.mxu0 0.0
    %2889 = vmatprep.subr.mxu0 0.0
    %2890 = vmatpush2.msra.mxu0 0.0
    %2891 = vmatprep.subr.mxu0 0.0
    %2892 = vmatpush2.msra.mxu0 0.0
    %2893 = vmatprep.subr.mxu0 0.0
    %2894 = vmatpush2.msra.mxu0 0.0
    %2895 = vmatprep.subr.mxu0 0.0
    %2896 = vmatpush2.msra.mxu0 0.0
    %2897 = vmatprep.subr.mxu0 0.0
    %2898 = vmatpush2.msra.mxu0 0.0
    %2899 = vmatprep.subr.mxu0 0.0
    %2900 = vmatpush2.msra.mxu0 0.0
    %2901 = vmatprep.subr.mxu0 0.0
    %2902 = vmatpush2.msra.mxu0 0.0
    %2903 = vmatprep.subr.mxu0 0.0
    %2904 = vmatpush2.msra.mxu0 0.0
    %2905 = vmatprep.subr.mxu0 0.0
    %2906 = vmatpush2.msra.mxu0 0.0
    %2907 = vmatprep.subr.mxu0 0.0
    %2908 = vmatpush2.msra.mxu0 0.0
    %2909 = vmatprep.subr.mxu0 0.0
    %2910 = vmatpush2.msra.mxu0 0.0
    %2911 = vmatprep.mubr.f32.mxu0 0.0
    %2912 = vmatmul.mubr.f32.gmra.mxu0 %v2766
    %v2913 = vpop.f32.mrf.mxu0
    %v2914 = vadd.f32 %v2431, %v2913
    %v2915 = vpop.f32.mrf.mxu0
    %2916 = vdwg.mxu0
    %v2917 = vadd.f32 %v2773, %v2843
    %v2918 = vxor.u32 %v2917, 2147483648
    %v2919 = vmul.f32 %v2918, 1.442695
    %v2920 = vpow.pop %v2919
    %v2921 = vadd.f32 %v2920, 1.0
    %v2922 = vrcp.pop %v2921
    %v2923 = vmul.f32 1.0, %v2922
    %v2924 = vadd.f32 %v2774, %v2845
    %v2925 = vxor.u32 %v2924, 2147483648
    %v2926 = vmul.f32 %v2925, 1.442695
    %v2927 = vpow.pop %v2926
    %v2928 = vadd.f32 %v2927, 1.0
    %v2929 = vrcp.pop %v2928
    %v2930 = vmul.f32 1.0, %v2929
    %v2931 = vmul.f32 %v2923, %v2914
    %v2932 = vadd.f32 %v2775, %v2931
    %v2933 = vtanh.pop %v2932
    %v2934 = vsub.f32 1.0, %v2930
    %v2935 = vmul.f32 %v2934, %v2933
    %v2936 = vmul.f32 %v2930, %v2766
    %v2937 = vadd.f32 %v2935, %v2936
    %v2938 = vld [vmem:[%s1516] sm:$0xff]
    %v2939 = vadd.f32 %v2938, %v2937
    %v2940 = vmax.f32 %v2769, %v2939
    %s2941 = smul.u32 3, 3
    %s2942 = smul.addr %s2941, 8
    %s2943 = scalar_lea.vmem [#allocation3], %s2942
    %v2944 = vld [vmem:[%s2943] sm:$0xff]
    %v2945 = vld [vmem:[%s2943 + $0x8] sm:$0xff]
    %v2946 = vld [vmem:[%s2943 + $0x10] sm:$0xff]
    %2947 = vmatprep.subr.mxu0 %v979
    %2948 = vmatpush1.msra.mxu0 %v978
    %2949 = vmatprep.subr.mxu0 %v976
    %2950 = vmatpush1.msra.mxu0 %v975
    %2951 = vmatprep.subr.mxu0 %v973
    %2952 = vmatpush1.msra.mxu0 %v972
    %2953 = vmatprep.subr.mxu0 %v970
    %2954 = vmatpush1.msra.mxu0 %v969
    %2955 = vmatprep.subr.mxu0 %v967
    %2956 = vmatpush1.msra.mxu0 %v966
    %2957 = vmatprep.subr.mxu0 %v964
    %2958 = vmatpush1.msra.mxu0 %v963
    %2959 = vmatprep.subr.mxu0 %v961
    %2960 = vmatpush1.msra.mxu0 %v960
    %2961 = vmatprep.subr.mxu0 %v958
    %2962 = vmatpush1.msra.mxu0 %v957
    %2963 = vmatprep.subr.mxu0 %v955
    %2964 = vmatpush1.msra.mxu0 %v954
    %2965 = vmatprep.subr.mxu0 %v952
    %2966 = vmatpush1.msra.mxu0 %v951
    %2967 = vmatprep.subr.mxu0 %v949
    %2968 = vmatpush1.msra.mxu0 %v948
    %2969 = vmatprep.subr.mxu0 %v946
    %2970 = vmatpush1.msra.mxu0 %v945
    %2971 = vmatprep.subr.mxu0 %v943
    %2972 = vmatpush1.msra.mxu0 %v942
    %2973 = vmatprep.subr.mxu0 %v940
    %2974 = vmatpush1.msra.mxu0 %v939
    %2975 = vmatprep.subr.mxu0 %v937
    %2976 = vmatpush1.msra.mxu0 %v936
    %2977 = vmatprep.subr.mxu0 %v934
    %2978 = vmatpush1.msra.mxu0 %v933
    %2979 = vmatprep.subr.mxu0 0.0
    %2980 = vmatpush2.msra.mxu0 0.0
    %2981 = vmatprep.subr.mxu0 0.0
    %2982 = vmatpush2.msra.mxu0 0.0
    %2983 = vmatprep.subr.mxu0 0.0
    %2984 = vmatpush2.msra.mxu0 0.0
    %2985 = vmatprep.subr.mxu0 0.0
    %2986 = vmatpush2.msra.mxu0 0.0
    %2987 = vmatprep.subr.mxu0 0.0
    %2988 = vmatpush2.msra.mxu0 0.0
    %2989 = vmatprep.subr.mxu0 0.0
    %2990 = vmatpush2.msra.mxu0 0.0
    %2991 = vmatprep.subr.mxu0 0.0
    %2992 = vmatpush2.msra.mxu0 0.0
    %2993 = vmatprep.subr.mxu0 0.0
    %2994 = vmatpush2.msra.mxu0 0.0
    %2995 = vmatprep.subr.mxu0 0.0
    %2996 = vmatpush2.msra.mxu0 0.0
    %2997 = vmatprep.subr.mxu0 0.0
    %2998 = vmatpush2.msra.mxu0 0.0
    %2999 = vmatprep.subr.mxu0 0.0
    %3000 = vmatpush2.msra.mxu0 0.0
    %3001 = vmatprep.subr.mxu0 0.0
    %3002 = vmatpush2.msra.mxu0 0.0
    %3003 = vmatprep.subr.mxu0 0.0
    %3004 = vmatpush2.msra.mxu0 0.0
    %3005 = vmatprep.subr.mxu0 0.0
    %3006 = vmatpush2.msra.mxu0 0.0
    %3007 = vmatprep.subr.mxu0 0.0
    %3008 = vmatpush2.msra.mxu0 0.0
    %3009 = vmatprep.subr.mxu0 0.0
    %3010 = vmatpush2.msra.mxu0 0.0
    %3011 = vmatprep.mubr.f32.mxu0 0.0
    %3012 = vmatmul.mubr.f32.gmra.mxu0 %v2937
    %v3013 = vpop.f32.mrf.mxu0
    %v3014 = vadd.f32 %v2423, %v3013
    %v3015 = vpop.f32.mrf.mxu0
    %v3016 = vadd.f32 %v2427, %v3015
    %3017 = vdwg.mxu0
    %3018 = vmatprep.subr.mxu0 0.0
    %3019 = vmatpush1.msra.mxu0 %v980
    %3020 = vmatprep.subr.mxu0 0.0
    %3021 = vmatpush1.msra.mxu0 %v977
    %3022 = vmatprep.subr.mxu0 0.0
    %3023 = vmatpush1.msra.mxu0 %v974
    %3024 = vmatprep.subr.mxu0 0.0
    %3025 = vmatpush1.msra.mxu0 %v971
    %3026 = vmatprep.subr.mxu0 0.0
    %3027 = vmatpush1.msra.mxu0 %v968
    %3028 = vmatprep.subr.mxu0 0.0
    %3029 = vmatpush1.msra.mxu0 %v965
    %3030 = vmatprep.subr.mxu0 0.0
    %3031 = vmatpush1.msra.mxu0 %v962
    %3032 = vmatprep.subr.mxu0 0.0
    %3033 = vmatpush1.msra.mxu0 %v959
    %3034 = vmatprep.subr.mxu0 0.0
    %3035 = vmatpush1.msra.mxu0 %v956
    %3036 = vmatprep.subr.mxu0 0.0
    %3037 = vmatpush1.msra.mxu0 %v953
    %3038 = vmatprep.subr.mxu0 0.0
    %3039 = vmatpush1.msra.mxu0 %v950
    %3040 = vmatprep.subr.mxu0 0.0
    %3041 = vmatpush1.msra.mxu0 %v947
    %3042 = vmatprep.subr.mxu0 0.0
    %3043 = vmatpush1.msra.mxu0 %v944
    %3044 = vmatprep.subr.mxu0 0.0
    %3045 = vmatpush1.msra.mxu0 %v941
    %3046 = vmatprep.subr.mxu0 0.0
    %3047 = vmatpush1.msra.mxu0 %v938
    %3048 = vmatprep.subr.mxu0 0.0
    %3049 = vmatpush1.msra.mxu0 %v935
    %3050 = vmatprep.subr.mxu0 0.0
    %3051 = vmatpush2.msra.mxu0 0.0
    %3052 = vmatprep.subr.mxu0 0.0
    %3053 = vmatpush2.msra.mxu0 0.0
    %3054 = vmatprep.subr.mxu0 0.0
    %3055 = vmatpush2.msra.mxu0 0.0
    %3056 = vmatprep.subr.mxu0 0.0
    %3057 = vmatpush2.msra.mxu0 0.0
    %3058 = vmatprep.subr.mxu0 0.0
    %3059 = vmatpush2.msra.mxu0 0.0
    %3060 = vmatprep.subr.mxu0 0.0
    %3061 = vmatpush2.msra.mxu0 0.0
    %3062 = vmatprep.subr.mxu0 0.0
    %3063 = vmatpush2.msra.mxu0 0.0
    %3064 = vmatprep.subr.mxu0 0.0
    %3065 = vmatpush2.msra.mxu0 0.0
    %3066 = vmatprep.subr.mxu0 0.0
    %3067 = vmatpush2.msra.mxu0 0.0
    %3068 = vmatprep.subr.mxu0 0.0
    %3069 = vmatpush2.msra.mxu0 0.0
    %3070 = vmatprep.subr.mxu0 0.0
    %3071 = vmatpush2.msra.mxu0 0.0
    %3072 = vmatprep.subr.mxu0 0.0
    %3073 = vmatpush2.msra.mxu0 0.0
    %3074 = vmatprep.subr.mxu0 0.0
    %3075 = vmatpush2.msra.mxu0 0.0
    %3076 = vmatprep.subr.mxu0 0.0
    %3077 = vmatpush2.msra.mxu0 0.0
    %3078 = vmatprep.subr.mxu0 0.0
    %3079 = vmatpush2.msra.mxu0 0.0
    %3080 = vmatprep.subr.mxu0 0.0
    %3081 = vmatpush2.msra.mxu0 0.0
    %3082 = vmatprep.mubr.f32.mxu0 0.0
    %3083 = vmatmul.mubr.f32.gmra.mxu0 %v2937
    %v3084 = vpop.f32.mrf.mxu0
    %v3085 = vadd.f32 %v2431, %v3084
    %v3086 = vpop.f32.mrf.mxu0
    %3087 = vdwg.mxu0
    %v3088 = vadd.f32 %v2944, %v3014
    %v3089 = vxor.u32 %v3088, 2147483648
    %v3090 = vmul.f32 %v3089, 1.442695
    %v3091 = vpow.pop %v3090
    %v3092 = vadd.f32 %v3091, 1.0
    %v3093 = vrcp.pop %v3092
    %v3094 = vmul.f32 1.0, %v3093
    %v3095 = vadd.f32 %v2945, %v3016
    %v3096 = vxor.u32 %v3095, 2147483648
    %v3097 = vmul.f32 %v3096, 1.442695
    %v3098 = vpow.pop %v3097
    %v3099 = vadd.f32 %v3098, 1.0
    %v3100 = vrcp.pop %v3099
    %v3101 = vmul.f32 1.0, %v3100
    %v3102 = vmul.f32 %v3094, %v3085
    %v3103 = vadd.f32 %v2946, %v3102
    %v3104 = vtanh.pop %v3103
    %v3105 = vsub.f32 1.0, %v3101
    %v3106 = vmul.f32 %v3105, %v3104
    %v3107 = vmul.f32 %v3101, %v2937
    %v3108 = vadd.f32 %v3106, %v3107
    %v3109 = vld [vmem:[%s1695] sm:$0xff]
    %v3110 = vadd.f32 %v3109, %v3108
    %v3111 = vmax.f32 %v2940, %v3110
    %s3112 = smul.u32 4, 3
    %s3113 = smul.addr %s3112, 8
    %s3114 = scalar_lea.vmem [#allocation3], %s3113
    %v3115 = vld [vmem:[%s3114] sm:$0xff]
    %v3116 = vld [vmem:[%s3114 + $0x8] sm:$0xff]
    %v3117 = vld [vmem:[%s3114 + $0x10] sm:$0xff]
    %3118 = vmatprep.subr.mxu0 %v979
    %3119 = vmatpush1.msra.mxu0 %v978
    %3120 = vmatprep.subr.mxu0 %v976
    %3121 = vmatpush1.msra.mxu0 %v975
    %3122 = vmatprep.subr.mxu0 %v973
    %3123 = vmatpush1.msra.mxu0 %v972
    %3124 = vmatprep.subr.mxu0 %v970
    %3125 = vmatpush1.msra.mxu0 %v969
    %3126 = vmatprep.subr.mxu0 %v967
    %3127 = vmatpush1.msra.mxu0 %v966
    %3128 = vmatprep.subr.mxu0 %v964
    %3129 = vmatpush1.msra.mxu0 %v963
    %3130 = vmatprep.subr.mxu0 %v961
    %3131 = vmatpush1.msra.mxu0 %v960
    %3132 = vmatprep.subr.mxu0 %v958
    %3133 = vmatpush1.msra.mxu0 %v957
    %3134 = vmatprep.subr.mxu0 %v955
    %3135 = vmatpush1.msra.mxu0 %v954
    %3136 = vmatprep.subr.mxu0 %v952
    %3137 = vmatpush1.msra.mxu0 %v951
    %3138 = vmatprep.subr.mxu0 %v949
    %3139 = vmatpush1.msra.mxu0 %v948
    %3140 = vmatprep.subr.mxu0 %v946
    %3141 = vmatpush1.msra.mxu0 %v945
    %3142 = vmatprep.subr.mxu0 %v943
    %3143 = vmatpush1.msra.mxu0 %v942
    %3144 = vmatprep.subr.mxu0 %v940
    %3145 = vmatpush1.msra.mxu0 %v939
    %3146 = vmatprep.subr.mxu0 %v937
    %3147 = vmatpush1.msra.mxu0 %v936
    %3148 = vmatprep.subr.mxu0 %v934
    %3149 = vmatpush1.msra.mxu0 %v933
    %3150 = vmatprep.subr.mxu0 0.0
    %3151 = vmatpush2.msra.mxu0 0.0
    %3152 = vmatprep.subr.mxu0 0.0
    %3153 = vmatpush2.msra.mxu0 0.0
    %3154 = vmatprep.subr.mxu0 0.0
    %3155 = vmatpush2.msra.mxu0 0.0
    %3156 = vmatprep.subr.mxu0 0.0
    %3157 = vmatpush2.msra.mxu0 0.0
    %3158 = vmatprep.subr.mxu0 0.0
    %3159 = vmatpush2.msra.mxu0 0.0
    %3160 = vmatprep.subr.mxu0 0.0
    %3161 = vmatpush2.msra.mxu0 0.0
    %3162 = vmatprep.subr.mxu0 0.0
    %3163 = vmatpush2.msra.mxu0 0.0
    %3164 = vmatprep.subr.mxu0 0.0
    %3165 = vmatpush2.msra.mxu0 0.0
    %3166 = vmatprep.subr.mxu0 0.0
    %3167 = vmatpush2.msra.mxu0 0.0
    %3168 = vmatprep.subr.mxu0 0.0
    %3169 = vmatpush2.msra.mxu0 0.0
    %3170 = vmatprep.subr.mxu0 0.0
    %3171 = vmatpush2.msra.mxu0 0.0
    %3172 = vmatprep.subr.mxu0 0.0
    %3173 = vmatpush2.msra.mxu0 0.0
    %3174 = vmatprep.subr.mxu0 0.0
    %3175 = vmatpush2.msra.mxu0 0.0
    %3176 = vmatprep.subr.mxu0 0.0
    %3177 = vmatpush2.msra.mxu0 0.0
    %3178 = vmatprep.subr.mxu0 0.0
    %3179 = vmatpush2.msra.mxu0 0.0
    %3180 = vmatprep.subr.mxu0 0.0
    %3181 = vmatpush2.msra.mxu0 0.0
    %3182 = vmatprep.mubr.f32.mxu0 0.0
    %3183 = vmatmul.mubr.f32.gmra.mxu0 %v3108
    %v3184 = vpop.f32.mrf.mxu0
    %v3185 = vadd.f32 %v2423, %v3184
    %v3186 = vpop.f32.mrf.mxu0
    %v3187 = vadd.f32 %v2427, %v3186
    %3188 = vdwg.mxu0
    %3189 = vmatprep.subr.mxu0 0.0
    %3190 = vmatpush1.msra.mxu0 %v980
    %3191 = vmatprep.subr.mxu0 0.0
    %3192 = vmatpush1.msra.mxu0 %v977
    %3193 = vmatprep.subr.mxu0 0.0
    %3194 = vmatpush1.msra.mxu0 %v974
    %3195 = vmatprep.subr.mxu0 0.0
    %3196 = vmatpush1.msra.mxu0 %v971
    %3197 = vmatprep.subr.mxu0 0.0
    %3198 = vmatpush1.msra.mxu0 %v968
    %3199 = vmatprep.subr.mxu0 0.0
    %3200 = vmatpush1.msra.mxu0 %v965
    %3201 = vmatprep.subr.mxu0 0.0
    %3202 = vmatpush1.msra.mxu0 %v962
    %3203 = vmatprep.subr.mxu0 0.0
    %3204 = vmatpush1.msra.mxu0 %v959
    %3205 = vmatprep.subr.mxu0 0.0
    %3206 = vmatpush1.msra.mxu0 %v956
    %3207 = vmatprep.subr.mxu0 0.0
    %3208 = vmatpush1.msra.mxu0 %v953
    %3209 = vmatprep.subr.mxu0 0.0
    %3210 = vmatpush1.msra.mxu0 %v950
    %3211 = vmatprep.subr.mxu0 0.0
    %3212 = vmatpush1.msra.mxu0 %v947
    %3213 = vmatprep.subr.mxu0 0.0
    %3214 = vmatpush1.msra.mxu0 %v944
    %3215 = vmatprep.subr.mxu0 0.0
    %3216 = vmatpush1.msra.mxu0 %v941
    %3217 = vmatprep.subr.mxu0 0.0
    %3218 = vmatpush1.msra.mxu0 %v938
    %3219 = vmatprep.subr.mxu0 0.0
    %3220 = vmatpush1.msra.mxu0 %v935
    %3221 = vmatprep.subr.mxu0 0.0
    %3222 = vmatpush2.msra.mxu0 0.0
    %3223 = vmatprep.subr.mxu0 0.0
    %3224 = vmatpush2.msra.mxu0 0.0
    %3225 = vmatprep.subr.mxu0 0.0
    %3226 = vmatpush2.msra.mxu0 0.0
    %3227 = vmatprep.subr.mxu0 0.0
    %3228 = vmatpush2.msra.mxu0 0.0
    %3229 = vmatprep.subr.mxu0 0.0
    %3230 = vmatpush2.msra.mxu0 0.0
    %3231 = vmatprep.subr.mxu0 0.0
    %3232 = vmatpush2.msra.mxu0 0.0
    %3233 = vmatprep.subr.mxu0 0.0
    %3234 = vmatpush2.msra.mxu0 0.0
    %3235 = vmatprep.subr.mxu0 0.0
    %3236 = vmatpush2.msra.mxu0 0.0
    %3237 = vmatprep.subr.mxu0 0.0
    %3238 = vmatpush2.msra.mxu0 0.0
    %3239 = vmatprep.subr.mxu0 0.0
    %3240 = vmatpush2.msra.mxu0 0.0
    %3241 = vmatprep.subr.mxu0 0.0
    %3242 = vmatpush2.msra.mxu0 0.0
    %3243 = vmatprep.subr.mxu0 0.0
    %3244 = vmatpush2.msra.mxu0 0.0
    %3245 = vmatprep.subr.mxu0 0.0
    %3246 = vmatpush2.msra.mxu0 0.0
    %3247 = vmatprep.subr.mxu0 0.0
    %3248 = vmatpush2.msra.mxu0 0.0
    %3249 = vmatprep.subr.mxu0 0.0
    %3250 = vmatpush2.msra.mxu0 0.0
    %3251 = vmatprep.subr.mxu0 0.0
    %3252 = vmatpush2.msra.mxu0 0.0
    %3253 = vmatprep.mubr.f32.mxu0 0.0
    %3254 = vmatmul.mubr.f32.gmra.mxu0 %v3108
    %v3255 = vpop.f32.mrf.mxu0
    %v3256 = vadd.f32 %v2431, %v3255
    %v3257 = vpop.f32.mrf.mxu0
    %3258 = vdwg.mxu0
    %v3259 = vadd.f32 %v3115, %v3185
    %v3260 = vxor.u32 %v3259, 2147483648
    %v3261 = vmul.f32 %v3260, 1.442695
    %v3262 = vpow.pop %v3261
    %v3263 = vadd.f32 %v3262, 1.0
    %v3264 = vrcp.pop %v3263
    %v3265 = vmul.f32 1.0, %v3264
    %v3266 = vadd.f32 %v3116, %v3187
    %v3267 = vxor.u32 %v3266, 2147483648
    %v3268 = vmul.f32 %v3267, 1.442695
    %v3269 = vpow.pop %v3268
    %v3270 = vadd.f32 %v3269, 1.0
    %v3271 = vrcp.pop %v3270
    %v3272 = vmul.f32 1.0, %v3271
    %v3273 = vmul.f32 %v3265, %v3256
    %v3274 = vadd.f32 %v3117, %v3273
    %v3275 = vtanh.pop %v3274
    %v3276 = vsub.f32 1.0, %v3272
    %v3277 = vmul.f32 %v3276, %v3275
    %v3278 = vmul.f32 %v3272, %v3108
    %v3279 = vadd.f32 %v3277, %v3278
    %v3280 = vld [vmem:[%s1874] sm:$0xff]
    %v3281 = vadd.f32 %v3280, %v3279
    %v3282 = vmax.f32 %v3111, %v3281
    %s3283 = smul.u32 5, 3
    %s3284 = smul.addr %s3283, 8
    %s3285 = scalar_lea.vmem [#allocation3], %s3284
    %v3286 = vld [vmem:[%s3285] sm:$0xff]
    %v3287 = vld [vmem:[%s3285 + $0x8] sm:$0xff]
    %v3288 = vld [vmem:[%s3285 + $0x10] sm:$0xff]
    %3289 = vmatprep.subr.mxu0 %v979
    %3290 = vmatpush1.msra.mxu0 %v978
    %3291 = vmatprep.subr.mxu0 %v976
    %3292 = vmatpush1.msra.mxu0 %v975
    %3293 = vmatprep.subr.mxu0 %v973
    %3294 = vmatpush1.msra.mxu0 %v972
    %3295 = vmatprep.subr.mxu0 %v970
    %3296 = vmatpush1.msra.mxu0 %v969
    %3297 = vmatprep.subr.mxu0 %v967
    %3298 = vmatpush1.msra.mxu0 %v966
    %3299 = vmatprep.subr.mxu0 %v964
    %3300 = vmatpush1.msra.mxu0 %v963
    %3301 = vmatprep.subr.mxu0 %v961
    %3302 = vmatpush1.msra.mxu0 %v960
    %3303 = vmatprep.subr.mxu0 %v958
    %3304 = vmatpush1.msra.mxu0 %v957
    %3305 = vmatprep.subr.mxu0 %v955
    %3306 = vmatpush1.msra.mxu0 %v954
    %3307 = vmatprep.subr.mxu0 %v952
    %3308 = vmatpush1.msra.mxu0 %v951
    %3309 = vmatprep.subr.mxu0 %v949
    %3310 = vmatpush1.msra.mxu0 %v948
    %3311 = vmatprep.subr.mxu0 %v946
    %3312 = vmatpush1.msra.mxu0 %v945
    %3313 = vmatprep.subr.mxu0 %v943
    %3314 = vmatpush1.msra.mxu0 %v942
    %3315 = vmatprep.subr.mxu0 %v940
    %3316 = vmatpush1.msra.mxu0 %v939
    %3317 = vmatprep.subr.mxu0 %v937
    %3318 = vmatpush1.msra.mxu0 %v936
    %3319 = vmatprep.subr.mxu0 %v934
    %3320 = vmatpush1.msra.mxu0 %v933
    %3321 = vmatprep.subr.mxu0 0.0
    %3322 = vmatpush2.msra.mxu0 0.0
    %3323 = vmatprep.subr.mxu0 0.0
    %3324 = vmatpush2.msra.mxu0 0.0
    %3325 = vmatprep.subr.mxu0 0.0
    %3326 = vmatpush2.msra.mxu0 0.0
    %3327 = vmatprep.subr.mxu0 0.0
    %3328 = vmatpush2.msra.mxu0 0.0
    %3329 = vmatprep.subr.mxu0 0.0
    %3330 = vmatpush2.msra.mxu0 0.0
    %3331 = vmatprep.subr.mxu0 0.0
    %3332 = vmatpush2.msra.mxu0 0.0
    %3333 = vmatprep.subr.mxu0 0.0
    %3334 = vmatpush2.msra.mxu0 0.0
    %3335 = vmatprep.subr.mxu0 0.0
    %3336 = vmatpush2.msra.mxu0 0.0
    %3337 = vmatprep.subr.mxu0 0.0
    %3338 = vmatpush2.msra.mxu0 0.0
    %3339 = vmatprep.subr.mxu0 0.0
    %3340 = vmatpush2.msra.mxu0 0.0
    %3341 = vmatprep.subr.mxu0 0.0
    %3342 = vmatpush2.msra.mxu0 0.0
    %3343 = vmatprep.subr.mxu0 0.0
    %3344 = vmatpush2.msra.mxu0 0.0
    %3345 = vmatprep.subr.mxu0 0.0
    %3346 = vmatpush2.msra.mxu0 0.0
    %3347 = vmatprep.subr.mxu0 0.0
    %3348 = vmatpush2.msra.mxu0 0.0
    %3349 = vmatprep.subr.mxu0 0.0
    %3350 = vmatpush2.msra.mxu0 0.0
    %3351 = vmatprep.subr.mxu0 0.0
    %3352 = vmatpush2.msra.mxu0 0.0
    %3353 = vmatprep.mubr.f32.mxu0 0.0
    %3354 = vmatmul.mubr.f32.gmra.mxu0 %v3279
    %v3355 = vpop.f32.mrf.mxu0
    %v3356 = vadd.f32 %v2423, %v3355
    %v3357 = vpop.f32.mrf.mxu0
    %v3358 = vadd.f32 %v2427, %v3357
    %3359 = vdwg.mxu0
    %3360 = vmatprep.subr.mxu0 0.0
    %3361 = vmatpush1.msra.mxu0 %v980
    %3362 = vmatprep.subr.mxu0 0.0
    %3363 = vmatpush1.msra.mxu0 %v977
    %3364 = vmatprep.subr.mxu0 0.0
    %3365 = vmatpush1.msra.mxu0 %v974
    %3366 = vmatprep.subr.mxu0 0.0
    %3367 = vmatpush1.msra.mxu0 %v971
    %3368 = vmatprep.subr.mxu0 0.0
    %3369 = vmatpush1.msra.mxu0 %v968
    %3370 = vmatprep.subr.mxu0 0.0
    %3371 = vmatpush1.msra.mxu0 %v965
    %3372 = vmatprep.subr.mxu0 0.0
    %3373 = vmatpush1.msra.mxu0 %v962
    %3374 = vmatprep.subr.mxu0 0.0
    %3375 = vmatpush1.msra.mxu0 %v959
    %3376 = vmatprep.subr.mxu0 0.0
    %3377 = vmatpush1.msra.mxu0 %v956
    %3378 = vmatprep.subr.mxu0 0.0
    %3379 = vmatpush1.msra.mxu0 %v953
    %3380 = vmatprep.subr.mxu0 0.0
    %3381 = vmatpush1.msra.mxu0 %v950
    %3382 = vmatprep.subr.mxu0 0.0
    %3383 = vmatpush1.msra.mxu0 %v947
    %3384 = vmatprep.subr.mxu0 0.0
    %3385 = vmatpush1.msra.mxu0 %v944
    %3386 = vmatprep.subr.mxu0 0.0
    %3387 = vmatpush1.msra.mxu0 %v941
    %3388 = vmatprep.subr.mxu0 0.0
    %3389 = vmatpush1.msra.mxu0 %v938
    %3390 = vmatprep.subr.mxu0 0.0
    %3391 = vmatpush1.msra.mxu0 %v935
    %3392 = vmatprep.subr.mxu0 0.0
    %3393 = vmatpush2.msra.mxu0 0.0
    %3394 = vmatprep.subr.mxu0 0.0
    %3395 = vmatpush2.msra.mxu0 0.0
    %3396 = vmatprep.subr.mxu0 0.0
    %3397 = vmatpush2.msra.mxu0 0.0
    %3398 = vmatprep.subr.mxu0 0.0
    %3399 = vmatpush2.msra.mxu0 0.0
    %3400 = vmatprep.subr.mxu0 0.0
    %3401 = vmatpush2.msra.mxu0 0.0
    %3402 = vmatprep.subr.mxu0 0.0
    %3403 = vmatpush2.msra.mxu0 0.0
    %3404 = vmatprep.subr.mxu0 0.0
    %3405 = vmatpush2.msra.mxu0 0.0
    %3406 = vmatprep.subr.mxu0 0.0
    %3407 = vmatpush2.msra.mxu0 0.0
    %3408 = vmatprep.subr.mxu0 0.0
    %3409 = vmatpush2.msra.mxu0 0.0
    %3410 = vmatprep.subr.mxu0 0.0
    %3411 = vmatpush2.msra.mxu0 0.0
    %3412 = vmatprep.subr.mxu0 0.0
    %3413 = vmatpush2.msra.mxu0 0.0
    %3414 = vmatprep.subr.mxu0 0.0
    %3415 = vmatpush2.msra.mxu0 0.0
    %3416 = vmatprep.subr.mxu0 0.0
    %3417 = vmatpush2.msra.mxu0 0.0
    %3418 = vmatprep.subr.mxu0 0.0
    %3419 = vmatpush2.msra.mxu0 0.0
    %3420 = vmatprep.subr.mxu0 0.0
    %3421 = vmatpush2.msra.mxu0 0.0
    %3422 = vmatprep.subr.mxu0 0.0
    %3423 = vmatpush2.msra.mxu0 0.0
    %3424 = vmatprep.mubr.f32.mxu0 0.0
    %3425 = vmatmul.mubr.f32.gmra.mxu0 %v3279
    %v3426 = vpop.f32.mrf.mxu0
    %v3427 = vadd.f32 %v2431, %v3426
    %v3428 = vpop.f32.mrf.mxu0
    %3429 = vdwg.mxu0
    %v3430 = vadd.f32 %v3286, %v3356
    %v3431 = vxor.u32 %v3430, 2147483648
    %v3432 = vmul.f32 %v3431, 1.442695
    %v3433 = vpow.pop %v3432
    %v3434 = vadd.f32 %v3433, 1.0
    %v3435 = vrcp.pop %v3434
    %v3436 = vmul.f32 1.0, %v3435
    %v3437 = vadd.f32 %v3287, %v3358
    %v3438 = vxor.u32 %v3437, 2147483648
    %v3439 = vmul.f32 %v3438, 1.442695
    %v3440 = vpow.pop %v3439
    %v3441 = vadd.f32 %v3440, 1.0
    %v3442 = vrcp.pop %v3441
    %v3443 = vmul.f32 1.0, %v3442
    %v3444 = vmul.f32 %v3436, %v3427
    %v3445 = vadd.f32 %v3288, %v3444
    %v3446 = vtanh.pop %v3445
    %v3447 = vsub.f32 1.0, %v3443
    %v3448 = vmul.f32 %v3447, %v3446
    %v3449 = vmul.f32 %v3443, %v3279
    %v3450 = vadd.f32 %v3448, %v3449
    %v3451 = vld [vmem:[%s2053] sm:$0xff]
    %v3452 = vadd.f32 %v3451, %v3450
    %v3453 = vmax.f32 %v3282, %v3452
    %s3454 = smul.u32 6, 3
    %s3455 = smul.addr %s3454, 8
    %s3456 = scalar_lea.vmem [#allocation3], %s3455
    %v3457 = vld [vmem:[%s3456] sm:$0xff]
    %v3458 = vld [vmem:[%s3456 + $0x8] sm:$0xff]
    %v3459 = vld [vmem:[%s3456 + $0x10] sm:$0xff]
    %3460 = vmatprep.subr.mxu0 %v979
    %3461 = vmatpush1.msra.mxu0 %v978
    %3462 = vmatprep.subr.mxu0 %v976
    %3463 = vmatpush1.msra.mxu0 %v975
    %3464 = vmatprep.subr.mxu0 %v973
    %3465 = vmatpush1.msra.mxu0 %v972
    %3466 = vmatprep.subr.mxu0 %v970
    %3467 = vmatpush1.msra.mxu0 %v969
    %3468 = vmatprep.subr.mxu0 %v967
    %3469 = vmatpush1.msra.mxu0 %v966
    %3470 = vmatprep.subr.mxu0 %v964
    %3471 = vmatpush1.msra.mxu0 %v963
    %3472 = vmatprep.subr.mxu0 %v961
    %3473 = vmatpush1.msra.mxu0 %v960
    %3474 = vmatprep.subr.mxu0 %v958
    %3475 = vmatpush1.msra.mxu0 %v957
    %3476 = vmatprep.subr.mxu0 %v955
    %3477 = vmatpush1.msra.mxu0 %v954
    %3478 = vmatprep.subr.mxu0 %v952
    %3479 = vmatpush1.msra.mxu0 %v951
    %3480 = vmatprep.subr.mxu0 %v949
    %3481 = vmatpush1.msra.mxu0 %v948
    %3482 = vmatprep.subr.mxu0 %v946
    %3483 = vmatpush1.msra.mxu0 %v945
    %3484 = vmatprep.subr.mxu0 %v943
    %3485 = vmatpush1.msra.mxu0 %v942
    %3486 = vmatprep.subr.mxu0 %v940
    %3487 = vmatpush1.msra.mxu0 %v939
    %3488 = vmatprep.subr.mxu0 %v937
    %3489 = vmatpush1.msra.mxu0 %v936
    %3490 = vmatprep.subr.mxu0 %v934
    %3491 = vmatpush1.msra.mxu0 %v933
    %3492 = vmatprep.subr.mxu0 0.0
    %3493 = vmatpush2.msra.mxu0 0.0
    %3494 = vmatprep.subr.mxu0 0.0
    %3495 = vmatpush2.msra.mxu0 0.0
    %3496 = vmatprep.subr.mxu0 0.0
    %3497 = vmatpush2.msra.mxu0 0.0
    %3498 = vmatprep.subr.mxu0 0.0
    %3499 = vmatpush2.msra.mxu0 0.0
    %3500 = vmatprep.subr.mxu0 0.0
    %3501 = vmatpush2.msra.mxu0 0.0
    %3502 = vmatprep.subr.mxu0 0.0
    %3503 = vmatpush2.msra.mxu0 0.0
    %3504 = vmatprep.subr.mxu0 0.0
    %3505 = vmatpush2.msra.mxu0 0.0
    %3506 = vmatprep.subr.mxu0 0.0
    %3507 = vmatpush2.msra.mxu0 0.0
    %3508 = vmatprep.subr.mxu0 0.0
    %3509 = vmatpush2.msra.mxu0 0.0
    %3510 = vmatprep.subr.mxu0 0.0
    %3511 = vmatpush2.msra.mxu0 0.0
    %3512 = vmatprep.subr.mxu0 0.0
    %3513 = vmatpush2.msra.mxu0 0.0
    %3514 = vmatprep.subr.mxu0 0.0
    %3515 = vmatpush2.msra.mxu0 0.0
    %3516 = vmatprep.subr.mxu0 0.0
    %3517 = vmatpush2.msra.mxu0 0.0
    %3518 = vmatprep.subr.mxu0 0.0
    %3519 = vmatpush2.msra.mxu0 0.0
    %3520 = vmatprep.subr.mxu0 0.0
    %3521 = vmatpush2.msra.mxu0 0.0
    %3522 = vmatprep.subr.mxu0 0.0
    %3523 = vmatpush2.msra.mxu0 0.0
    %3524 = vmatprep.mubr.f32.mxu0 0.0
    %3525 = vmatmul.mubr.f32.gmra.mxu0 %v3450
    %v3526 = vpop.f32.mrf.mxu0
    %v3527 = vadd.f32 %v2423, %v3526
    %v3528 = vpop.f32.mrf.mxu0
    %v3529 = vadd.f32 %v2427, %v3528
    %3530 = vdwg.mxu0
    %3531 = vmatprep.subr.mxu0 0.0
    %3532 = vmatpush1.msra.mxu0 %v980
    %3533 = vmatprep.subr.mxu0 0.0
    %3534 = vmatpush1.msra.mxu0 %v977
    %3535 = vmatprep.subr.mxu0 0.0
    %3536 = vmatpush1.msra.mxu0 %v974
    %3537 = vmatprep.subr.mxu0 0.0
    %3538 = vmatpush1.msra.mxu0 %v971
    %3539 = vmatprep.subr.mxu0 0.0
    %3540 = vmatpush1.msra.mxu0 %v968
    %3541 = vmatprep.subr.mxu0 0.0
    %3542 = vmatpush1.msra.mxu0 %v965
    %3543 = vmatprep.subr.mxu0 0.0
    %3544 = vmatpush1.msra.mxu0 %v962
    %3545 = vmatprep.subr.mxu0 0.0
    %3546 = vmatpush1.msra.mxu0 %v959
    %3547 = vmatprep.subr.mxu0 0.0
    %3548 = vmatpush1.msra.mxu0 %v956
    %3549 = vmatprep.subr.mxu0 0.0
    %3550 = vmatpush1.msra.mxu0 %v953
    %3551 = vmatprep.subr.mxu0 0.0
    %3552 = vmatpush1.msra.mxu0 %v950
    %3553 = vmatprep.subr.mxu0 0.0
    %3554 = vmatpush1.msra.mxu0 %v947
    %3555 = vmatprep.subr.mxu0 0.0
    %3556 = vmatpush1.msra.mxu0 %v944
    %3557 = vmatprep.subr.mxu0 0.0
    %3558 = vmatpush1.msra.mxu0 %v941
    %3559 = vmatprep.subr.mxu0 0.0
    %3560 = vmatpush1.msra.mxu0 %v938
    %3561 = vmatprep.subr.mxu0 0.0
    %3562 = vmatpush1.msra.mxu0 %v935
    %3563 = vmatprep.subr.mxu0 0.0
    %3564 = vmatpush2.msra.mxu0 0.0
    %3565 = vmatprep.subr.mxu0 0.0
    %3566 = vmatpush2.msra.mxu0 0.0
    %3567 = vmatprep.subr.mxu0 0.0
    %3568 = vmatpush2.msra.mxu0 0.0
    %3569 = vmatprep.subr.mxu0 0.0
    %3570 = vmatpush2.msra.mxu0 0.0
    %3571 = vmatprep.subr.mxu0 0.0
    %3572 = vmatpush2.msra.mxu0 0.0
    %3573 = vmatprep.subr.mxu0 0.0
    %3574 = vmatpush2.msra.mxu0 0.0
    %3575 = vmatprep.subr.mxu0 0.0
    %3576 = vmatpush2.msra.mxu0 0.0
    %3577 = vmatprep.subr.mxu0 0.0
    %3578 = vmatpush2.msra.mxu0 0.0
    %3579 = vmatprep.subr.mxu0 0.0
    %3580 = vmatpush2.msra.mxu0 0.0
    %3581 = vmatprep.subr.mxu0 0.0
    %3582 = vmatpush2.msra.mxu0 0.0
    %3583 = vmatprep.subr.mxu0 0.0
    %3584 = vmatpush2.msra.mxu0 0.0
    %3585 = vmatprep.subr.mxu0 0.0
    %3586 = vmatpush2.msra.mxu0 0.0
    %3587 = vmatprep.subr.mxu0 0.0
    %3588 = vmatpush2.msra.mxu0 0.0
    %3589 = vmatprep.subr.mxu0 0.0
    %3590 = vmatpush2.msra.mxu0 0.0
    %3591 = vmatprep.subr.mxu0 0.0
    %3592 = vmatpush2.msra.mxu0 0.0
    %3593 = vmatprep.subr.mxu0 0.0
    %3594 = vmatpush2.msra.mxu0 0.0
    %3595 = vmatprep.mubr.f32.mxu0 0.0
    %3596 = vmatmul.mubr.f32.gmra.mxu0 %v3450
    %v3597 = vpop.f32.mrf.mxu0
    %v3598 = vadd.f32 %v2431, %v3597
    %v3599 = vpop.f32.mrf.mxu0
    %3600 = vdwg.mxu0
    %v3601 = vadd.f32 %v3457, %v3527
    %v3602 = vxor.u32 %v3601, 2147483648
    %v3603 = vmul.f32 %v3602, 1.442695
    %v3604 = vpow.pop %v3603
    %v3605 = vadd.f32 %v3604, 1.0
    %v3606 = vrcp.pop %v3605
    %v3607 = vmul.f32 1.0, %v3606
    %v3608 = vadd.f32 %v3458, %v3529
    %v3609 = vxor.u32 %v3608, 2147483648
    %v3610 = vmul.f32 %v3609, 1.442695
    %v3611 = vpow.pop %v3610
    %v3612 = vadd.f32 %v3611, 1.0
    %v3613 = vrcp.pop %v3612
    %v3614 = vmul.f32 1.0, %v3613
    %v3615 = vmul.f32 %v3607, %v3598
    %v3616 = vadd.f32 %v3459, %v3615
    %v3617 = vtanh.pop %v3616
    %v3618 = vsub.f32 1.0, %v3614
    %v3619 = vmul.f32 %v3618, %v3617
    %v3620 = vmul.f32 %v3614, %v3450
    %v3621 = vadd.f32 %v3619, %v3620
    %v3622 = vld [vmem:[%s2232] sm:$0xff]
    %v3623 = vadd.f32 %v3622, %v3621
    %v3624 = vmax.f32 %v3453, %v3623
    %s3625 = smul.u32 7, 3
    %s3626 = smul.addr %s3625, 8
    %s3627 = scalar_lea.vmem [#allocation3], %s3626
    %v3628 = vld [vmem:[%s3627] sm:$0xff]
    %v3629 = vld [vmem:[%s3627 + $0x8] sm:$0xff]
    %v3630 = vld [vmem:[%s3627 + $0x10] sm:$0xff]
    %3631 = vmatprep.subr.mxu0 %v979
    %3632 = vmatpush1.msra.mxu0 %v978
    %3633 = vmatprep.subr.mxu0 %v976
    %3634 = vmatpush1.msra.mxu0 %v975
    %3635 = vmatprep.subr.mxu0 %v973
    %3636 = vmatpush1.msra.mxu0 %v972
    %3637 = vmatprep.subr.mxu0 %v970
    %3638 = vmatpush1.msra.mxu0 %v969
    %3639 = vmatprep.subr.mxu0 %v967
    %3640 = vmatpush1.msra.mxu0 %v966
    %3641 = vmatprep.subr.mxu0 %v964
    %3642 = vmatpush1.msra.mxu0 %v963
    %3643 = vmatprep.subr.mxu0 %v961
    %3644 = vmatpush1.msra.mxu0 %v960
    %3645 = vmatprep.subr.mxu0 %v958
    %3646 = vmatpush1.msra.mxu0 %v957
    %3647 = vmatprep.subr.mxu0 %v955
    %3648 = vmatpush1.msra.mxu0 %v954
    %3649 = vmatprep.subr.mxu0 %v952
    %3650 = vmatpush1.msra.mxu0 %v951
    %3651 = vmatprep.subr.mxu0 %v949
    %3652 = vmatpush1.msra.mxu0 %v948
    %3653 = vmatprep.subr.mxu0 %v946
    %3654 = vmatpush1.msra.mxu0 %v945
    %3655 = vmatprep.subr.mxu0 %v943
    %3656 = vmatpush1.msra.mxu0 %v942
    %3657 = vmatprep.subr.mxu0 %v940
    %3658 = vmatpush1.msra.mxu0 %v939
    %3659 = vmatprep.subr.mxu0 %v937
    %3660 = vmatpush1.msra.mxu0 %v936
    %3661 = vmatprep.subr.mxu0 %v934
    %3662 = vmatpush1.msra.mxu0 %v933
    %3663 = vmatprep.subr.mxu0 0.0
    %3664 = vmatpush2.msra.mxu0 0.0
    %3665 = vmatprep.subr.mxu0 0.0
    %3666 = vmatpush2.msra.mxu0 0.0
    %3667 = vmatprep.subr.mxu0 0.0
    %3668 = vmatpush2.msra.mxu0 0.0
    %3669 = vmatprep.subr.mxu0 0.0
    %3670 = vmatpush2.msra.mxu0 0.0
    %3671 = vmatprep.subr.mxu0 0.0
    %3672 = vmatpush2.msra.mxu0 0.0
    %3673 = vmatprep.subr.mxu0 0.0
    %3674 = vmatpush2.msra.mxu0 0.0
    %3675 = vmatprep.subr.mxu0 0.0
    %3676 = vmatpush2.msra.mxu0 0.0
    %3677 = vmatprep.subr.mxu0 0.0
    %3678 = vmatpush2.msra.mxu0 0.0
    %3679 = vmatprep.subr.mxu0 0.0
    %3680 = vmatpush2.msra.mxu0 0.0
    %3681 = vmatprep.subr.mxu0 0.0
    %3682 = vmatpush2.msra.mxu0 0.0
    %3683 = vmatprep.subr.mxu0 0.0
    %3684 = vmatpush2.msra.mxu0 0.0
    %3685 = vmatprep.subr.mxu0 0.0
    %3686 = vmatpush2.msra.mxu0 0.0
    %3687 = vmatprep.subr.mxu0 0.0
    %3688 = vmatpush2.msra.mxu0 0.0
    %3689 = vmatprep.subr.mxu0 0.0
    %3690 = vmatpush2.msra.mxu0 0.0
    %3691 = vmatprep.subr.mxu0 0.0
    %3692 = vmatpush2.msra.mxu0 0.0
    %3693 = vmatprep.subr.mxu0 0.0
    %3694 = vmatpush2.msra.mxu0 0.0
    %3695 = vmatprep.mubr.f32.mxu0 0.0
    %3696 = vmatmul.mubr.f32.gmra.mxu0 %v3621
    %v3697 = vpop.f32.mrf.mxu0
    %v3698 = vadd.f32 %v2423, %v3697
    %v3699 = vpop.f32.mrf.mxu0
    %v3700 = vadd.f32 %v2427, %v3699
    %3701 = vdwg.mxu0
    %3702 = vmatprep.subr.mxu0 0.0
    %3703 = vmatpush1.msra.mxu0 %v980
    %3704 = vmatprep.subr.mxu0 0.0
    %3705 = vmatpush1.msra.mxu0 %v977
    %3706 = vmatprep.subr.mxu0 0.0
    %3707 = vmatpush1.msra.mxu0 %v974
    %3708 = vmatprep.subr.mxu0 0.0
    %3709 = vmatpush1.msra.mxu0 %v971
    %3710 = vmatprep.subr.mxu0 0.0
    %3711 = vmatpush1.msra.mxu0 %v968
    %3712 = vmatprep.subr.mxu0 0.0
    %3713 = vmatpush1.msra.mxu0 %v965
    %3714 = vmatprep.subr.mxu0 0.0
    %3715 = vmatpush1.msra.mxu0 %v962
    %3716 = vmatprep.subr.mxu0 0.0
    %3717 = vmatpush1.msra.mxu0 %v959
    %3718 = vmatprep.subr.mxu0 0.0
    %3719 = vmatpush1.msra.mxu0 %v956
    %3720 = vmatprep.subr.mxu0 0.0
    %3721 = vmatpush1.msra.mxu0 %v953
    %3722 = vmatprep.subr.mxu0 0.0
    %3723 = vmatpush1.msra.mxu0 %v950
    %3724 = vmatprep.subr.mxu0 0.0
    %3725 = vmatpush1.msra.mxu0 %v947
    %3726 = vmatprep.subr.mxu0 0.0
    %3727 = vmatpush1.msra.mxu0 %v944
    %3728 = vmatprep.subr.mxu0 0.0
    %3729 = vmatpush1.msra.mxu0 %v941
    %3730 = vmatprep.subr.mxu0 0.0
    %3731 = vmatpush1.msra.mxu0 %v938
    %3732 = vmatprep.subr.mxu0 0.0
    %3733 = vmatpush1.msra.mxu0 %v935
    %3734 = vmatprep.subr.mxu0 0.0
    %3735 = vmatpush2.msra.mxu0 0.0
    %3736 = vmatprep.subr.mxu0 0.0
    %3737 = vmatpush2.msra.mxu0 0.0
    %3738 = vmatprep.subr.mxu0 0.0
    %3739 = vmatpush2.msra.mxu0 0.0
    %3740 = vmatprep.subr.mxu0 0.0
    %3741 = vmatpush2.msra.mxu0 0.0
    %3742 = vmatprep.subr.mxu0 0.0
    %3743 = vmatpush2.msra.mxu0 0.0
    %3744 = vmatprep.subr.mxu0 0.0
    %3745 = vmatpush2.msra.mxu0 0.0
    %3746 = vmatprep.subr.mxu0 0.0
    %3747 = vmatpush2.msra.mxu0 0.0
    %3748 = vmatprep.subr.mxu0 0.0
    %3749 = vmatpush2.msra.mxu0 0.0
    %3750 = vmatprep.subr.mxu0 0.0
    %3751 = vmatpush2.msra.mxu0 0.0
    %3752 = vmatprep.subr.mxu0 0.0
    %3753 = vmatpush2.msra.mxu0 0.0
    %3754 = vmatprep.subr.mxu0 0.0
    %3755 = vmatpush2.msra.mxu0 0.0
    %3756 = vmatprep.subr.mxu0 0.0
    %3757 = vmatpush2.msra.mxu0 0.0
    %3758 = vmatprep.subr.mxu0 0.0
    %3759 = vmatpush2.msra.mxu0 0.0
    %3760 = vmatprep.subr.mxu0 0.0
    %3761 = vmatpush2.msra.mxu0 0.0
    %3762 = vmatprep.subr.mxu0 0.0
    %3763 = vmatpush2.msra.mxu0 0.0
    %3764 = vmatprep.subr.mxu0 0.0
    %3765 = vmatpush2.msra.mxu0 0.0
    %3766 = vmatprep.mubr.f32.mxu0 0.0
    %3767 = vmatmul.mubr.f32.gmra.mxu0 %v3621
    %v3768 = vpop.f32.mrf.mxu0
    %v3769 = vadd.f32 %v2431, %v3768
    %v3770 = vpop.f32.mrf.mxu0
    %3771 = vdwg.mxu0
    %v3772 = vadd.f32 %v3628, %v3698
    %v3773 = vxor.u32 %v3772, 2147483648
    %v3774 = vmul.f32 %v3773, 1.442695
    %v3775 = vpow.pop %v3774
    %v3776 = vadd.f32 %v3775, 1.0
    %v3777 = vrcp.pop %v3776
    %v3778 = vmul.f32 1.0, %v3777
    %v3779 = vadd.f32 %v3629, %v3700
    %v3780 = vxor.u32 %v3779, 2147483648
    %v3781 = vmul.f32 %v3780, 1.442695
    %v3782 = vpow.pop %v3781
    %v3783 = vadd.f32 %v3782, 1.0
    %v3784 = vrcp.pop %v3783
    %v3785 = vmul.f32 1.0, %v3784
    %v3786 = vmul.f32 %v3778, %v3769
    %v3787 = vadd.f32 %v3630, %v3786
    %v3788 = vtanh.pop %v3787
    %v3789 = vsub.f32 1.0, %v3785
    %v3790 = vmul.f32 %v3789, %v3788
    %v3791 = vmul.f32 %v3785, %v3621
    %v3792 = vadd.f32 %v3790, %v3791
    %v3793 = vld [vmem:[%s2411] sm:$0xff]
    %v3794 = vadd.f32 %v3793, %v3792
    %v3795 = vmax.f32 %v3624, %v3794
    %v3796 = vld [vmem:[#allocation14] sm:$0xff]
    %v3797 = vld [vmem:[#allocation14 + $0x8] sm:$0xff]
    %v3798 = vld [vmem:[#allocation14 + $0x10] sm:$0xff]
    %v3799 = vld [vmem:[#allocation14 + $0x18] sm:$0xff]
    %v3800 = vld [vmem:[#allocation14 + $0x20] sm:$0xff]
    %v3801 = vld [vmem:[#allocation14 + $0x28] sm:$0xff]
    %v3802 = vld [vmem:[#allocation14 + $0x30] sm:$0xff]
    %v3803 = vld [vmem:[#allocation14 + $0x38] sm:$0xff]
    %v3804 = vld [vmem:[#allocation14 + $0x40] sm:$0xff]
    %v3805 = vld [vmem:[#allocation14 + $0x48] sm:$0xff]
    %v3806 = vld [vmem:[#allocation14 + $0x50] sm:$0xff]
    %v3807 = vld [vmem:[#allocation14 + $0x58] sm:$0xff]
    %v3808 = vld [vmem:[#allocation14 + $0x60] sm:$0xff]
    %v3809 = vld [vmem:[#allocation14 + $0x68] sm:$0xff]
    %v3810 = vld [vmem:[#allocation14 + $0x70] sm:$0xff]
    %v3811 = vld [vmem:[#allocation14 + $0x78] sm:$0xff]
    %v3812 = vld [vmem:[%s9] sm:$0x1]
    %v3814 = vlaneseq
    %v3815 = vshrl.u32 %v3814, 7
    %v3816 = vsub.s32 0, %v3815
    %v3817 = vrot.slane %v3812, %v3816
    %3819 = vmatprep.subr.mxu0 0.0
    %3820 = vmatpush1.msra.mxu0 %v3811
    %3821 = vmatprep.subr.mxu0 0.0
    %3822 = vmatpush1.msra.mxu0 %v3810
    %3823 = vmatprep.subr.mxu0 0.0
    %3824 = vmatpush1.msra.mxu0 %v3809
    %3825 = vmatprep.subr.mxu0 0.0
    %3826 = vmatpush1.msra.mxu0 %v3808
    %3827 = vmatprep.subr.mxu0 0.0
    %3828 = vmatpush1.msra.mxu0 %v3807
    %3829 = vmatprep.subr.mxu0 0.0
    %3830 = vmatpush1.msra.mxu0 %v3806
    %3831 = vmatprep.subr.mxu0 0.0
    %3832 = vmatpush1.msra.mxu0 %v3805
    %3833 = vmatprep.subr.mxu0 0.0
    %3834 = vmatpush1.msra.mxu0 %v3804
    %3835 = vmatprep.subr.mxu0 0.0
    %3836 = vmatpush1.msra.mxu0 %v3803
    %3837 = vmatprep.subr.mxu0 0.0
    %3838 = vmatpush1.msra.mxu0 %v3802
    %3839 = vmatprep.subr.mxu0 0.0
    %3840 = vmatpush1.msra.mxu0 %v3801
    %3841 = vmatprep.subr.mxu0 0.0
    %3842 = vmatpush1.msra.mxu0 %v3800
    %3843 = vmatprep.subr.mxu0 0.0
    %3844 = vmatpush1.msra.mxu0 %v3799
    %3845 = vmatprep.subr.mxu0 0.0
    %3846 = vmatpush1.msra.mxu0 %v3798
    %3847 = vmatprep.subr.mxu0 0.0
    %3848 = vmatpush1.msra.mxu0 %v3797
    %3849 = vmatprep.subr.mxu0 0.0
    %3850 = vmatpush1.msra.mxu0 %v3796
    %3851 = vmatprep.subr.mxu0 0.0
    %3852 = vmatpush2.msra.mxu0 0.0
    %3853 = vmatprep.subr.mxu0 0.0
    %3854 = vmatpush2.msra.mxu0 0.0
    %3855 = vmatprep.subr.mxu0 0.0
    %3856 = vmatpush2.msra.mxu0 0.0
    %3857 = vmatprep.subr.mxu0 0.0
    %3858 = vmatpush2.msra.mxu0 0.0
    %3859 = vmatprep.subr.mxu0 0.0
    %3860 = vmatpush2.msra.mxu0 0.0
    %3861 = vmatprep.subr.mxu0 0.0
    %3862 = vmatpush2.msra.mxu0 0.0
    %3863 = vmatprep.subr.mxu0 0.0
    %3864 = vmatpush2.msra.mxu0 0.0
    %3865 = vmatprep.subr.mxu0 0.0
    %3866 = vmatpush2.msra.mxu0 0.0
    %3867 = vmatprep.subr.mxu0 0.0
    %3868 = vmatpush2.msra.mxu0 0.0
    %3869 = vmatprep.subr.mxu0 0.0
    %3870 = vmatpush2.msra.mxu0 0.0
    %3871 = vmatprep.subr.mxu0 0.0
    %3872 = vmatpush2.msra.mxu0 0.0
    %3873 = vmatprep.subr.mxu0 0.0
    %3874 = vmatpush2.msra.mxu0 0.0
    %3875 = vmatprep.subr.mxu0 0.0
    %3876 = vmatpush2.msra.mxu0 0.0
    %3877 = vmatprep.subr.mxu0 0.0
    %3878 = vmatpush2.msra.mxu0 0.0
    %3879 = vmatprep.subr.mxu0 0.0
    %3880 = vmatpush2.msra.mxu0 0.0
    %3881 = vmatprep.subr.mxu0 0.0
    %3882 = vmatpush2.msra.mxu0 0.0
    %3883 = vmatprep.mubr.f32.mxu0 0.0
    %3884 = vmatmul.mubr.f32.gmra.mxu0 %v3795
    %v3885 = vpop.f32.mrf.mxu0
    %v3886 = vadd.f32 %v3817, %v3885
    %v3887 = vpop.f32.mrf.mxu0
    %3888 = vdwg.mxu0
    %v3889 = vmax.f32 %v3886, 0.0
    %v3890 = vld [vmem:[%s10] sm:$0x1]
    %v3892 = vlaneseq
    %v3893 = vshrl.u32 %v3892, 7
    %v3894 = vsub.s32 0, %v3893
    %v3895 = vrot.slane %v3890, %v3894
    %v3897 = vmul.f32 %v3889, %v3895
    %3898 = vadd.xlane.f32.xlu0 %v3897
    %v3899 = vpop.xlane.xlu0 %3898
    %s3900 = sld [smem:[#allocation5]]
    %v3901 = vstv %s3900
    %v3902 = vadd.f32 %v3899, %v3901
    %3903 = vst [vmem:[#allocation15] sm:$0xff] %v3902
    // Predicated region
    $region70: #{tpu_custom_call.1} parent=1 // pred_check
      _
    $region71: #{tpu_custom_call.1} parent=1 // pred_check_branch
      %3905 = sbr.rel (0) target = $region73
    $region72: #{tpu_custom_call.1} parent=1 // pred_region
      %s3907 = ssub.s32 128, 128
      %3908 = vsyncadd [#allocation8], %s3907
      %s3910 = sshll.u32 [#allocation15], 4
      %s3911 = int_to_ptr.vmem [resolvable:$true] %s3910
      %3913 = dma.vmem_to_hbm [thread:$0]  %s3911, 128, %s12, [#allocation8]
    $region73: #{tpu_custom_call.1} parent=1 // pred_fallthru
      _
    // Predicated region
    $region74: #{tpu_custom_call.1} parent=1 // pred_check
      _
    $region75: #{tpu_custom_call.1} parent=1 // pred_check_branch
      %3915 = sbr.rel (0) target = $region77
    $region76: #{tpu_custom_call.1} parent=1 // pred_region
      %3916 = dma.done [#allocation8], 128
    $region77: #{tpu_custom_call.1} parent=1 // pred_fallthru
      _
    %3917 = vsyncpa [#allocation7], 1
    %3918 = vsyncpa [#allocation10], 1
    %3919 = vsyncpa [#allocation13], 1
    %3920 = vsyncpa [#allocation8], 1

</llo_original>
